<compile_context>
chip_gen: v5e
topology: v5e:2x2
jax: 0.10.0
libtpu: 0.0.40
codegen_flags: <defaults>
</compile_context>

<pallas_src>
import functools

import jax
import jax.numpy as jnp
from jax import lax
from jax.experimental import pallas as pl
from jax.experimental.pallas import tpu as pltpu


def _round_up(x, m):
    return (x + m - 1) // m * m


# ----------------------------------------------------------------------------
# Fused kernel. Shapes (padded), per batch tile Bt:
#   x_ref    : (seq, Bt, Kp)      layer-0 input, time-major, zero-padded, compute dtype
#   wih0_ref : (Kp, 4*Hp)         layer-0 input->gates weight (gate order i,f,o,g)
#   wihr_ref : (max(L-1,1), Hp, 4*Hp)   layers 1..L-1 input->gates (dummy if L==1)
#   whh_ref  : (L, Hp, 4*Hp)      hidden->gates
#   b_ref    : (L, 1, 4*Hp)       fused bias (b_ih + b_hh)
#   w1_ref   : (Hp, 1024), b1_ref: (1, 1024)
#   w2_ref   : (1024, OutP), b2_ref: (1, OutP)
#   a_ref    : (1, 1) SMEM        shared PReLU slope (f32)
#   out_ref  : (Bt, OutP)         f32
#   xw_scr   : (seq*Bt, 4*Hp)     hoisted input projection for the current layer
#   slab_scr : (seq*Bt, Hp)       inter-layer hidden-sequence slab (VMEM resident)
# ----------------------------------------------------------------------------
def _lstm_model_kernel(x_ref, wih0_ref, wihr_ref, whh_ref, b_ref,
                       w1_ref, b1_ref, w2_ref, b2_ref, a_ref,
                       out_ref, xw_scr, slab_scr,
                       *, seq, batch_t, hidden_p, layer_dim, compute_dtype):
    Bt, Hp = batch_t, hidden_p
    cdt = compute_dtype
    alpha = a_ref[0, 0]

    # Cap unroll so live ranges don't explode for long sequences.
    unroll = True if seq <= 16 else 4

    h_last = jnp.zeros((Bt, Hp), jnp.float32)

    for l in range(layer_dim):                       # static layer loop
        # ---- hoisted input projection: one big MXU matmul over all timesteps ----
        if l == 0:
            in_slab = x_ref[...].reshape(seq * Bt, -1)           # (seq*Bt, Kp)
            w_in = wih0_ref[...]
        else:
            in_slab = slab_scr[...]                               # (seq*Bt, Hp)
            w_in = wihr_ref[l - 1]
        xw_scr[...] = (jnp.dot(in_slab, w_in, preferred_element_type=jnp.float32)
                       + b_ref[l]).astype(xw_scr.dtype)           # (seq*Bt, 4*Hp)

        whh_l = whh_ref[l]                                        # (Hp, 4*Hp)
        # TODO(synk): pltpu.matmul_push_rhs(whh_l) once here; matmul_acc_lhs/pop per step.

        # ---- time recurrence: only h @ W_hh + elementwise gates per step ----
        def step(t, carry, l=l, whh_l=whh_l):
            h, c = carry                                          # f32 carries
            row = pl.multiple_of(t * Bt, Bt)
            gates = (xw_scr[pl.ds(row, Bt), :].astype(jnp.float32)
                     + jnp.dot(h.astype(cdt), whh_l,
                               preferred_element_type=jnp.float32))   # (Bt, 4*Hp)
            # Gate columns packed as (i, f, o, g): one contiguous sigmoid + one tanh.
            sg = jax.nn.sigmoid(gates[:, 0:3 * Hp])
            g_g = jnp.tanh(gates[:, 3 * Hp:4 * Hp])
            i_g = sg[:, 0:Hp]
            f_g = sg[:, Hp:2 * Hp]
            o_g = sg[:, 2 * Hp:3 * Hp]
            c_new = f_g * c + i_g * g_g
            h_new = o_g * jnp.tanh(c_new)
            if l < layer_dim - 1:
                # Next layer consumes the full hidden sequence; last layer only h_T.
                slab_scr[pl.ds(row, Bt), :] = h_new.astype(slab_scr.dtype)
            return (h_new, c_new)

        h0 = jnp.zeros((Bt, Hp), jnp.float32)
        c0 = jnp.zeros((Bt, Hp), jnp.float32)
        h_last, _ = lax.fori_loop(0, seq, step, (h0, c0), unroll=unroll)

    # ---- head: Linear(Hp,1024) -> PReLU -> Linear(1024,OutP) -> PReLU (shared alpha) ----
    z1 = (jnp.dot(h_last.astype(cdt), w1_ref[...], preferred_element_type=jnp.float32)
          + b1_ref[...].astype(jnp.float32))
    z1 = jnp.where(z1 > 0, z1, alpha * z1)
    z2 = (jnp.dot(z1.astype(cdt), w2_ref[...], preferred_element_type=jnp.float32)
          + b2_ref[...].astype(jnp.float32))
    z2 = jnp.where(z2 > 0, z2, alpha * z2)
    out_ref[...] = z2.astype(out_ref.dtype)


# ----------------------------------------------------------------------------
# Parameter init (PyTorch-style uniform ranges, gate order i,f,g,o, stored transposed).
# ----------------------------------------------------------------------------
def init_params(key, input_dim, hidden_dim, layer_dim, output_dim):
    params = {}
    k = 1.0 / jnp.sqrt(hidden_dim)
    for l in range(layer_dim):
        in_d = input_dim if l == 0 else hidden_dim
        key, k1, k2, k3, k4 = jax.random.split(key, 5)
        params[f"wih_{l}"] = jax.random.uniform(k1, (in_d, 4 * hidden_dim),
                                                jnp.float32, -k, k)
        params[f"whh_{l}"] = jax.random.uniform(k2, (hidden_dim, 4 * hidden_dim),
                                                jnp.float32, -k, k)
        b_ih = jax.random.uniform(k3, (4 * hidden_dim,), jnp.float32, -k, k)
        b_hh = jax.random.uniform(k4, (4 * hidden_dim,), jnp.float32, -k, k)
        params[f"b_{l}"] = b_ih + b_hh
    key, k1, k2, k3, k4 = jax.random.split(key, 5)
    k1r = 1.0 / jnp.sqrt(hidden_dim)
    params["w1"] = jax.random.uniform(k1, (hidden_dim, 1024), jnp.float32, -k1r, k1r)
    params["b1"] = jax.random.uniform(k2, (1024,), jnp.float32, -k1r, k1r)
    k2r = 1.0 / jnp.sqrt(1024.0)
    params["w2"] = jax.random.uniform(k3, (1024, output_dim), jnp.float32, -k2r, k2r)
    params["b2"] = jax.random.uniform(k4, (output_dim,), jnp.float32, -k2r, k2r)
    params["prelu_a"] = jnp.full((1,), 0.25, jnp.float32)        # nn.PReLU default
    return params


# ----------------------------------------------------------------------------
# Pack params into the padded / stacked kernel layout.
# Padding with zero weights/bias is exact: padded hidden units stay 0 forever.
# Gate columns are repacked (i,f,g,o) -> (i,f,o,g); kernel slices accordingly.
# ----------------------------------------------------------------------------
def pack_params(params, input_dim, hidden_dim, layer_dim, output_dim,
                dtype=jnp.float32):
    H = hidden_dim
    Hp = _round_up(H, 128)
    Kp = _round_up(input_dim, 128)
    OutP = _round_up(output_dim, 128)
    assert layer_dim >= 1
    perm = jnp.array([0, 1, 3, 2])                   # (i, f, g, o) -> (i, f, o, g)

    def pad_gate_mat(w, rows, rows_p):               # (rows, 4H) -> (rows_p, 4*Hp)
        w4 = w.reshape(rows, 4, H)[:, perm, :]
        w4 = jnp.pad(w4, ((0, rows_p - rows), (0, 0), (0, Hp - H)))
        return w4.reshape(rows_p, 4 * Hp).astype(dtype)

    def pad_gate_bias(b):                            # (4H,) -> (1, 4*Hp)
        b4 = b.reshape(4, H)[perm, :]
        b4 = jnp.pad(b4, ((0, 0), (0, Hp - H)))
        return b4.reshape(1, 4 * Hp).astype(dtype)

    wih0 = pad_gate_mat(params["wih_0"], input_dim, Kp)          # (Kp, 4*Hp)
    if layer_dim > 1:
        wih_rest = jnp.stack([pad_gate_mat(params[f"wih_{l}"], H, Hp)
                              for l in range(1, layer_dim)])
    else:
        wih_rest = jnp.zeros((1, Hp, 4 * Hp), dtype)             # unused dummy
    whh = jnp.stack([pad_gate_mat(params[f"whh_{l}"], H, Hp) for l in range(layer_dim)])
    b = jnp.stack([pad_gate_bias(params[f"b_{l}"]) for l in range(layer_dim)])

    w1 = jnp.pad(params["w1"], ((0, Hp - H), (0, 0))).astype(dtype)          # (Hp, 1024)
    b1 = params["b1"].reshape(1, -1).astype(dtype)                           # (1, 1024)
    w2 = jnp.pad(params["w2"], ((0, 0), (0, OutP - output_dim))).astype(dtype)
    b2 = jnp.pad(params["b2"], (0, OutP - output_dim)).reshape(1, -1).astype(dtype)
    alpha = params["prelu_a"].reshape(1, 1).astype(jnp.float32)  # SMEM scalar stays f32
    return dict(wih0=wih0, wih_rest=wih_rest, whh=whh, b=b,
                w1=w1, b1=b1, w2=w2, b2=b2, alpha=alpha)


# ----------------------------------------------------------------------------
# Forward pass: one fused pallas_call; optional batch-tile grid for v7x megacore.
# ----------------------------------------------------------------------------
@functools.partial(jax.jit, static_argnames=("output_dim", "batch_tile"))
def lstm_model_forward(x, packed, *, output_dim, batch_tile=None):
    batch, seq, in_dim = x.shape
    Kp = packed["wih0"].shape[0]
    layer_dim, Hp, _ = packed["whh"].shape
    OutP = packed["w2"].shape[1]
    wdt = packed["wih0"].dtype                       # compute dtype (f32 or bf16)

    Bp = _round_up(batch, 8)
    Bt = Bp if batch_tile is None else _round_up(min(int(batch_tile), Bp), 8)
    Bp = _round_up(Bp, Bt)
    num_tiles = Bp // Bt

    # (batch, seq, in) -> time-major (seq, Bp, Kp), zero-padded, compute dtype.
    xs = jnp.transpose(x, (1, 0, 2))
    xs = jnp.pad(xs, ((0, 0), (0, Bp - batch), (0, Kp - in_dim))).astype(wdt)

    scr_dt = wdt
    slab_shape = (seq * Bt, Hp) if layer_dim > 1 else (8, 128)   # dummy when L == 1

    # VMEM budget: actual footprint with headroom, clamped below physical capacity.
    def nbytes(a):
        return a.size * a.dtype.itemsize
    footprint = (nbytes(xs)
                 + sum(nbytes(packed[k]) for k in
                       ("wih0", "wih_rest", "whh", "b", "w1", "b1", "w2", "b2"))
                 + Bp * OutP * 4
                 + (seq * Bt * 4 * Hp + slab_shape[0] * slab_shape[1])
                 * jnp.dtype(scr_dt).itemsize)
    vmem_limit = max(int(2 * footprint) + (4 << 20), 16 << 20)
    try:
        cap = int(pltpu.get_tpu_info().vmem_capacity_bytes) - (8 << 20)
    except Exception:
        cap = 48 << 20                               # safe on every current chip
    vmem_limit = int(min(vmem_limit, cap))

    kernel = functools.partial(
        _lstm_model_kernel, seq=seq, batch_t=Bt, hidden_p=Hp,
        layer_dim=layer_dim, compute_dtype=wdt)

    def full(a):                                     # whole-array resident block
        return pl.BlockSpec(a.shape, lambda i, n=a.ndim: (0,) * n)

    in_specs = [
        pl.BlockSpec((seq, Bt, Kp), lambda i: (0, i, 0)),        # x: tiled over batch
        full(packed["wih0"]),
        full(packed["wih_rest"]),
        full(packed["whh"]),
        full(packed["b"]),
        full(packed["w1"]),
        full(packed["b1"]),
        full(packed["w2"]),
        full(packed["b2"]),
        pl.BlockSpec(memory_space=pltpu.MemorySpace.SMEM),       # PReLU alpha scalar
    ]
    out_specs = pl.BlockSpec((Bt, OutP), lambda i: (i, 0))       # lane-dense output

    out_p = pl.pallas_call(
        kernel,
        out_shape=jax.ShapeDtypeStruct((Bp, OutP), jnp.float32),
        grid=(num_tiles,),
        in_specs=in_specs,
        out_specs=out_specs,
        scratch_shapes=[
            pltpu.VMEM((seq * Bt, 4 * Hp), scr_dt),  # hoisted input projection
            pltpu.VMEM(slab_shape, scr_dt),          # inter-layer hidden slab
        ],
        compiler_params=pltpu.CompilerParams(
            dimension_semantics=("parallel",),       # batch tiles -> both TCs on v7x
            vmem_limit_bytes=vmem_limit),
    )(xs, packed["wih0"], packed["wih_rest"], packed["whh"], packed["b"],
      packed["w1"], packed["b1"], packed["w2"], packed["b2"], packed["alpha"])

    out = out_p[:batch, :output_dim]
    return jnp.squeeze(out)                          # matches torch out.squeeze()


# ----------------------------------------------------------------------------
# Pure-JAX reference (unpadded, original i,f,g,o gate order) for correctness checks.
# ----------------------------------------------------------------------------
def _reference_forward(x, params, hidden_dim, layer_dim):
    batch, seq, _ = x.shape
    H = hidden_dim
    h_seq = jnp.transpose(x, (1, 0, 2))
    for l in range(layer_dim):
        wih, whh, b = params[f"wih_{l}"], params[f"whh_{l}"], params[f"b_{l}"]
        h = jnp.zeros((batch, H), jnp.float32)
        c = jnp.zeros((batch, H), jnp.float32)
        outs = []
        for t in range(seq):
            g = h_seq[t] @ wih + h @ whh + b
            i_g = jax.nn.sigmoid(g[:, 0:H])
            f_g = jax.nn.sigmoid(g[:, H:2 * H])
            g_g = jnp.tanh(g[:, 2 * H:3 * H])
            o_g = jax.nn.sigmoid(g[:, 3 * H:4 * H])
            c = f_g * c + i_g * g_g
            h = o_g * jnp.tanh(c)
            outs.append(h)
        h_seq = jnp.stack(outs)
    a = params["prelu_a"][0]
    z1 = h_seq[-1] @ params["w1"] + params["b1"]
    z1 = jnp.where(z1 > 0, z1, a * z1)
    z2 = z1 @ params["w2"] + params["b2"]
    z2 = jnp.where(z2 > 0, z2, a * z2)
    return jnp.squeeze(z2)


if __name__ == "__main__":
    batch, seq_dim = 2, 8
    input_dim, hidden_dim, layer_dim, output_dim = 16, 32, 2, 4

    key = jax.random.PRNGKey(0)
    key, kx = jax.random.split(key)
    x = jax.random.normal(kx, (batch, seq_dim, input_dim), jnp.float32)

    params = init_params(key, input_dim, hidden_dim, layer_dim, output_dim)
    ref = _reference_forward(x, params, hidden_dim, layer_dim)

    # f32 path: tight check (catches gate-order / padding / layout bugs).
    packed_f32 = pack_params(params, input_dim, hidden_dim, layer_dim, output_dim,
                             dtype=jnp.float32)
    out_f32 = lstm_model_forward(x, packed_f32, output_dim=output_dim)
    jax.block_until_ready(out_f32)
    assert out_f32.shape == (batch, output_dim), out_f32.shape
    assert jnp.allclose(out_f32, ref, atol=1e-4, rtol=1e-4), (out_f32, ref)

    # bf16 weights/activations with f32 accumulation: performance path, bf16 tolerance.
    packed_bf16 = pack_params(params, input_dim, hidden_dim, layer_dim, output_dim,
                              dtype=jnp.bfloat16)
    out_bf16 = lstm_model_forward(x, packed_bf16, output_dim=output_dim)
    jax.block_until_ready(out_bf16)
    assert out_bf16.shape == (batch, output_dim), out_bf16.shape
    assert jnp.allclose(out_bf16, ref, atol=2e-2, rtol=2e-2), (out_bf16, ref)

    print("KERNEL_OK")
</pallas_src>

<mosaic_0001>
module attributes {stable_mosaic.version = 11 : i64} {
  func.func @_lstm_model_kernel(%arg0: i32, %arg1: memref<8x8x128xf32, #tpu.memory_space<vmem>>, %arg2: memref<128x512xf32, #tpu.memory_space<vmem>>, %arg3: memref<1x128x512xf32, #tpu.memory_space<vmem>>, %arg4: memref<2x128x512xf32, #tpu.memory_space<vmem>>, %arg5: memref<2x1x512xf32, #tpu.memory_space<vmem>>, %arg6: memref<128x1024xf32, #tpu.memory_space<vmem>>, %arg7: memref<1x1024xf32, #tpu.memory_space<vmem>>, %arg8: memref<1024x128xf32, #tpu.memory_space<vmem>>, %arg9: memref<1x128xf32, #tpu.memory_space<vmem>>, %arg10: memref<1x1xf32, #tpu.memory_space<smem>>, %arg11: memref<8x128xf32, #tpu.memory_space<vmem>>, %arg12: memref<64x512xf32, #tpu.memory_space<vmem>>, %arg13: memref<64x128xf32, #tpu.memory_space<vmem>>) attributes {dimension_semantics = [#tpu.dimension_semantics<parallel>], iteration_bounds = array<i64: 1>, scalar_prefetch = 0 : i64, scratch_operands = 2 : i64, tpu.core_type = #tpu.core_type<tc>, window_params = [{transform_indices = @transform_0, window_bounds = array<i64: 8, 8, 128>}, {pipeline_mode = #tpu.pipeline_mode<synchronous>, transform_indices = @transform_1, window_bounds = array<i64: 128, 512>}, {pipeline_mode = #tpu.pipeline_mode<synchronous>, transform_indices = @transform_2, window_bounds = array<i64: 1, 128, 512>}, {pipeline_mode = #tpu.pipeline_mode<synchronous>, transform_indices = @transform_3, window_bounds = array<i64: 2, 128, 512>}, {pipeline_mode = #tpu.pipeline_mode<synchronous>, transform_indices = @transform_4, window_bounds = array<i64: 2, 1, 512>}, {pipeline_mode = #tpu.pipeline_mode<synchronous>, transform_indices = @transform_5, window_bounds = array<i64: 128, 1024>}, {pipeline_mode = #tpu.pipeline_mode<synchronous>, transform_indices = @transform_6, window_bounds = array<i64: 1, 1024>}, {pipeline_mode = #tpu.pipeline_mode<synchronous>, transform_indices = @transform_7, window_bounds = array<i64: 1024, 128>}, {pipeline_mode = #tpu.pipeline_mode<synchronous>, transform_indices = @transform_8, window_bounds = array<i64: 1, 128>}, {transform_indices = @transform_9, window_bounds = array<i64: 1, 1>}, {transform_indices = @transform_10, window_bounds = array<i64: 8, 128>}]} {
    %c0 = arith.constant 0 : index
    %c0_0 = arith.constant 0 : index
    %0 = memref.load %arg10[%c0, %c0_0] : memref<1x1xf32, #tpu.memory_space<smem>>
    %c0_1 = arith.constant 0 : index
    %c0_2 = arith.constant 0 : index
    %c0_3 = arith.constant 0 : index
    %1 = vector.load %arg1[%c0_1, %c0_2, %c0_3] : memref<8x8x128xf32, #tpu.memory_space<vmem>>, vector<8x8x128xf32>
    %2 = vector.shape_cast %1 : vector<8x8x128xf32> to vector<64x128xf32>
    %c0_4 = arith.constant 0 : index
    %c0_5 = arith.constant 0 : index
    %3 = vector.load %arg2[%c0_4, %c0_5] : memref<128x512xf32, #tpu.memory_space<vmem>>, vector<128x512xf32>
    %cst = arith.constant dense<0.000000e+00> : vector<64x512xf32>
    %4 = tpu.matmul %2, %3, %cst {dimension_numbers = #tpu.dot_dimension_numbers<[1], [0], [0], [1], [0, 0, 1, 1], [], []>} : vector<64x128xf32>, vector<128x512xf32>, vector<64x512xf32> -> vector<64x512xf32>
    %c0_6 = arith.constant 0 : index
    %c0_7 = arith.constant 0 : index
    %c0_8 = arith.constant 0 : index
    %5 = vector.load %arg5[%c0_6, %c0_7, %c0_8] : memref<2x1x512xf32, #tpu.memory_space<vmem>>, vector<1x1x512xf32>
    %6 = vector.shape_cast %5 : vector<1x1x512xf32> to vector<1x512xf32>
    %7 = vector.broadcast %6 : vector<1x512xf32> to vector<64x512xf32>
    %8 = arith.addf %4, %7 : vector<64x512xf32>
    %c0_9 = arith.constant 0 : index
    %c0_10 = arith.constant 0 : index
    %9 = vector.load %arg12[%c0_9, %c0_10] : memref<64x512xf32, #tpu.memory_space<vmem>>, vector<64x512xf32>
    tpu.vector_store %arg12[%c0_9, %c0_10], %8 {strides = array<i32>} : memref<64x512xf32, #tpu.memory_space<vmem>>, vector<64x512xf32>,
    %c0_11 = arith.constant 0 : index
    %c0_12 = arith.constant 0 : index
    %c0_13 = arith.constant 0 : index
    %10 = vector.load %arg4[%c0_11, %c0_12, %c0_13] : memref<2x128x512xf32, #tpu.memory_space<vmem>>, vector<1x128x512xf32>
    %11 = vector.shape_cast %10 : vector<1x128x512xf32> to vector<128x512xf32>
    %cst_14 = arith.constant 0.000000e+00 : f32
    %12 = vector.broadcast %cst_14 : f32 to vector<8x128xf32>
    %cst_15 = arith.constant 0.000000e+00 : f32
    %13 = vector.broadcast %cst_15 : f32 to vector<8x128xf32>
    %c0_i32 = arith.constant 0 : i32
    %c8_i32 = arith.constant 8 : i32
    %14 = arith.muli %c0_i32, %c8_i32 : i32
    %15 = tpu.assume_multiple %14, 8 : i32
    %16 = arith.index_cast %15 : i32 to index
    %c0_16 = arith.constant 0 : index
    %17 = vector.load %arg12[%16, %c0_16] : memref<64x512xf32, #tpu.memory_space<vmem>>, vector<8x512xf32>
    %cst_17 = arith.constant dense<0.000000e+00> : vector<8x512xf32>
    %18 = tpu.matmul %12, %11, %cst_17 {dimension_numbers = #tpu.dot_dimension_numbers<[1], [0], [0], [1], [0, 0, 1, 1], [], []>} : vector<8x128xf32>, vector<128x512xf32>, vector<8x512xf32> -> vector<8x512xf32>
    %19 = arith.addf %17, %18 : vector<8x512xf32>
    %20 = vector.extract_strided_slice %19 {offsets = [0, 0], sizes = [8, 384], strides = [1, 1]} : vector<8x512xf32> to vector<8x384xf32>
    %21 = arith.negf %20 : vector<8x384xf32>
    %22 = math.exp %21 : vector<8x384xf32>
    %cst_18 = arith.constant 1.000000e+00 : f32
    %23 = vector.broadcast %cst_18 : f32 to vector<8x384xf32>
    %24 = arith.addf %23, %22 : vector<8x384xf32>
    %25 = arith.divf %23, %24 : vector<8x384xf32>
    %26 = vector.extract_strided_slice %19 {offsets = [0, 384], sizes = [8, 128], strides = [1, 1]} : vector<8x512xf32> to vector<8x128xf32>
    %27 = math.tanh %26 : vector<8x128xf32>
    %28 = vector.extract_strided_slice %25 {offsets = [0, 0], sizes = [8, 128], strides = [1, 1]} : vector<8x384xf32> to vector<8x128xf32>
    %29 = vector.extract_strided_slice %25 {offsets = [0, 128], sizes = [8, 128], strides = [1, 1]} : vector<8x384xf32> to vector<8x128xf32>
    %30 = vector.extract_strided_slice %25 {offsets = [0, 256], sizes = [8, 128], strides = [1, 1]} : vector<8x384xf32> to vector<8x128xf32>
    %31 = arith.mulf %29, %13 : vector<8x128xf32>
    %32 = arith.mulf %28, %27 : vector<8x128xf32>
    %33 = arith.addf %31, %32 : vector<8x128xf32>
    %34 = math.tanh %33 : vector<8x128xf32>
    %35 = arith.mulf %30, %34 : vector<8x128xf32>
    %36 = arith.index_cast %15 : i32 to index
    %c0_19 = arith.constant 0 : index
    %37 = vector.load %arg13[%36, %c0_19] : memref<64x128xf32, #tpu.memory_space<vmem>>, vector<8x128xf32>
    tpu.vector_store %arg13[%36, %c0_19], %35 {strides = array<i32>} : memref<64x128xf32, #tpu.memory_space<vmem>>, vector<8x128xf32>,
    %c1_i32 = arith.constant 1 : i32
    %c8_i32_20 = arith.constant 8 : i32
    %38 = arith.muli %c1_i32, %c8_i32_20 : i32
    %39 = tpu.assume_multiple %38, 8 : i32
    %40 = arith.index_cast %39 : i32 to index
    %c0_21 = arith.constant 0 : index
    %41 = vector.load %arg12[%40, %c0_21] : memref<64x512xf32, #tpu.memory_space<vmem>>, vector<8x512xf32>
    %cst_22 = arith.constant dense<0.000000e+00> : vector<8x512xf32>
    %42 = tpu.matmul %35, %11, %cst_22 {dimension_numbers = #tpu.dot_dimension_numbers<[1], [0], [0], [1], [0, 0, 1, 1], [], []>} : vector<8x128xf32>, vector<128x512xf32>, vector<8x512xf32> -> vector<8x512xf32>
    %43 = arith.addf %41, %42 : vector<8x512xf32>
    %44 = vector.extract_strided_slice %43 {offsets = [0, 0], sizes = [8, 384], strides = [1, 1]} : vector<8x512xf32> to vector<8x384xf32>
    %45 = arith.negf %44 : vector<8x384xf32>
    %46 = math.exp %45 : vector<8x384xf32>
    %cst_23 = arith.constant 1.000000e+00 : f32
    %47 = vector.broadcast %cst_23 : f32 to vector<8x384xf32>
    %48 = arith.addf %47, %46 : vector<8x384xf32>
    %49 = arith.divf %47, %48 : vector<8x384xf32>
    %50 = vector.extract_strided_slice %43 {offsets = [0, 384], sizes = [8, 128], strides = [1, 1]} : vector<8x512xf32> to vector<8x128xf32>
    %51 = math.tanh %50 : vector<8x128xf32>
    %52 = vector.extract_strided_slice %49 {offsets = [0, 0], sizes = [8, 128], strides = [1, 1]} : vector<8x384xf32> to vector<8x128xf32>
    %53 = vector.extract_strided_slice %49 {offsets = [0, 128], sizes = [8, 128], strides = [1, 1]} : vector<8x384xf32> to vector<8x128xf32>
    %54 = vector.extract_strided_slice %49 {offsets = [0, 256], sizes = [8, 128], strides = [1, 1]} : vector<8x384xf32> to vector<8x128xf32>
    %55 = arith.mulf %53, %33 : vector<8x128xf32>
    %56 = arith.mulf %52, %51 : vector<8x128xf32>
    %57 = arith.addf %55, %56 : vector<8x128xf32>
    %58 = math.tanh %57 : vector<8x128xf32>
    %59 = arith.mulf %54, %58 : vector<8x128xf32>
    %60 = arith.index_cast %39 : i32 to index
    %c0_24 = arith.constant 0 : index
    %61 = vector.load %arg13[%60, %c0_24] : memref<64x128xf32, #tpu.memory_space<vmem>>, vector<8x128xf32>
    tpu.vector_store %arg13[%60, %c0_24], %59 {strides = array<i32>} : memref<64x128xf32, #tpu.memory_space<vmem>>, vector<8x128xf32>,
    %c2_i32 = arith.constant 2 : i32
    %c8_i32_25 = arith.constant 8 : i32
    %62 = arith.muli %c2_i32, %c8_i32_25 : i32
    %63 = tpu.assume_multiple %62, 8 : i32
    %64 = arith.index_cast %63 : i32 to index
    %c0_26 = arith.constant 0 : index
    %65 = vector.load %arg12[%64, %c0_26] : memref<64x512xf32, #tpu.memory_space<vmem>>, vector<8x512xf32>
    %cst_27 = arith.constant dense<0.000000e+00> : vector<8x512xf32>
    %66 = tpu.matmul %59, %11, %cst_27 {dimension_numbers = #tpu.dot_dimension_numbers<[1], [0], [0], [1], [0, 0, 1, 1], [], []>} : vector<8x128xf32>, vector<128x512xf32>, vector<8x512xf32> -> vector<8x512xf32>
    %67 = arith.addf %65, %66 : vector<8x512xf32>
    %68 = vector.extract_strided_slice %67 {offsets = [0, 0], sizes = [8, 384], strides = [1, 1]} : vector<8x512xf32> to vector<8x384xf32>
    %69 = arith.negf %68 : vector<8x384xf32>
    %70 = math.exp %69 : vector<8x384xf32>
    %cst_28 = arith.constant 1.000000e+00 : f32
    %71 = vector.broadcast %cst_28 : f32 to vector<8x384xf32>
    %72 = arith.addf %71, %70 : vector<8x384xf32>
    %73 = arith.divf %71, %72 : vector<8x384xf32>
    %74 = vector.extract_strided_slice %67 {offsets = [0, 384], sizes = [8, 128], strides = [1, 1]} : vector<8x512xf32> to vector<8x128xf32>
    %75 = math.tanh %74 : vector<8x128xf32>
    %76 = vector.extract_strided_slice %73 {offsets = [0, 0], sizes = [8, 128], strides = [1, 1]} : vector<8x384xf32> to vector<8x128xf32>
    %77 = vector.extract_strided_slice %73 {offsets = [0, 128], sizes = [8, 128], strides = [1, 1]} : vector<8x384xf32> to vector<8x128xf32>
    %78 = vector.extract_strided_slice %73 {offsets = [0, 256], sizes = [8, 128], strides = [1, 1]} : vector<8x384xf32> to vector<8x128xf32>
    %79 = arith.mulf %77, %57 : vector<8x128xf32>
    %80 = arith.mulf %76, %75 : vector<8x128xf32>
    %81 = arith.addf %79, %80 : vector<8x128xf32>
    %82 = math.tanh %81 : vector<8x128xf32>
    %83 = arith.mulf %78, %82 : vector<8x128xf32>
    %84 = arith.index_cast %63 : i32 to index
    %c0_29 = arith.constant 0 : index
    %85 = vector.load %arg13[%84, %c0_29] : memref<64x128xf32, #tpu.memory_space<vmem>>, vector<8x128xf32>
    tpu.vector_store %arg13[%84, %c0_29], %83 {strides = array<i32>} : memref<64x128xf32, #tpu.memory_space<vmem>>, vector<8x128xf32>,
    %c3_i32 = arith.constant 3 : i32
    %c8_i32_30 = arith.constant 8 : i32
    %86 = arith.muli %c3_i32, %c8_i32_30 : i32
    %87 = tpu.assume_multiple %86, 8 : i32
    %88 = arith.index_cast %87 : i32 to index
    %c0_31 = arith.constant 0 : index
    %89 = vector.load %arg12[%88, %c0_31] : memref<64x512xf32, #tpu.memory_space<vmem>>, vector<8x512xf32>
    %cst_32 = arith.constant dense<0.000000e+00> : vector<8x512xf32>
    %90 = tpu.matmul %83, %11, %cst_32 {dimension_numbers = #tpu.dot_dimension_numbers<[1], [0], [0], [1], [0, 0, 1, 1], [], []>} : vector<8x128xf32>, vector<128x512xf32>, vector<8x512xf32> -> vector<8x512xf32>
    %91 = arith.addf %89, %90 : vector<8x512xf32>
    %92 = vector.extract_strided_slice %91 {offsets = [0, 0], sizes = [8, 384], strides = [1, 1]} : vector<8x512xf32> to vector<8x384xf32>
    %93 = arith.negf %92 : vector<8x384xf32>
    %94 = math.exp %93 : vector<8x384xf32>
    %cst_33 = arith.constant 1.000000e+00 : f32
    %95 = vector.broadcast %cst_33 : f32 to vector<8x384xf32>
    %96 = arith.addf %95, %94 : vector<8x384xf32>
    %97 = arith.divf %95, %96 : vector<8x384xf32>
    %98 = vector.extract_strided_slice %91 {offsets = [0, 384], sizes = [8, 128], strides = [1, 1]} : vector<8x512xf32> to vector<8x128xf32>
    %99 = math.tanh %98 : vector<8x128xf32>
    %100 = vector.extract_strided_slice %97 {offsets = [0, 0], sizes = [8, 128], strides = [1, 1]} : vector<8x384xf32> to vector<8x128xf32>
    %101 = vector.extract_strided_slice %97 {offsets = [0, 128], sizes = [8, 128], strides = [1, 1]} : vector<8x384xf32> to vector<8x128xf32>
    %102 = vector.extract_strided_slice %97 {offsets = [0, 256], sizes = [8, 128], strides = [1, 1]} : vector<8x384xf32> to vector<8x128xf32>
    %103 = arith.mulf %101, %81 : vector<8x128xf32>
    %104 = arith.mulf %100, %99 : vector<8x128xf32>
    %105 = arith.addf %103, %104 : vector<8x128xf32>
    %106 = math.tanh %105 : vector<8x128xf32>
    %107 = arith.mulf %102, %106 : vector<8x128xf32>
    %108 = arith.index_cast %87 : i32 to index
    %c0_34 = arith.constant 0 : index
    %109 = vector.load %arg13[%108, %c0_34] : memref<64x128xf32, #tpu.memory_space<vmem>>, vector<8x128xf32>
    tpu.vector_store %arg13[%108, %c0_34], %107 {strides = array<i32>} : memref<64x128xf32, #tpu.memory_space<vmem>>, vector<8x128xf32>,
    %c4_i32 = arith.constant 4 : i32
    %c8_i32_35 = arith.constant 8 : i32
    %110 = arith.muli %c4_i32, %c8_i32_35 : i32
    %111 = tpu.assume_multiple %110, 8 : i32
    %112 = arith.index_cast %111 : i32 to index
    %c0_36 = arith.constant 0 : index
    %113 = vector.load %arg12[%112, %c0_36] : memref<64x512xf32, #tpu.memory_space<vmem>>, vector<8x512xf32>
    %cst_37 = arith.constant dense<0.000000e+00> : vector<8x512xf32>
    %114 = tpu.matmul %107, %11, %cst_37 {dimension_numbers = #tpu.dot_dimension_numbers<[1], [0], [0], [1], [0, 0, 1, 1], [], []>} : vector<8x128xf32>, vector<128x512xf32>, vector<8x512xf32> -> vector<8x512xf32>
    %115 = arith.addf %113, %114 : vector<8x512xf32>
    %116 = vector.extract_strided_slice %115 {offsets = [0, 0], sizes = [8, 384], strides = [1, 1]} : vector<8x512xf32> to vector<8x384xf32>
    %117 = arith.negf %116 : vector<8x384xf32>
    %118 = math.exp %117 : vector<8x384xf32>
    %cst_38 = arith.constant 1.000000e+00 : f32
    %119 = vector.broadcast %cst_38 : f32 to vector<8x384xf32>
    %120 = arith.addf %119, %118 : vector<8x384xf32>
    %121 = arith.divf %119, %120 : vector<8x384xf32>
    %122 = vector.extract_strided_slice %115 {offsets = [0, 384], sizes = [8, 128], strides = [1, 1]} : vector<8x512xf32> to vector<8x128xf32>
    %123 = math.tanh %122 : vector<8x128xf32>
    %124 = vector.extract_strided_slice %121 {offsets = [0, 0], sizes = [8, 128], strides = [1, 1]} : vector<8x384xf32> to vector<8x128xf32>
    %125 = vector.extract_strided_slice %121 {offsets = [0, 128], sizes = [8, 128], strides = [1, 1]} : vector<8x384xf32> to vector<8x128xf32>
    %126 = vector.extract_strided_slice %121 {offsets = [0, 256], sizes = [8, 128], strides = [1, 1]} : vector<8x384xf32> to vector<8x128xf32>
    %127 = arith.mulf %125, %105 : vector<8x128xf32>
    %128 = arith.mulf %124, %123 : vector<8x128xf32>
    %129 = arith.addf %127, %128 : vector<8x128xf32>
    %130 = math.tanh %129 : vector<8x128xf32>
    %131 = arith.mulf %126, %130 : vector<8x128xf32>
    %132 = arith.index_cast %111 : i32 to index
    %c0_39 = arith.constant 0 : index
    %133 = vector.load %arg13[%132, %c0_39] : memref<64x128xf32, #tpu.memory_space<vmem>>, vector<8x128xf32>
    tpu.vector_store %arg13[%132, %c0_39], %131 {strides = array<i32>} : memref<64x128xf32, #tpu.memory_space<vmem>>, vector<8x128xf32>,
    %c5_i32 = arith.constant 5 : i32
    %c8_i32_40 = arith.constant 8 : i32
    %134 = arith.muli %c5_i32, %c8_i32_40 : i32
    %135 = tpu.assume_multiple %134, 8 : i32
    %136 = arith.index_cast %135 : i32 to index
    %c0_41 = arith.constant 0 : index
    %137 = vector.load %arg12[%136, %c0_41] : memref<64x512xf32, #tpu.memory_space<vmem>>, vector<8x512xf32>
    %cst_42 = arith.constant dense<0.000000e+00> : vector<8x512xf32>
    %138 = tpu.matmul %131, %11, %cst_42 {dimension_numbers = #tpu.dot_dimension_numbers<[1], [0], [0], [1], [0, 0, 1, 1], [], []>} : vector<8x128xf32>, vector<128x512xf32>, vector<8x512xf32> -> vector<8x512xf32>
    %139 = arith.addf %137, %138 : vector<8x512xf32>
    %140 = vector.extract_strided_slice %139 {offsets = [0, 0], sizes = [8, 384], strides = [1, 1]} : vector<8x512xf32> to vector<8x384xf32>
    %141 = arith.negf %140 : vector<8x384xf32>
    %142 = math.exp %141 : vector<8x384xf32>
    %cst_43 = arith.constant 1.000000e+00 : f32
    %143 = vector.broadcast %cst_43 : f32 to vector<8x384xf32>
    %144 = arith.addf %143, %142 : vector<8x384xf32>
    %145 = arith.divf %143, %144 : vector<8x384xf32>
    %146 = vector.extract_strided_slice %139 {offsets = [0, 384], sizes = [8, 128], strides = [1, 1]} : vector<8x512xf32> to vector<8x128xf32>
    %147 = math.tanh %146 : vector<8x128xf32>
    %148 = vector.extract_strided_slice %145 {offsets = [0, 0], sizes = [8, 128], strides = [1, 1]} : vector<8x384xf32> to vector<8x128xf32>
    %149 = vector.extract_strided_slice %145 {offsets = [0, 128], sizes = [8, 128], strides = [1, 1]} : vector<8x384xf32> to vector<8x128xf32>
    %150 = vector.extract_strided_slice %145 {offsets = [0, 256], sizes = [8, 128], strides = [1, 1]} : vector<8x384xf32> to vector<8x128xf32>
    %151 = arith.mulf %149, %129 : vector<8x128xf32>
    %152 = arith.mulf %148, %147 : vector<8x128xf32>
    %153 = arith.addf %151, %152 : vector<8x128xf32>
    %154 = math.tanh %153 : vector<8x128xf32>
    %155 = arith.mulf %150, %154 : vector<8x128xf32>
    %156 = arith.index_cast %135 : i32 to index
    %c0_44 = arith.constant 0 : index
    %157 = vector.load %arg13[%156, %c0_44] : memref<64x128xf32, #tpu.memory_space<vmem>>, vector<8x128xf32>
    tpu.vector_store %arg13[%156, %c0_44], %155 {strides = array<i32>} : memref<64x128xf32, #tpu.memory_space<vmem>>, vector<8x128xf32>,
    %c6_i32 = arith.constant 6 : i32
    %c8_i32_45 = arith.constant 8 : i32
    %158 = arith.muli %c6_i32, %c8_i32_45 : i32
    %159 = tpu.assume_multiple %158, 8 : i32
    %160 = arith.index_cast %159 : i32 to index
    %c0_46 = arith.constant 0 : index
    %161 = vector.load %arg12[%160, %c0_46] : memref<64x512xf32, #tpu.memory_space<vmem>>, vector<8x512xf32>
    %cst_47 = arith.constant dense<0.000000e+00> : vector<8x512xf32>
    %162 = tpu.matmul %155, %11, %cst_47 {dimension_numbers = #tpu.dot_dimension_numbers<[1], [0], [0], [1], [0, 0, 1, 1], [], []>} : vector<8x128xf32>, vector<128x512xf32>, vector<8x512xf32> -> vector<8x512xf32>
    %163 = arith.addf %161, %162 : vector<8x512xf32>
    %164 = vector.extract_strided_slice %163 {offsets = [0, 0], sizes = [8, 384], strides = [1, 1]} : vector<8x512xf32> to vector<8x384xf32>
    %165 = arith.negf %164 : vector<8x384xf32>
    %166 = math.exp %165 : vector<8x384xf32>
    %cst_48 = arith.constant 1.000000e+00 : f32
    %167 = vector.broadcast %cst_48 : f32 to vector<8x384xf32>
    %168 = arith.addf %167, %166 : vector<8x384xf32>
    %169 = arith.divf %167, %168 : vector<8x384xf32>
    %170 = vector.extract_strided_slice %163 {offsets = [0, 384], sizes = [8, 128], strides = [1, 1]} : vector<8x512xf32> to vector<8x128xf32>
    %171 = math.tanh %170 : vector<8x128xf32>
    %172 = vector.extract_strided_slice %169 {offsets = [0, 0], sizes = [8, 128], strides = [1, 1]} : vector<8x384xf32> to vector<8x128xf32>
    %173 = vector.extract_strided_slice %169 {offsets = [0, 128], sizes = [8, 128], strides = [1, 1]} : vector<8x384xf32> to vector<8x128xf32>
    %174 = vector.extract_strided_slice %169 {offsets = [0, 256], sizes = [8, 128], strides = [1, 1]} : vector<8x384xf32> to vector<8x128xf32>
    %175 = arith.mulf %173, %153 : vector<8x128xf32>
    %176 = arith.mulf %172, %171 : vector<8x128xf32>
    %177 = arith.addf %175, %176 : vector<8x128xf32>
    %178 = math.tanh %177 : vector<8x128xf32>
    %179 = arith.mulf %174, %178 : vector<8x128xf32>
    %180 = arith.index_cast %159 : i32 to index
    %c0_49 = arith.constant 0 : index
    %181 = vector.load %arg13[%180, %c0_49] : memref<64x128xf32, #tpu.memory_space<vmem>>, vector<8x128xf32>
    tpu.vector_store %arg13[%180, %c0_49], %179 {strides = array<i32>} : memref<64x128xf32, #tpu.memory_space<vmem>>, vector<8x128xf32>,
    %c7_i32 = arith.constant 7 : i32
    %c8_i32_50 = arith.constant 8 : i32
    %182 = arith.muli %c7_i32, %c8_i32_50 : i32
    %183 = tpu.assume_multiple %182, 8 : i32
    %184 = arith.index_cast %183 : i32 to index
    %c0_51 = arith.constant 0 : index
    %185 = vector.load %arg12[%184, %c0_51] : memref<64x512xf32, #tpu.memory_space<vmem>>, vector<8x512xf32>
    %cst_52 = arith.constant dense<0.000000e+00> : vector<8x512xf32>
    %186 = tpu.matmul %179, %11, %cst_52 {dimension_numbers = #tpu.dot_dimension_numbers<[1], [0], [0], [1], [0, 0, 1, 1], [], []>} : vector<8x128xf32>, vector<128x512xf32>, vector<8x512xf32> -> vector<8x512xf32>
    %187 = arith.addf %185, %186 : vector<8x512xf32>
    %188 = vector.extract_strided_slice %187 {offsets = [0, 0], sizes = [8, 384], strides = [1, 1]} : vector<8x512xf32> to vector<8x384xf32>
    %189 = arith.negf %188 : vector<8x384xf32>
    %190 = math.exp %189 : vector<8x384xf32>
    %cst_53 = arith.constant 1.000000e+00 : f32
    %191 = vector.broadcast %cst_53 : f32 to vector<8x384xf32>
    %192 = arith.addf %191, %190 : vector<8x384xf32>
    %193 = arith.divf %191, %192 : vector<8x384xf32>
    %194 = vector.extract_strided_slice %187 {offsets = [0, 384], sizes = [8, 128], strides = [1, 1]} : vector<8x512xf32> to vector<8x128xf32>
    %195 = math.tanh %194 : vector<8x128xf32>
    %196 = vector.extract_strided_slice %193 {offsets = [0, 0], sizes = [8, 128], strides = [1, 1]} : vector<8x384xf32> to vector<8x128xf32>
    %197 = vector.extract_strided_slice %193 {offsets = [0, 128], sizes = [8, 128], strides = [1, 1]} : vector<8x384xf32> to vector<8x128xf32>
    %198 = vector.extract_strided_slice %193 {offsets = [0, 256], sizes = [8, 128], strides = [1, 1]} : vector<8x384xf32> to vector<8x128xf32>
    %199 = arith.mulf %197, %177 : vector<8x128xf32>
    %200 = arith.mulf %196, %195 : vector<8x128xf32>
    %201 = arith.addf %199, %200 : vector<8x128xf32>
    %202 = math.tanh %201 : vector<8x128xf32>
    %203 = arith.mulf %198, %202 : vector<8x128xf32>
    %204 = arith.index_cast %183 : i32 to index
    %c0_54 = arith.constant 0 : index
    %205 = vector.load %arg13[%204, %c0_54] : memref<64x128xf32, #tpu.memory_space<vmem>>, vector<8x128xf32>
    tpu.vector_store %arg13[%204, %c0_54], %203 {strides = array<i32>} : memref<64x128xf32, #tpu.memory_space<vmem>>, vector<8x128xf32>,
    %c8_i32_55 = arith.constant 8 : i32
    %c0_56 = arith.constant 0 : index
    %c0_57 = arith.constant 0 : index
    %206 = vector.load %arg13[%c0_56, %c0_57] : memref<64x128xf32, #tpu.memory_space<vmem>>, vector<64x128xf32>
    %c0_58 = arith.constant 0 : index
    %c0_59 = arith.constant 0 : index
    %c0_60 = arith.constant 0 : index
    %207 = vector.load %arg3[%c0_58, %c0_59, %c0_60] : memref<1x128x512xf32, #tpu.memory_space<vmem>>, vector<1x128x512xf32>
    %208 = vector.shape_cast %207 : vector<1x128x512xf32> to vector<128x512xf32>
    %cst_61 = arith.constant dense<0.000000e+00> : vector<64x512xf32>
    %209 = tpu.matmul %206, %208, %cst_61 {dimension_numbers = #tpu.dot_dimension_numbers<[1], [0], [0], [1], [0, 0, 1, 1], [], []>} : vector<64x128xf32>, vector<128x512xf32>, vector<64x512xf32> -> vector<64x512xf32>
    %c1 = arith.constant 1 : index
    %c0_62 = arith.constant 0 : index
    %c0_63 = arith.constant 0 : index
    %210 = vector.load %arg5[%c1, %c0_62, %c0_63] : memref<2x1x512xf32, #tpu.memory_space<vmem>>, vector<1x1x512xf32>
    %211 = vector.shape_cast %210 : vector<1x1x512xf32> to vector<1x512xf32>
    %212 = vector.broadcast %211 : vector<1x512xf32> to vector<64x512xf32>
    %213 = arith.addf %209, %212 : vector<64x512xf32>
    %c0_64 = arith.constant 0 : index
    %c0_65 = arith.constant 0 : index
    %214 = vector.load %arg12[%c0_64, %c0_65] : memref<64x512xf32, #tpu.memory_space<vmem>>, vector<64x512xf32>
    tpu.vector_store %arg12[%c0_64, %c0_65], %213 {strides = array<i32>} : memref<64x512xf32, #tpu.memory_space<vmem>>, vector<64x512xf32>,
    %c1_66 = arith.constant 1 : index
    %c0_67 = arith.constant 0 : index
    %c0_68 = arith.constant 0 : index
    %215 = vector.load %arg4[%c1_66, %c0_67, %c0_68] : memref<2x128x512xf32, #tpu.memory_space<vmem>>, vector<1x128x512xf32>
    %216 = vector.shape_cast %215 : vector<1x128x512xf32> to vector<128x512xf32>
    %cst_69 = arith.constant 0.000000e+00 : f32
    %217 = vector.broadcast %cst_69 : f32 to vector<8x128xf32>
    %cst_70 = arith.constant 0.000000e+00 : f32
    %218 = vector.broadcast %cst_70 : f32 to vector<8x128xf32>
    %c0_i32_71 = arith.constant 0 : i32
    %c8_i32_72 = arith.constant 8 : i32
    %219 = arith.muli %c0_i32_71, %c8_i32_72 : i32
    %220 = tpu.assume_multiple %219, 8 : i32
    %221 = arith.index_cast %220 : i32 to index
    %c0_73 = arith.constant 0 : index
    %222 = vector.load %arg12[%221, %c0_73] : memref<64x512xf32, #tpu.memory_space<vmem>>, vector<8x512xf32>
    %cst_74 = arith.constant dense<0.000000e+00> : vector<8x512xf32>
    %223 = tpu.matmul %217, %216, %cst_74 {dimension_numbers = #tpu.dot_dimension_numbers<[1], [0], [0], [1], [0, 0, 1, 1], [], []>} : vector<8x128xf32>, vector<128x512xf32>, vector<8x512xf32> -> vector<8x512xf32>
    %224 = arith.addf %222, %223 : vector<8x512xf32>
    %225 = vector.extract_strided_slice %224 {offsets = [0, 0], sizes = [8, 384], strides = [1, 1]} : vector<8x512xf32> to vector<8x384xf32>
    %226 = arith.negf %225 : vector<8x384xf32>
    %227 = math.exp %226 : vector<8x384xf32>
    %cst_75 = arith.constant 1.000000e+00 : f32
    %228 = vector.broadcast %cst_75 : f32 to vector<8x384xf32>
    %229 = arith.addf %228, %227 : vector<8x384xf32>
    %230 = arith.divf %228, %229 : vector<8x384xf32>
    %231 = vector.extract_strided_slice %224 {offsets = [0, 384], sizes = [8, 128], strides = [1, 1]} : vector<8x512xf32> to vector<8x128xf32>
    %232 = math.tanh %231 : vector<8x128xf32>
    %233 = vector.extract_strided_slice %230 {offsets = [0, 0], sizes = [8, 128], strides = [1, 1]} : vector<8x384xf32> to vector<8x128xf32>
    %234 = vector.extract_strided_slice %230 {offsets = [0, 128], sizes = [8, 128], strides = [1, 1]} : vector<8x384xf32> to vector<8x128xf32>
    %235 = vector.extract_strided_slice %230 {offsets = [0, 256], sizes = [8, 128], strides = [1, 1]} : vector<8x384xf32> to vector<8x128xf32>
    %236 = arith.mulf %234, %218 : vector<8x128xf32>
    %237 = arith.mulf %233, %232 : vector<8x128xf32>
    %238 = arith.addf %236, %237 : vector<8x128xf32>
    %239 = math.tanh %238 : vector<8x128xf32>
    %240 = arith.mulf %235, %239 : vector<8x128xf32>
    %c1_i32_76 = arith.constant 1 : i32
    %c8_i32_77 = arith.constant 8 : i32
    %241 = arith.muli %c1_i32_76, %c8_i32_77 : i32
    %242 = tpu.assume_multiple %241, 8 : i32
    %243 = arith.index_cast %242 : i32 to index
    %c0_78 = arith.constant 0 : index
    %244 = vector.load %arg12[%243, %c0_78] : memref<64x512xf32, #tpu.memory_space<vmem>>, vector<8x512xf32>
    %cst_79 = arith.constant dense<0.000000e+00> : vector<8x512xf32>
    %245 = tpu.matmul %240, %216, %cst_79 {dimension_numbers = #tpu.dot_dimension_numbers<[1], [0], [0], [1], [0, 0, 1, 1], [], []>} : vector<8x128xf32>, vector<128x512xf32>, vector<8x512xf32> -> vector<8x512xf32>
    %246 = arith.addf %244, %245 : vector<8x512xf32>
    %247 = vector.extract_strided_slice %246 {offsets = [0, 0], sizes = [8, 384], strides = [1, 1]} : vector<8x512xf32> to vector<8x384xf32>
    %248 = arith.negf %247 : vector<8x384xf32>
    %249 = math.exp %248 : vector<8x384xf32>
    %cst_80 = arith.constant 1.000000e+00 : f32
    %250 = vector.broadcast %cst_80 : f32 to vector<8x384xf32>
    %251 = arith.addf %250, %249 : vector<8x384xf32>
    %252 = arith.divf %250, %251 : vector<8x384xf32>
    %253 = vector.extract_strided_slice %246 {offsets = [0, 384], sizes = [8, 128], strides = [1, 1]} : vector<8x512xf32> to vector<8x128xf32>
    %254 = math.tanh %253 : vector<8x128xf32>
    %255 = vector.extract_strided_slice %252 {offsets = [0, 0], sizes = [8, 128], strides = [1, 1]} : vector<8x384xf32> to vector<8x128xf32>
    %256 = vector.extract_strided_slice %252 {offsets = [0, 128], sizes = [8, 128], strides = [1, 1]} : vector<8x384xf32> to vector<8x128xf32>
    %257 = vector.extract_strided_slice %252 {offsets = [0, 256], sizes = [8, 128], strides = [1, 1]} : vector<8x384xf32> to vector<8x128xf32>
    %258 = arith.mulf %256, %238 : vector<8x128xf32>
    %259 = arith.mulf %255, %254 : vector<8x128xf32>
    %260 = arith.addf %258, %259 : vector<8x128xf32>
    %261 = math.tanh %260 : vector<8x128xf32>
    %262 = arith.mulf %257, %261 : vector<8x128xf32>
    %c2_i32_81 = arith.constant 2 : i32
    %c8_i32_82 = arith.constant 8 : i32
    %263 = arith.muli %c2_i32_81, %c8_i32_82 : i32
    %264 = tpu.assume_multiple %263, 8 : i32
    %265 = arith.index_cast %264 : i32 to index
    %c0_83 = arith.constant 0 : index
    %266 = vector.load %arg12[%265, %c0_83] : memref<64x512xf32, #tpu.memory_space<vmem>>, vector<8x512xf32>
    %cst_84 = arith.constant dense<0.000000e+00> : vector<8x512xf32>
    %267 = tpu.matmul %262, %216, %cst_84 {dimension_numbers = #tpu.dot_dimension_numbers<[1], [0], [0], [1], [0, 0, 1, 1], [], []>} : vector<8x128xf32>, vector<128x512xf32>, vector<8x512xf32> -> vector<8x512xf32>
    %268 = arith.addf %266, %267 : vector<8x512xf32>
    %269 = vector.extract_strided_slice %268 {offsets = [0, 0], sizes = [8, 384], strides = [1, 1]} : vector<8x512xf32> to vector<8x384xf32>
    %270 = arith.negf %269 : vector<8x384xf32>
    %271 = math.exp %270 : vector<8x384xf32>
    %cst_85 = arith.constant 1.000000e+00 : f32
    %272 = vector.broadcast %cst_85 : f32 to vector<8x384xf32>
    %273 = arith.addf %272, %271 : vector<8x384xf32>
    %274 = arith.divf %272, %273 : vector<8x384xf32>
    %275 = vector.extract_strided_slice %268 {offsets = [0, 384], sizes = [8, 128], strides = [1, 1]} : vector<8x512xf32> to vector<8x128xf32>
    %276 = math.tanh %275 : vector<8x128xf32>
    %277 = vector.extract_strided_slice %274 {offsets = [0, 0], sizes = [8, 128], strides = [1, 1]} : vector<8x384xf32> to vector<8x128xf32>
    %278 = vector.extract_strided_slice %274 {offsets = [0, 128], sizes = [8, 128], strides = [1, 1]} : vector<8x384xf32> to vector<8x128xf32>
    %279 = vector.extract_strided_slice %274 {offsets = [0, 256], sizes = [8, 128], strides = [1, 1]} : vector<8x384xf32> to vector<8x128xf32>
    %280 = arith.mulf %278, %260 : vector<8x128xf32>
    %281 = arith.mulf %277, %276 : vector<8x128xf32>
    %282 = arith.addf %280, %281 : vector<8x128xf32>
    %283 = math.tanh %282 : vector<8x128xf32>
    %284 = arith.mulf %279, %283 : vector<8x128xf32>
    %c3_i32_86 = arith.constant 3 : i32
    %c8_i32_87 = arith.constant 8 : i32
    %285 = arith.muli %c3_i32_86, %c8_i32_87 : i32
    %286 = tpu.assume_multiple %285, 8 : i32
    %287 = arith.index_cast %286 : i32 to index
    %c0_88 = arith.constant 0 : index
    %288 = vector.load %arg12[%287, %c0_88] : memref<64x512xf32, #tpu.memory_space<vmem>>, vector<8x512xf32>
    %cst_89 = arith.constant dense<0.000000e+00> : vector<8x512xf32>
    %289 = tpu.matmul %284, %216, %cst_89 {dimension_numbers = #tpu.dot_dimension_numbers<[1], [0], [0], [1], [0, 0, 1, 1], [], []>} : vector<8x128xf32>, vector<128x512xf32>, vector<8x512xf32> -> vector<8x512xf32>
    %290 = arith.addf %288, %289 : vector<8x512xf32>
    %291 = vector.extract_strided_slice %290 {offsets = [0, 0], sizes = [8, 384], strides = [1, 1]} : vector<8x512xf32> to vector<8x384xf32>
    %292 = arith.negf %291 : vector<8x384xf32>
    %293 = math.exp %292 : vector<8x384xf32>
    %cst_90 = arith.constant 1.000000e+00 : f32
    %294 = vector.broadcast %cst_90 : f32 to vector<8x384xf32>
    %295 = arith.addf %294, %293 : vector<8x384xf32>
    %296 = arith.divf %294, %295 : vector<8x384xf32>
    %297 = vector.extract_strided_slice %290 {offsets = [0, 384], sizes = [8, 128], strides = [1, 1]} : vector<8x512xf32> to vector<8x128xf32>
    %298 = math.tanh %297 : vector<8x128xf32>
    %299 = vector.extract_strided_slice %296 {offsets = [0, 0], sizes = [8, 128], strides = [1, 1]} : vector<8x384xf32> to vector<8x128xf32>
    %300 = vector.extract_strided_slice %296 {offsets = [0, 128], sizes = [8, 128], strides = [1, 1]} : vector<8x384xf32> to vector<8x128xf32>
    %301 = vector.extract_strided_slice %296 {offsets = [0, 256], sizes = [8, 128], strides = [1, 1]} : vector<8x384xf32> to vector<8x128xf32>
    %302 = arith.mulf %300, %282 : vector<8x128xf32>
    %303 = arith.mulf %299, %298 : vector<8x128xf32>
    %304 = arith.addf %302, %303 : vector<8x128xf32>
    %305 = math.tanh %304 : vector<8x128xf32>
    %306 = arith.mulf %301, %305 : vector<8x128xf32>
    %c4_i32_91 = arith.constant 4 : i32
    %c8_i32_92 = arith.constant 8 : i32
    %307 = arith.muli %c4_i32_91, %c8_i32_92 : i32
    %308 = tpu.assume_multiple %307, 8 : i32
    %309 = arith.index_cast %308 : i32 to index
    %c0_93 = arith.constant 0 : index
    %310 = vector.load %arg12[%309, %c0_93] : memref<64x512xf32, #tpu.memory_space<vmem>>, vector<8x512xf32>
    %cst_94 = arith.constant dense<0.000000e+00> : vector<8x512xf32>
    %311 = tpu.matmul %306, %216, %cst_94 {dimension_numbers = #tpu.dot_dimension_numbers<[1], [0], [0], [1], [0, 0, 1, 1], [], []>} : vector<8x128xf32>, vector<128x512xf32>, vector<8x512xf32> -> vector<8x512xf32>
    %312 = arith.addf %310, %311 : vector<8x512xf32>
    %313 = vector.extract_strided_slice %312 {offsets = [0, 0], sizes = [8, 384], strides = [1, 1]} : vector<8x512xf32> to vector<8x384xf32>
    %314 = arith.negf %313 : vector<8x384xf32>
    %315 = math.exp %314 : vector<8x384xf32>
    %cst_95 = arith.constant 1.000000e+00 : f32
    %316 = vector.broadcast %cst_95 : f32 to vector<8x384xf32>
    %317 = arith.addf %316, %315 : vector<8x384xf32>
    %318 = arith.divf %316, %317 : vector<8x384xf32>
    %319 = vector.extract_strided_slice %312 {offsets = [0, 384], sizes = [8, 128], strides = [1, 1]} : vector<8x512xf32> to vector<8x128xf32>
    %320 = math.tanh %319 : vector<8x128xf32>
    %321 = vector.extract_strided_slice %318 {offsets = [0, 0], sizes = [8, 128], strides = [1, 1]} : vector<8x384xf32> to vector<8x128xf32>
    %322 = vector.extract_strided_slice %318 {offsets = [0, 128], sizes = [8, 128], strides = [1, 1]} : vector<8x384xf32> to vector<8x128xf32>
    %323 = vector.extract_strided_slice %318 {offsets = [0, 256], sizes = [8, 128], strides = [1, 1]} : vector<8x384xf32> to vector<8x128xf32>
    %324 = arith.mulf %322, %304 : vector<8x128xf32>
    %325 = arith.mulf %321, %320 : vector<8x128xf32>
    %326 = arith.addf %324, %325 : vector<8x128xf32>
    %327 = math.tanh %326 : vector<8x128xf32>
    %328 = arith.mulf %323, %327 : vector<8x128xf32>
    %c5_i32_96 = arith.constant 5 : i32
    %c8_i32_97 = arith.constant 8 : i32
    %329 = arith.muli %c5_i32_96, %c8_i32_97 : i32
    %330 = tpu.assume_multiple %329, 8 : i32
    %331 = arith.index_cast %330 : i32 to index
    %c0_98 = arith.constant 0 : index
    %332 = vector.load %arg12[%331, %c0_98] : memref<64x512xf32, #tpu.memory_space<vmem>>, vector<8x512xf32>
    %cst_99 = arith.constant dense<0.000000e+00> : vector<8x512xf32>
    %333 = tpu.matmul %328, %216, %cst_99 {dimension_numbers = #tpu.dot_dimension_numbers<[1], [0], [0], [1], [0, 0, 1, 1], [], []>} : vector<8x128xf32>, vector<128x512xf32>, vector<8x512xf32> -> vector<8x512xf32>
    %334 = arith.addf %332, %333 : vector<8x512xf32>
    %335 = vector.extract_strided_slice %334 {offsets = [0, 0], sizes = [8, 384], strides = [1, 1]} : vector<8x512xf32> to vector<8x384xf32>
    %336 = arith.negf %335 : vector<8x384xf32>
    %337 = math.exp %336 : vector<8x384xf32>
    %cst_100 = arith.constant 1.000000e+00 : f32
    %338 = vector.broadcast %cst_100 : f32 to vector<8x384xf32>
    %339 = arith.addf %338, %337 : vector<8x384xf32>
    %340 = arith.divf %338, %339 : vector<8x384xf32>
    %341 = vector.extract_strided_slice %334 {offsets = [0, 384], sizes = [8, 128], strides = [1, 1]} : vector<8x512xf32> to vector<8x128xf32>
    %342 = math.tanh %341 : vector<8x128xf32>
    %343 = vector.extract_strided_slice %340 {offsets = [0, 0], sizes = [8, 128], strides = [1, 1]} : vector<8x384xf32> to vector<8x128xf32>
    %344 = vector.extract_strided_slice %340 {offsets = [0, 128], sizes = [8, 128], strides = [1, 1]} : vector<8x384xf32> to vector<8x128xf32>
    %345 = vector.extract_strided_slice %340 {offsets = [0, 256], sizes = [8, 128], strides = [1, 1]} : vector<8x384xf32> to vector<8x128xf32>
    %346 = arith.mulf %344, %326 : vector<8x128xf32>
    %347 = arith.mulf %343, %342 : vector<8x128xf32>
    %348 = arith.addf %346, %347 : vector<8x128xf32>
    %349 = math.tanh %348 : vector<8x128xf32>
    %350 = arith.mulf %345, %349 : vector<8x128xf32>
    %c6_i32_101 = arith.constant 6 : i32
    %c8_i32_102 = arith.constant 8 : i32
    %351 = arith.muli %c6_i32_101, %c8_i32_102 : i32
    %352 = tpu.assume_multiple %351, 8 : i32
    %353 = arith.index_cast %352 : i32 to index
    %c0_103 = arith.constant 0 : index
    %354 = vector.load %arg12[%353, %c0_103] : memref<64x512xf32, #tpu.memory_space<vmem>>, vector<8x512xf32>
    %cst_104 = arith.constant dense<0.000000e+00> : vector<8x512xf32>
    %355 = tpu.matmul %350, %216, %cst_104 {dimension_numbers = #tpu.dot_dimension_numbers<[1], [0], [0], [1], [0, 0, 1, 1], [], []>} : vector<8x128xf32>, vector<128x512xf32>, vector<8x512xf32> -> vector<8x512xf32>
    %356 = arith.addf %354, %355 : vector<8x512xf32>
    %357 = vector.extract_strided_slice %356 {offsets = [0, 0], sizes = [8, 384], strides = [1, 1]} : vector<8x512xf32> to vector<8x384xf32>
    %358 = arith.negf %357 : vector<8x384xf32>
    %359 = math.exp %358 : vector<8x384xf32>
    %cst_105 = arith.constant 1.000000e+00 : f32
    %360 = vector.broadcast %cst_105 : f32 to vector<8x384xf32>
    %361 = arith.addf %360, %359 : vector<8x384xf32>
    %362 = arith.divf %360, %361 : vector<8x384xf32>
    %363 = vector.extract_strided_slice %356 {offsets = [0, 384], sizes = [8, 128], strides = [1, 1]} : vector<8x512xf32> to vector<8x128xf32>
    %364 = math.tanh %363 : vector<8x128xf32>
    %365 = vector.extract_strided_slice %362 {offsets = [0, 0], sizes = [8, 128], strides = [1, 1]} : vector<8x384xf32> to vector<8x128xf32>
    %366 = vector.extract_strided_slice %362 {offsets = [0, 128], sizes = [8, 128], strides = [1, 1]} : vector<8x384xf32> to vector<8x128xf32>
    %367 = vector.extract_strided_slice %362 {offsets = [0, 256], sizes = [8, 128], strides = [1, 1]} : vector<8x384xf32> to vector<8x128xf32>
    %368 = arith.mulf %366, %348 : vector<8x128xf32>
    %369 = arith.mulf %365, %364 : vector<8x128xf32>
    %370 = arith.addf %368, %369 : vector<8x128xf32>
    %371 = math.tanh %370 : vector<8x128xf32>
    %372 = arith.mulf %367, %371 : vector<8x128xf32>
    %c7_i32_106 = arith.constant 7 : i32
    %c8_i32_107 = arith.constant 8 : i32
    %373 = arith.muli %c7_i32_106, %c8_i32_107 : i32
    %374 = tpu.assume_multiple %373, 8 : i32
    %375 = arith.index_cast %374 : i32 to index
    %c0_108 = arith.constant 0 : index
    %376 = vector.load %arg12[%375, %c0_108] : memref<64x512xf32, #tpu.memory_space<vmem>>, vector<8x512xf32>
    %cst_109 = arith.constant dense<0.000000e+00> : vector<8x512xf32>
    %377 = tpu.matmul %372, %216, %cst_109 {dimension_numbers = #tpu.dot_dimension_numbers<[1], [0], [0], [1], [0, 0, 1, 1], [], []>} : vector<8x128xf32>, vector<128x512xf32>, vector<8x512xf32> -> vector<8x512xf32>
    %378 = arith.addf %376, %377 : vector<8x512xf32>
    %379 = vector.extract_strided_slice %378 {offsets = [0, 0], sizes = [8, 384], strides = [1, 1]} : vector<8x512xf32> to vector<8x384xf32>
    %380 = arith.negf %379 : vector<8x384xf32>
    %381 = math.exp %380 : vector<8x384xf32>
    %cst_110 = arith.constant 1.000000e+00 : f32
    %382 = vector.broadcast %cst_110 : f32 to vector<8x384xf32>
    %383 = arith.addf %382, %381 : vector<8x384xf32>
    %384 = arith.divf %382, %383 : vector<8x384xf32>
    %385 = vector.extract_strided_slice %378 {offsets = [0, 384], sizes = [8, 128], strides = [1, 1]} : vector<8x512xf32> to vector<8x128xf32>
    %386 = math.tanh %385 : vector<8x128xf32>
    %387 = vector.extract_strided_slice %384 {offsets = [0, 0], sizes = [8, 128], strides = [1, 1]} : vector<8x384xf32> to vector<8x128xf32>
    %388 = vector.extract_strided_slice %384 {offsets = [0, 128], sizes = [8, 128], strides = [1, 1]} : vector<8x384xf32> to vector<8x128xf32>
    %389 = vector.extract_strided_slice %384 {offsets = [0, 256], sizes = [8, 128], strides = [1, 1]} : vector<8x384xf32> to vector<8x128xf32>
    %390 = arith.mulf %388, %370 : vector<8x128xf32>
    %391 = arith.mulf %387, %386 : vector<8x128xf32>
    %392 = arith.addf %390, %391 : vector<8x128xf32>
    %393 = math.tanh %392 : vector<8x128xf32>
    %394 = arith.mulf %389, %393 : vector<8x128xf32>
    %c8_i32_111 = arith.constant 8 : i32
    %c0_112 = arith.constant 0 : index
    %c0_113 = arith.constant 0 : index
    %395 = vector.load %arg6[%c0_112, %c0_113] : memref<128x1024xf32, #tpu.memory_space<vmem>>, vector<128x1024xf32>
    %cst_114 = arith.constant dense<0.000000e+00> : vector<8x1024xf32>
    %396 = tpu.matmul %394, %395, %cst_114 {dimension_numbers = #tpu.dot_dimension_numbers<[1], [0], [0], [1], [0, 0, 1, 1], [], []>} : vector<8x128xf32>, vector<128x1024xf32>, vector<8x1024xf32> -> vector<8x1024xf32>
    %c0_115 = arith.constant 0 : index
    %c0_116 = arith.constant 0 : index
    %397 = vector.load %arg7[%c0_115, %c0_116] : memref<1x1024xf32, #tpu.memory_space<vmem>>, vector<1x1024xf32>
    %398 = vector.broadcast %397 : vector<1x1024xf32> to vector<8x1024xf32>
    %399 = arith.addf %396, %398 : vector<8x1024xf32>
    %cst_117 = arith.constant 0.000000e+00 : f32
    %400 = vector.broadcast %cst_117 : f32 to vector<8x1024xf32>
    %401 = arith.cmpf ogt, %399, %400 : vector<8x1024xf32>
    %402 = vector.broadcast %0 : f32 to vector<8x1024xf32>
    %403 = arith.mulf %402, %399 : vector<8x1024xf32>
    %404 = arith.select %401, %399, %403 : vector<8x1024xi1>, vector<8x1024xf32>
    %c0_118 = arith.constant 0 : index
    %c0_119 = arith.constant 0 : index
    %405 = vector.load %arg8[%c0_118, %c0_119] : memref<1024x128xf32, #tpu.memory_space<vmem>>, vector<1024x128xf32>
    %cst_120 = arith.constant dense<0.000000e+00> : vector<8x128xf32>
    %406 = tpu.matmul %404, %405, %cst_120 {dimension_numbers = #tpu.dot_dimension_numbers<[1], [0], [0], [1], [0, 0, 1, 1], [], []>} : vector<8x1024xf32>, vector<1024x128xf32>, vector<8x128xf32> -> vector<8x128xf32>
    %c0_121 = arith.constant 0 : index
    %c0_122 = arith.constant 0 : index
    %407 = vector.load %arg9[%c0_121, %c0_122] : memref<1x128xf32, #tpu.memory_space<vmem>>, vector<1x128xf32>
    %408 = vector.broadcast %407 : vector<1x128xf32> to vector<8x128xf32>
    %409 = arith.addf %406, %408 : vector<8x128xf32>
    %cst_123 = arith.constant 0.000000e+00 : f32
    %410 = vector.broadcast %cst_123 : f32 to vector<8x128xf32>
    %411 = arith.cmpf ogt, %409, %410 : vector<8x128xf32>
    %412 = vector.broadcast %0 : f32 to vector<8x128xf32>
    %413 = arith.mulf %412, %409 : vector<8x128xf32>
    %414 = arith.select %411, %409, %413 : vector<8x128xi1>, vector<8x128xf32>
    %c0_124 = arith.constant 0 : index
    %c0_125 = arith.constant 0 : index
    %415 = vector.load %arg11[%c0_124, %c0_125] : memref<8x128xf32, #tpu.memory_space<vmem>>, vector<8x128xf32>
    tpu.vector_store %arg11[%c0_124, %c0_125], %414 {strides = array<i32>} : memref<8x128xf32, #tpu.memory_space<vmem>>, vector<8x128xf32>,
    return
  }
  func.func @transform_0(%arg0: i32) -> (i32, i32, i32) {
    %c0_i32 = arith.constant 0 : i32
    %c0_i32_0 = arith.constant 0 : i32
    %c0_i32_1 = arith.constant 0 : i32
    return %c0_i32, %arg0, %c0_i32_0 : i32, i32, i32
  }
  func.func @transform_1(%arg0: i32) -> (i32, i32) {
    %c0_i32 = arith.constant 0 : i32
    %c0_i32_0 = arith.constant 0 : i32
    %c0_i32_1 = arith.constant 0 : i32
    return %c0_i32, %c0_i32_0 : i32, i32
  }
  func.func @transform_2(%arg0: i32) -> (i32, i32, i32) {
    %c0_i32 = arith.constant 0 : i32
    %c0_i32_0 = arith.constant 0 : i32
    %c0_i32_1 = arith.constant 0 : i32
    %c0_i32_2 = arith.constant 0 : i32
    return %c0_i32, %c0_i32_0, %c0_i32_1 : i32, i32, i32
  }
  func.func @transform_3(%arg0: i32) -> (i32, i32, i32) {
    %c0_i32 = arith.constant 0 : i32
    %c0_i32_0 = arith.constant 0 : i32
    %c0_i32_1 = arith.constant 0 : i32
    %c0_i32_2 = arith.constant 0 : i32
    return %c0_i32, %c0_i32_0, %c0_i32_1 : i32, i32, i32
  }
  func.func @transform_4(%arg0: i32) -> (i32, i32, i32) {
    %c0_i32 = arith.constant 0 : i32
    %c0_i32_0 = arith.constant 0 : i32
    %c0_i32_1 = arith.constant 0 : i32
    %c0_i32_2 = arith.constant 0 : i32
    return %c0_i32, %c0_i32_0, %c0_i32_1 : i32, i32, i32
  }
  func.func @transform_5(%arg0: i32) -> (i32, i32) {
    %c0_i32 = arith.constant 0 : i32
    %c0_i32_0 = arith.constant 0 : i32
    %c0_i32_1 = arith.constant 0 : i32
    return %c0_i32, %c0_i32_0 : i32, i32
  }
  func.func @transform_6(%arg0: i32) -> (i32, i32) {
    %c0_i32 = arith.constant 0 : i32
    %c0_i32_0 = arith.constant 0 : i32
    %c0_i32_1 = arith.constant 0 : i32
    return %c0_i32, %c0_i32_0 : i32, i32
  }
  func.func @transform_7(%arg0: i32) -> (i32, i32) {
    %c0_i32 = arith.constant 0 : i32
    %c0_i32_0 = arith.constant 0 : i32
    %c0_i32_1 = arith.constant 0 : i32
    return %c0_i32, %c0_i32_0 : i32, i32
  }
  func.func @transform_8(%arg0: i32) -> (i32, i32) {
    %c0_i32 = arith.constant 0 : i32
    %c0_i32_0 = arith.constant 0 : i32
    %c0_i32_1 = arith.constant 0 : i32
    return %c0_i32, %c0_i32_0 : i32, i32
  }
  func.func @transform_9(%arg0: i32) -> (i32, i32) {
    %c0_i32 = arith.constant 0 : i32
    %c0_i32_0 = arith.constant 0 : i32
    %c0_i32_1 = arith.constant 0 : i32
    return %c0_i32, %c0_i32_0 : i32, i32
  }
  func.func @transform_10(%arg0: i32) -> (i32, i32) {
    %c0_i32 = arith.constant 0 : i32
    %c0_i32_0 = arith.constant 0 : i32
    return %arg0, %c0_i32 : i32, i32
  }
}

</mosaic_0001>

<llo_original>
// kernel: lstm_model_forward.1
$region0: #{lstm_model_forward.1}
  #allocation0 [shape = 'u32[]', space=smem, size = 0x4, offset = 0x4, fixed_abs, tag = 'smem constant byte address 0x4 - core index']
  #allocation1 [shape = 'u32[72,128]{1,0:T(1,128)}', space=vmem, size = 0x9000, scoped, tag = 'internal scratch']
  #allocation2 [shape = 'f32[64,512]{1,0:T(8,128)}', space=vmem, size = 0x20000, scoped, tag = 'scratch operand']
  #allocation3 [shape = 'f32[64,128]{1,0:T(8,128)}', space=vmem, size = 0x8000, scoped, tag = 'scratch operand']
  #allocation4 [shape = 'f32[1,1]{1,0:T(1,128)S(6)}', space=smem, size = 0x200, scoped, tag = 'scoped memory for lstm_model_forward.1']
  %s0 = inlined_call_operand.vmem [shape: f32[8,8,128], index: 0, kind: input, shape index: {}]
  %s1 = inlined_call_operand.hbm [shape: f32[128,512], index: 1, kind: input, shape index: {}]
  %s2 = inlined_call_operand.hbm [shape: f32[1,128,512], index: 2, kind: input, shape index: {}]
  %s3 = inlined_call_operand.hbm [shape: f32[2,128,512], index: 3, kind: input, shape index: {}]
  %s4 = inlined_call_operand.vmem [shape: f32[2,1,512], index: 4, kind: input, shape index: {}]
  %s5 = inlined_call_operand.hbm [shape: f32[128,1024], index: 5, kind: input, shape index: {}]
  %s6 = inlined_call_operand.vmem [shape: f32[1,1024], index: 6, kind: input, shape index: {}]
  %s7 = inlined_call_operand.hbm [shape: f32[1024,128], index: 7, kind: input, shape index: {}]
  %s8 = inlined_call_operand.vmem [shape: f32[1,128], index: 8, kind: input, shape index: {}]
  %s9 = inlined_call_operand.<no memory space> [shape: f32[1,1], index: 9, kind: input, shape index: {}]
  %s10 = inlined_call_operand.vmem [shape: f32[8,128], index: 10, kind: output, shape index: {}]
  %s11 = sld [smem:[#allocation0]]
  $region70: #{lstm_model_forward.1} parent=0
    _
  %s13 = ssub.s32 1, %s11
  %s14 = scalar_select 0, %s13, %s11
  %15 = sst [smem:[#allocation4]] %s9
  $region1: #{lstm_model_forward.1} parent=0
    #allocation5 [shape = 'u8[262144]{0}', space=vmem, size = 0x40000, scoped, tag = 'input window, operand 1, single buffered']
    #allocation6 [shape = 's32[1]{0}', space=sflag, size = 0x4, scoped, tag = 'scoped memory for lstm_model_forward.1']
    #allocation7 [shape = 'u8[262144]{0}', space=vmem, size = 0x40000, scoped, tag = 'input window, operand 2, single buffered']
    #allocation8 [shape = 's32[1]{0}', space=sflag, size = 0x4, scoped, tag = 'scoped memory for lstm_model_forward.1']
    #allocation9 [shape = 'u8[524288]{0}', space=vmem, size = 0x80000, scoped, tag = 'input window, operand 3, single buffered']
    #allocation10 [shape = 'u8[524288]{0}', space=vmem, size = 0x80000, scoped, tag = 'input window, operand 5, single buffered']
    #allocation11 [shape = 's32[1]{0}', space=sflag, size = 0x4, scoped, tag = 'scoped memory for lstm_model_forward.1']
    #allocation12 [shape = 'u8[524288]{0}', space=vmem, size = 0x80000, scoped, tag = 'input window, operand 7, single buffered']
    %16 = vsyncpa [#allocation6], 0
    %17 = vsyncpa [#allocation8], 0
    %18 = vsyncpa [#allocation11], 0
    // Predicated region
    $region2: #{lstm_model_forward.1} parent=1 // pred_check
      _
    $region3: #{lstm_model_forward.1} parent=1 // pred_check_branch
      %20 = sbr.rel (0) target = $region5
    $region4: #{lstm_model_forward.1} parent=1 // pred_region
      _
    $region5: #{lstm_model_forward.1} parent=1 // pred_fallthru
      _
    // Predicated region
    $region6: #{lstm_model_forward.1} parent=1 // pred_check
      _
    $region7: #{lstm_model_forward.1} parent=1 // pred_check_branch
      %22 = sbr.rel (0) target = $region9
    $region8: #{lstm_model_forward.1} parent=1 // pred_region
      %24 = vsyncadd [#allocation6], 0
      %s25 = sshll.u32 %s1, 4
      %s26 = int_to_ptr.hbm [resolvable:$true] %s25
      %s27 = sshll.u32 [#allocation5], 4
      %s28 = int_to_ptr.vmem [resolvable:$true] %s27
      %33 = dma.hbm_to_vmem [thread:$0]  %s26, 8192, %s28, [#allocation6], 512, 512, 32
    $region9: #{lstm_model_forward.1} parent=1 // pred_fallthru
      _
    // Predicated region
    $region10: #{lstm_model_forward.1} parent=1 // pred_check
      _
    $region11: #{lstm_model_forward.1} parent=1 // pred_check_branch
      %35 = sbr.rel (0) target = $region13
    $region12: #{lstm_model_forward.1} parent=1 // pred_region
      %37 = vsyncadd [#allocation8], 0
      %s38 = sshll.u32 %s2, 4
      %s39 = int_to_ptr.hbm [resolvable:$true] %s38
      %s40 = sshll.u32 [#allocation7], 4
      %s41 = int_to_ptr.vmem [resolvable:$true] %s40
      %46 = dma.hbm_to_vmem [thread:$0]  %s39, 8192, %s41, [#allocation8], 512, 512, 32
    $region13: #{lstm_model_forward.1} parent=1 // pred_fallthru
      _
    // Predicated region
    $region14: #{lstm_model_forward.1} parent=1 // pred_check
      _
    $region15: #{lstm_model_forward.1} parent=1 // pred_check_branch
      %48 = sbr.rel (0) target = $region17
    $region16: #{lstm_model_forward.1} parent=1 // pred_region
      %50 = vsyncadd [#allocation8], 0
      %s51 = sshll.u32 %s3, 4
      %s52 = int_to_ptr.hbm [resolvable:$true] %s51
      %s53 = sshll.u32 [#allocation9], 4
      %s54 = int_to_ptr.vmem [resolvable:$true] %s53
      %59 = dma.hbm_to_vmem [thread:$0]  %s52, 16384, %s54, [#allocation8], 512, 512, 32
    $region17: #{lstm_model_forward.1} parent=1 // pred_fallthru
      _
    // Predicated region
    $region18: #{lstm_model_forward.1} parent=1 // pred_check
      _
    $region19: #{lstm_model_forward.1} parent=1 // pred_check_branch
      %61 = sbr.rel (0) target = $region21
    $region20: #{lstm_model_forward.1} parent=1 // pred_region
      _
    $region21: #{lstm_model_forward.1} parent=1 // pred_fallthru
      _
    // Predicated region
    $region22: #{lstm_model_forward.1} parent=1 // pred_check
      _
    $region23: #{lstm_model_forward.1} parent=1 // pred_check_branch
      %63 = sbr.rel (0) target = $region25
    $region24: #{lstm_model_forward.1} parent=1 // pred_region
      %65 = vsyncadd [#allocation11], 0
      %s66 = sshll.u32 %s5, 4
      %s67 = int_to_ptr.hbm [resolvable:$true] %s66
      %s68 = sshll.u32 [#allocation10], 4
      %s69 = int_to_ptr.vmem [resolvable:$true] %s68
      %74 = dma.hbm_to_vmem [thread:$0]  %s67, 16384, %s69, [#allocation11], 1024, 1024, 64
    $region25: #{lstm_model_forward.1} parent=1 // pred_fallthru
      _
    // Predicated region
    $region26: #{lstm_model_forward.1} parent=1 // pred_check
      _
    $region27: #{lstm_model_forward.1} parent=1 // pred_check_branch
      %76 = sbr.rel (0) target = $region29
    $region28: #{lstm_model_forward.1} parent=1 // pred_region
      _
    $region29: #{lstm_model_forward.1} parent=1 // pred_fallthru
      _
    // Predicated region
    $region30: #{lstm_model_forward.1} parent=1 // pred_check
      _
    $region31: #{lstm_model_forward.1} parent=1 // pred_check_branch
      %78 = sbr.rel (0) target = $region33
    $region32: #{lstm_model_forward.1} parent=1 // pred_region
      %80 = vsyncadd [#allocation11], 0
      %s81 = sshll.u32 %s7, 4
      %s82 = int_to_ptr.hbm [resolvable:$true] %s81
      %s83 = sshll.u32 [#allocation12], 4
      %s84 = int_to_ptr.vmem [resolvable:$true] %s83
      %89 = dma.hbm_to_vmem [thread:$0]  %s82, 16384, %s84, [#allocation11], 128, 128, 8
    $region33: #{lstm_model_forward.1} parent=1 // pred_fallthru
      _
    // Predicated region
    $region34: #{lstm_model_forward.1} parent=1 // pred_check
      _
    $region35: #{lstm_model_forward.1} parent=1 // pred_check_branch
      %91 = sbr.rel (0) target = $region37
    $region36: #{lstm_model_forward.1} parent=1 // pred_region
      _
    $region37: #{lstm_model_forward.1} parent=1 // pred_fallthru
      _
    // Predicated region
    $region38: #{lstm_model_forward.1} parent=1 // pred_check
      _
    $region39: #{lstm_model_forward.1} parent=1 // pred_check_branch
      %93 = sbr.rel (0) target = $region41
    $region40: #{lstm_model_forward.1} parent=1 // pred_region
      _
    $region41: #{lstm_model_forward.1} parent=1 // pred_fallthru
      _
    // Predicated region
    $region42: #{lstm_model_forward.1} parent=1 // pred_check
      _
    $region43: #{lstm_model_forward.1} parent=1 // pred_check_branch
      %95 = sbr.rel (0) target = $region45
    $region44: #{lstm_model_forward.1} parent=1 // pred_region
      %97 = dma.done [#allocation6], 8192
    $region45: #{lstm_model_forward.1} parent=1 // pred_fallthru
      _
    // Predicated region
    $region46: #{lstm_model_forward.1} parent=1 // pred_check
      _
    $region47: #{lstm_model_forward.1} parent=1 // pred_check_branch
      %99 = sbr.rel (0) target = $region49
    $region48: #{lstm_model_forward.1} parent=1 // pred_region
      %101 = dma.done [#allocation8], 8192
    $region49: #{lstm_model_forward.1} parent=1 // pred_fallthru
      _
    // Predicated region
    $region50: #{lstm_model_forward.1} parent=1 // pred_check
      _
    $region51: #{lstm_model_forward.1} parent=1 // pred_check_branch
      %103 = sbr.rel (0) target = $region53
    $region52: #{lstm_model_forward.1} parent=1 // pred_region
      %105 = dma.done [#allocation8], 16384
    $region53: #{lstm_model_forward.1} parent=1 // pred_fallthru
      _
    // Predicated region
    $region54: #{lstm_model_forward.1} parent=1 // pred_check
      _
    $region55: #{lstm_model_forward.1} parent=1 // pred_check_branch
      %107 = sbr.rel (0) target = $region57
    $region56: #{lstm_model_forward.1} parent=1 // pred_region
      %109 = dma.done [#allocation11], 16384
    $region57: #{lstm_model_forward.1} parent=1 // pred_fallthru
      _
    // Predicated region
    $region58: #{lstm_model_forward.1} parent=1 // pred_check
      _
    $region59: #{lstm_model_forward.1} parent=1 // pred_check_branch
      %111 = sbr.rel (0) target = $region61
    $region60: #{lstm_model_forward.1} parent=1 // pred_region
      %113 = dma.done [#allocation11], 16384
    $region61: #{lstm_model_forward.1} parent=1 // pred_fallthru
      _
    %s114 = sld [smem:[#allocation4]]
    %v115 = vld [vmem:[%s0] sm:$0xff]
    %v116 = vld [vmem:[%s0 + $0x8] sm:$0xff]
    %v117 = vld [vmem:[%s0 + $0x10] sm:$0xff]
    %v118 = vld [vmem:[%s0 + $0x18] sm:$0xff]
    %v119 = vld [vmem:[%s0 + $0x20] sm:$0xff]
    %v120 = vld [vmem:[%s0 + $0x28] sm:$0xff]
    %v121 = vld [vmem:[%s0 + $0x30] sm:$0xff]
    %v122 = vld [vmem:[%s0 + $0x38] sm:$0xff]
    %v123 = vld [vmem:[#allocation5] sm:$0xff]
    %v124 = vld [vmem:[#allocation5 + $0x8] sm:$0xff]
    %v125 = vld [vmem:[#allocation5 + $0x10] sm:$0xff]
    %v126 = vld [vmem:[#allocation5 + $0x18] sm:$0xff]
    %v127 = vld [vmem:[#allocation5 + $0x20] sm:$0xff]
    %v128 = vld [vmem:[#allocation5 + $0x28] sm:$0xff]
    %v129 = vld [vmem:[#allocation5 + $0x30] sm:$0xff]
    %v130 = vld [vmem:[#allocation5 + $0x38] sm:$0xff]
    %v131 = vld [vmem:[#allocation5 + $0x40] sm:$0xff]
    %v132 = vld [vmem:[#allocation5 + $0x48] sm:$0xff]
    %v133 = vld [vmem:[#allocation5 + $0x50] sm:$0xff]
    %v134 = vld [vmem:[#allocation5 + $0x58] sm:$0xff]
    %v135 = vld [vmem:[#allocation5 + $0x60] sm:$0xff]
    %v136 = vld [vmem:[#allocation5 + $0x68] sm:$0xff]
    %v137 = vld [vmem:[#allocation5 + $0x70] sm:$0xff]
    %v138 = vld [vmem:[#allocation5 + $0x78] sm:$0xff]
    %v139 = vld [vmem:[#allocation5 + $0x80] sm:$0xff]
    %v140 = vld [vmem:[#allocation5 + $0x88] sm:$0xff]
    %v141 = vld [vmem:[#allocation5 + $0x90] sm:$0xff]
    %v142 = vld [vmem:[#allocation5 + $0x98] sm:$0xff]
    %v143 = vld [vmem:[#allocation5 + $0xa0] sm:$0xff]
    %v144 = vld [vmem:[#allocation5 + $0xa8] sm:$0xff]
    %v145 = vld [vmem:[#allocation5 + $0xb0] sm:$0xff]
    %v146 = vld [vmem:[#allocation5 + $0xb8] sm:$0xff]
    %v147 = vld [vmem:[#allocation5 + $0xc0] sm:$0xff]
    %v148 = vld [vmem:[#allocation5 + $0xc8] sm:$0xff]
    %v149 = vld [vmem:[#allocation5 + $0xd0] sm:$0xff]
    %v150 = vld [vmem:[#allocation5 + $0xd8] sm:$0xff]
    %v151 = vld [vmem:[#allocation5 + $0xe0] sm:$0xff]
    %v152 = vld [vmem:[#allocation5 + $0xe8] sm:$0xff]
    %v153 = vld [vmem:[#allocation5 + $0xf0] sm:$0xff]
    %v154 = vld [vmem:[#allocation5 + $0xf8] sm:$0xff]
    %v155 = vld [vmem:[#allocation5 + $0x100] sm:$0xff]
    %v156 = vld [vmem:[#allocation5 + $0x108] sm:$0xff]
    %v157 = vld [vmem:[#allocation5 + $0x110] sm:$0xff]
    %v158 = vld [vmem:[#allocation5 + $0x118] sm:$0xff]
    %v159 = vld [vmem:[#allocation5 + $0x120] sm:$0xff]
    %v160 = vld [vmem:[#allocation5 + $0x128] sm:$0xff]
    %v161 = vld [vmem:[#allocation5 + $0x130] sm:$0xff]
    %v162 = vld [vmem:[#allocation5 + $0x138] sm:$0xff]
    %v163 = vld [vmem:[#allocation5 + $0x140] sm:$0xff]
    %v164 = vld [vmem:[#allocation5 + $0x148] sm:$0xff]
    %v165 = vld [vmem:[#allocation5 + $0x150] sm:$0xff]
    %v166 = vld [vmem:[#allocation5 + $0x158] sm:$0xff]
    %v167 = vld [vmem:[#allocation5 + $0x160] sm:$0xff]
    %v168 = vld [vmem:[#allocation5 + $0x168] sm:$0xff]
    %v169 = vld [vmem:[#allocation5 + $0x170] sm:$0xff]
    %v170 = vld [vmem:[#allocation5 + $0x178] sm:$0xff]
    %v171 = vld [vmem:[#allocation5 + $0x180] sm:$0xff]
    %v172 = vld [vmem:[#allocation5 + $0x188] sm:$0xff]
    %v173 = vld [vmem:[#allocation5 + $0x190] sm:$0xff]
    %v174 = vld [vmem:[#allocation5 + $0x198] sm:$0xff]
    %v175 = vld [vmem:[#allocation5 + $0x1a0] sm:$0xff]
    %v176 = vld [vmem:[#allocation5 + $0x1a8] sm:$0xff]
    %v177 = vld [vmem:[#allocation5 + $0x1b0] sm:$0xff]
    %v178 = vld [vmem:[#allocation5 + $0x1b8] sm:$0xff]
    %v179 = vld [vmem:[#allocation5 + $0x1c0] sm:$0xff]
    %v180 = vld [vmem:[#allocation5 + $0x1c8] sm:$0xff]
    %v181 = vld [vmem:[#allocation5 + $0x1d0] sm:$0xff]
    %v182 = vld [vmem:[#allocation5 + $0x1d8] sm:$0xff]
    %v183 = vld [vmem:[#allocation5 + $0x1e0] sm:$0xff]
    %v184 = vld [vmem:[#allocation5 + $0x1e8] sm:$0xff]
    %v185 = vld [vmem:[#allocation5 + $0x1f0] sm:$0xff]
    %v186 = vld [vmem:[#allocation5 + $0x1f8] sm:$0xff]
    %v187 = vld [vmem:[%s4] sm:$0xf]
    %v189 = vperm.slane %v187, 0
    %v190 = vperm.slane %v187, 1
    %v191 = vperm.slane %v187, 2
    %v192 = vperm.slane %v187, 3
    %197 = vmatpush.msra.mxu0 %v183
    %198 = vmatpush.msra.mxu0 %v179
    %199 = vmatpush.msra.mxu0 %v175
    %200 = vmatpush.msra.mxu0 %v171
    %201 = vmatpush.msra.mxu0 %v167
    %202 = vmatpush.msra.mxu0 %v163
    %203 = vmatpush.msra.mxu0 %v159
    %204 = vmatpush.msra.mxu0 %v155
    %205 = vmatpush.msra.mxu0 %v151
    %206 = vmatpush.msra.mxu0 %v147
    %207 = vmatpush.msra.mxu0 %v143
    %208 = vmatpush.msra.mxu0 %v139
    %209 = vmatpush.msra.mxu0 %v135
    %210 = vmatpush.msra.mxu0 %v131
    %211 = vmatpush.msra.mxu0 %v127
    %212 = vmatpush.msra.mxu0 %v123
    %213 = vmatmul.f32.gmra.mxu0 %v115
    %v214 = vpop.f32.mrf.mxu0
    %v215 = vadd.f32 %v189, %v214
    %216 = vmatmul.f32.gmra.mxu0 %v116
    %v217 = vpop.f32.mrf.mxu0
    %v218 = vadd.f32 %v189, %v217
    %219 = vmatmul.f32.gmra.mxu0 %v117
    %v220 = vpop.f32.mrf.mxu0
    %v221 = vadd.f32 %v189, %v220
    %222 = vmatmul.f32.gmra.mxu0 %v118
    %v223 = vpop.f32.mrf.mxu0
    %v224 = vadd.f32 %v189, %v223
    %225 = vmatmul.f32.gmra.mxu0 %v119
    %v226 = vpop.f32.mrf.mxu0
    %v227 = vadd.f32 %v189, %v226
    %228 = vmatmul.f32.gmra.mxu0 %v120
    %v229 = vpop.f32.mrf.mxu0
    %v230 = vadd.f32 %v189, %v229
    %231 = vmatmul.f32.gmra.mxu0 %v121
    %v232 = vpop.f32.mrf.mxu0
    %v233 = vadd.f32 %v189, %v232
    %234 = vmatmul.f32.gmra.mxu0 %v122
    %v235 = vpop.f32.mrf.mxu0
    %v236 = vadd.f32 %v189, %v235
    %237 = vdwg.mxu0
    %238 = vmatpush.msra.mxu0 %v184
    %239 = vmatpush.msra.mxu0 %v180
    %240 = vmatpush.msra.mxu0 %v176
    %241 = vmatpush.msra.mxu0 %v172
    %242 = vmatpush.msra.mxu0 %v168
    %243 = vmatpush.msra.mxu0 %v164
    %244 = vmatpush.msra.mxu0 %v160
    %245 = vmatpush.msra.mxu0 %v156
    %246 = vmatpush.msra.mxu0 %v152
    %247 = vmatpush.msra.mxu0 %v148
    %248 = vmatpush.msra.mxu0 %v144
    %249 = vmatpush.msra.mxu0 %v140
    %250 = vmatpush.msra.mxu0 %v136
    %251 = vmatpush.msra.mxu0 %v132
    %252 = vmatpush.msra.mxu0 %v128
    %253 = vmatpush.msra.mxu0 %v124
    %254 = vmatmul.f32.gmra.mxu0 %v115
    %v255 = vpop.f32.mrf.mxu0
    %v256 = vadd.f32 %v190, %v255
    %257 = vmatmul.f32.gmra.mxu0 %v116
    %v258 = vpop.f32.mrf.mxu0
    %v259 = vadd.f32 %v190, %v258
    %260 = vmatmul.f32.gmra.mxu0 %v117
    %v261 = vpop.f32.mrf.mxu0
    %v262 = vadd.f32 %v190, %v261
    %263 = vmatmul.f32.gmra.mxu0 %v118
    %v264 = vpop.f32.mrf.mxu0
    %v265 = vadd.f32 %v190, %v264
    %266 = vmatmul.f32.gmra.mxu0 %v119
    %v267 = vpop.f32.mrf.mxu0
    %v268 = vadd.f32 %v190, %v267
    %269 = vmatmul.f32.gmra.mxu0 %v120
    %v270 = vpop.f32.mrf.mxu0
    %v271 = vadd.f32 %v190, %v270
    %272 = vmatmul.f32.gmra.mxu0 %v121
    %v273 = vpop.f32.mrf.mxu0
    %v274 = vadd.f32 %v190, %v273
    %275 = vmatmul.f32.gmra.mxu0 %v122
    %v276 = vpop.f32.mrf.mxu0
    %v277 = vadd.f32 %v190, %v276
    %278 = vdwg.mxu0
    %279 = vmatpush.msra.mxu0 %v185
    %280 = vmatpush.msra.mxu0 %v181
    %281 = vmatpush.msra.mxu0 %v177
    %282 = vmatpush.msra.mxu0 %v173
    %283 = vmatpush.msra.mxu0 %v169
    %284 = vmatpush.msra.mxu0 %v165
    %285 = vmatpush.msra.mxu0 %v161
    %286 = vmatpush.msra.mxu0 %v157
    %287 = vmatpush.msra.mxu0 %v153
    %288 = vmatpush.msra.mxu0 %v149
    %289 = vmatpush.msra.mxu0 %v145
    %290 = vmatpush.msra.mxu0 %v141
    %291 = vmatpush.msra.mxu0 %v137
    %292 = vmatpush.msra.mxu0 %v133
    %293 = vmatpush.msra.mxu0 %v129
    %294 = vmatpush.msra.mxu0 %v125
    %295 = vmatmul.f32.gmra.mxu0 %v115
    %v296 = vpop.f32.mrf.mxu0
    %v297 = vadd.f32 %v191, %v296
    %298 = vmatmul.f32.gmra.mxu0 %v116
    %v299 = vpop.f32.mrf.mxu0
    %v300 = vadd.f32 %v191, %v299
    %301 = vmatmul.f32.gmra.mxu0 %v117
    %v302 = vpop.f32.mrf.mxu0
    %v303 = vadd.f32 %v191, %v302
    %304 = vmatmul.f32.gmra.mxu0 %v118
    %v305 = vpop.f32.mrf.mxu0
    %v306 = vadd.f32 %v191, %v305
    %307 = vmatmul.f32.gmra.mxu0 %v119
    %v308 = vpop.f32.mrf.mxu0
    %v309 = vadd.f32 %v191, %v308
    %310 = vmatmul.f32.gmra.mxu0 %v120
    %v311 = vpop.f32.mrf.mxu0
    %v312 = vadd.f32 %v191, %v311
    %313 = vmatmul.f32.gmra.mxu0 %v121
    %v314 = vpop.f32.mrf.mxu0
    %v315 = vadd.f32 %v191, %v314
    %316 = vmatmul.f32.gmra.mxu0 %v122
    %v317 = vpop.f32.mrf.mxu0
    %v318 = vadd.f32 %v191, %v317
    %319 = vdwg.mxu0
    %320 = vmatpush.msra.mxu0 %v186
    %321 = vmatpush.msra.mxu0 %v182
    %322 = vmatpush.msra.mxu0 %v178
    %323 = vmatpush.msra.mxu0 %v174
    %324 = vmatpush.msra.mxu0 %v170
    %325 = vmatpush.msra.mxu0 %v166
    %326 = vmatpush.msra.mxu0 %v162
    %327 = vmatpush.msra.mxu0 %v158
    %328 = vmatpush.msra.mxu0 %v154
    %329 = vmatpush.msra.mxu0 %v150
    %330 = vmatpush.msra.mxu0 %v146
    %331 = vmatpush.msra.mxu0 %v142
    %332 = vmatpush.msra.mxu0 %v138
    %333 = vmatpush.msra.mxu0 %v134
    %334 = vmatpush.msra.mxu0 %v130
    %335 = vmatpush.msra.mxu0 %v126
    %336 = vmatmul.f32.gmra.mxu0 %v115
    %v337 = vpop.f32.mrf.mxu0
    %v338 = vadd.f32 %v192, %v337
    %339 = vmatmul.f32.gmra.mxu0 %v116
    %v340 = vpop.f32.mrf.mxu0
    %v341 = vadd.f32 %v192, %v340
    %342 = vmatmul.f32.gmra.mxu0 %v117
    %v343 = vpop.f32.mrf.mxu0
    %v344 = vadd.f32 %v192, %v343
    %345 = vmatmul.f32.gmra.mxu0 %v118
    %v346 = vpop.f32.mrf.mxu0
    %v347 = vadd.f32 %v192, %v346
    %348 = vmatmul.f32.gmra.mxu0 %v119
    %v349 = vpop.f32.mrf.mxu0
    %v350 = vadd.f32 %v192, %v349
    %351 = vmatmul.f32.gmra.mxu0 %v120
    %v352 = vpop.f32.mrf.mxu0
    %v353 = vadd.f32 %v192, %v352
    %354 = vmatmul.f32.gmra.mxu0 %v121
    %v355 = vpop.f32.mrf.mxu0
    %v356 = vadd.f32 %v192, %v355
    %357 = vmatmul.f32.gmra.mxu0 %v122
    %v358 = vpop.f32.mrf.mxu0
    %v359 = vadd.f32 %v192, %v358
    %360 = vdwg.mxu0
    %361 = vst [vmem:[#allocation2] sm:$0xff] %v215
    %362 = vst [vmem:[#allocation2 + $0x8] sm:$0xff] %v256
    %363 = vst [vmem:[#allocation2 + $0x10] sm:$0xff] %v297
    %364 = vst [vmem:[#allocation2 + $0x18] sm:$0xff] %v338
    %365 = vst [vmem:[#allocation2 + $0x20] sm:$0xff] %v218
    %366 = vst [vmem:[#allocation2 + $0x28] sm:$0xff] %v259
    %367 = vst [vmem:[#allocation2 + $0x30] sm:$0xff] %v300
    %368 = vst [vmem:[#allocation2 + $0x38] sm:$0xff] %v341
    %369 = vst [vmem:[#allocation2 + $0x40] sm:$0xff] %v221
    %370 = vst [vmem:[#allocation2 + $0x48] sm:$0xff] %v262
    %371 = vst [vmem:[#allocation2 + $0x50] sm:$0xff] %v303
    %372 = vst [vmem:[#allocation2 + $0x58] sm:$0xff] %v344
    %373 = vst [vmem:[#allocation2 + $0x60] sm:$0xff] %v224
    %374 = vst [vmem:[#allocation2 + $0x68] sm:$0xff] %v265
    %375 = vst [vmem:[#allocation2 + $0x70] sm:$0xff] %v306
    %376 = vst [vmem:[#allocation2 + $0x78] sm:$0xff] %v347
    %377 = vst [vmem:[#allocation2 + $0x80] sm:$0xff] %v227
    %378 = vst [vmem:[#allocation2 + $0x88] sm:$0xff] %v268
    %379 = vst [vmem:[#allocation2 + $0x90] sm:$0xff] %v309
    %380 = vst [vmem:[#allocation2 + $0x98] sm:$0xff] %v350
    %381 = vst [vmem:[#allocation2 + $0xa0] sm:$0xff] %v230
    %382 = vst [vmem:[#allocation2 + $0xa8] sm:$0xff] %v271
    %383 = vst [vmem:[#allocation2 + $0xb0] sm:$0xff] %v312
    %384 = vst [vmem:[#allocation2 + $0xb8] sm:$0xff] %v353
    %385 = vst [vmem:[#allocation2 + $0xc0] sm:$0xff] %v233
    %386 = vst [vmem:[#allocation2 + $0xc8] sm:$0xff] %v274
    %387 = vst [vmem:[#allocation2 + $0xd0] sm:$0xff] %v315
    %388 = vst [vmem:[#allocation2 + $0xd8] sm:$0xff] %v356
    %389 = vst [vmem:[#allocation2 + $0xe0] sm:$0xff] %v236
    %390 = vst [vmem:[#allocation2 + $0xe8] sm:$0xff] %v277
    %391 = vst [vmem:[#allocation2 + $0xf0] sm:$0xff] %v318
    %392 = vst [vmem:[#allocation2 + $0xf8] sm:$0xff] %v359
    %v393 = vld [vmem:[#allocation9] sm:$0xff]
    %v394 = vld [vmem:[#allocation9 + $0x8] sm:$0xff]
    %v395 = vld [vmem:[#allocation9 + $0x10] sm:$0xff]
    %v396 = vld [vmem:[#allocation9 + $0x18] sm:$0xff]
    %v397 = vld [vmem:[#allocation9 + $0x20] sm:$0xff]
    %v398 = vld [vmem:[#allocation9 + $0x28] sm:$0xff]
    %v399 = vld [vmem:[#allocation9 + $0x30] sm:$0xff]
    %v400 = vld [vmem:[#allocation9 + $0x38] sm:$0xff]
    %v401 = vld [vmem:[#allocation9 + $0x40] sm:$0xff]
    %v402 = vld [vmem:[#allocation9 + $0x48] sm:$0xff]
    %v403 = vld [vmem:[#allocation9 + $0x50] sm:$0xff]
    %v404 = vld [vmem:[#allocation9 + $0x58] sm:$0xff]
    %v405 = vld [vmem:[#allocation9 + $0x60] sm:$0xff]
    %v406 = vld [vmem:[#allocation9 + $0x68] sm:$0xff]
    %v407 = vld [vmem:[#allocation9 + $0x70] sm:$0xff]
    %v408 = vld [vmem:[#allocation9 + $0x78] sm:$0xff]
    %v409 = vld [vmem:[#allocation9 + $0x80] sm:$0xff]
    %v410 = vld [vmem:[#allocation9 + $0x88] sm:$0xff]
    %v411 = vld [vmem:[#allocation9 + $0x90] sm:$0xff]
    %v412 = vld [vmem:[#allocation9 + $0x98] sm:$0xff]
    %v413 = vld [vmem:[#allocation9 + $0xa0] sm:$0xff]
    %v414 = vld [vmem:[#allocation9 + $0xa8] sm:$0xff]
    %v415 = vld [vmem:[#allocation9 + $0xb0] sm:$0xff]
    %v416 = vld [vmem:[#allocation9 + $0xb8] sm:$0xff]
    %v417 = vld [vmem:[#allocation9 + $0xc0] sm:$0xff]
    %v418 = vld [vmem:[#allocation9 + $0xc8] sm:$0xff]
    %v419 = vld [vmem:[#allocation9 + $0xd0] sm:$0xff]
    %v420 = vld [vmem:[#allocation9 + $0xd8] sm:$0xff]
    %v421 = vld [vmem:[#allocation9 + $0xe0] sm:$0xff]
    %v422 = vld [vmem:[#allocation9 + $0xe8] sm:$0xff]
    %v423 = vld [vmem:[#allocation9 + $0xf0] sm:$0xff]
    %v424 = vld [vmem:[#allocation9 + $0xf8] sm:$0xff]
    %v425 = vld [vmem:[#allocation9 + $0x100] sm:$0xff]
    %v426 = vld [vmem:[#allocation9 + $0x108] sm:$0xff]
    %v427 = vld [vmem:[#allocation9 + $0x110] sm:$0xff]
    %v428 = vld [vmem:[#allocation9 + $0x118] sm:$0xff]
    %v429 = vld [vmem:[#allocation9 + $0x120] sm:$0xff]
    %v430 = vld [vmem:[#allocation9 + $0x128] sm:$0xff]
    %v431 = vld [vmem:[#allocation9 + $0x130] sm:$0xff]
    %v432 = vld [vmem:[#allocation9 + $0x138] sm:$0xff]
    %v433 = vld [vmem:[#allocation9 + $0x140] sm:$0xff]
    %v434 = vld [vmem:[#allocation9 + $0x148] sm:$0xff]
    %v435 = vld [vmem:[#allocation9 + $0x150] sm:$0xff]
    %v436 = vld [vmem:[#allocation9 + $0x158] sm:$0xff]
    %v437 = vld [vmem:[#allocation9 + $0x160] sm:$0xff]
    %v438 = vld [vmem:[#allocation9 + $0x168] sm:$0xff]
    %v439 = vld [vmem:[#allocation9 + $0x170] sm:$0xff]
    %v440 = vld [vmem:[#allocation9 + $0x178] sm:$0xff]
    %v441 = vld [vmem:[#allocation9 + $0x180] sm:$0xff]
    %v442 = vld [vmem:[#allocation9 + $0x188] sm:$0xff]
    %v443 = vld [vmem:[#allocation9 + $0x190] sm:$0xff]
    %v444 = vld [vmem:[#allocation9 + $0x198] sm:$0xff]
    %v445 = vld [vmem:[#allocation9 + $0x1a0] sm:$0xff]
    %v446 = vld [vmem:[#allocation9 + $0x1a8] sm:$0xff]
    %v447 = vld [vmem:[#allocation9 + $0x1b0] sm:$0xff]
    %v448 = vld [vmem:[#allocation9 + $0x1b8] sm:$0xff]
    %v449 = vld [vmem:[#allocation9 + $0x1c0] sm:$0xff]
    %v450 = vld [vmem:[#allocation9 + $0x1c8] sm:$0xff]
    %v451 = vld [vmem:[#allocation9 + $0x1d0] sm:$0xff]
    %v452 = vld [vmem:[#allocation9 + $0x1d8] sm:$0xff]
    %v453 = vld [vmem:[#allocation9 + $0x1e0] sm:$0xff]
    %v454 = vld [vmem:[#allocation9 + $0x1e8] sm:$0xff]
    %v455 = vld [vmem:[#allocation9 + $0x1f0] sm:$0xff]
    %v456 = vld [vmem:[#allocation9 + $0x1f8] sm:$0xff]
    %s457 = smul.u32 0, 4
    %s458 = smul.addr %s457, 8
    %s459 = scalar_lea.vmem [#allocation2], %s458
    %v460 = vld [vmem:[%s459] sm:$0xff]
    %v461 = vld [vmem:[%s459 + $0x8] sm:$0xff]
    %v462 = vld [vmem:[%s459 + $0x10] sm:$0xff]
    %v463 = vld [vmem:[%s459 + $0x18] sm:$0xff]
    %464 = vmatpush.msra.mxu0 %v453
    %465 = vmatpush.msra.mxu0 %v449
    %466 = vmatpush.msra.mxu0 %v445
    %467 = vmatpush.msra.mxu0 %v441
    %468 = vmatpush.msra.mxu0 %v437
    %469 = vmatpush.msra.mxu0 %v433
    %470 = vmatpush.msra.mxu0 %v429
    %471 = vmatpush.msra.mxu0 %v425
    %472 = vmatpush.msra.mxu0 %v421
    %473 = vmatpush.msra.mxu0 %v417
    %474 = vmatpush.msra.mxu0 %v413
    %475 = vmatpush.msra.mxu0 %v409
    %476 = vmatpush.msra.mxu0 %v405
    %477 = vmatpush.msra.mxu0 %v401
    %478 = vmatpush.msra.mxu0 %v397
    %479 = vmatpush.msra.mxu0 %v393
    %480 = vmatmul.f32.gmra.mxu0 0.0
    %v481 = vpop.f32.mrf.mxu0
    %v482 = vadd.f32 0.0, %v481
    %483 = vdwg.mxu0
    %484 = vmatpush.msra.mxu0 %v454
    %485 = vmatpush.msra.mxu0 %v450
    %486 = vmatpush.msra.mxu0 %v446
    %487 = vmatpush.msra.mxu0 %v442
    %488 = vmatpush.msra.mxu0 %v438
    %489 = vmatpush.msra.mxu0 %v434
    %490 = vmatpush.msra.mxu0 %v430
    %491 = vmatpush.msra.mxu0 %v426
    %492 = vmatpush.msra.mxu0 %v422
    %493 = vmatpush.msra.mxu0 %v418
    %494 = vmatpush.msra.mxu0 %v414
    %495 = vmatpush.msra.mxu0 %v410
    %496 = vmatpush.msra.mxu0 %v406
    %497 = vmatpush.msra.mxu0 %v402
    %498 = vmatpush.msra.mxu0 %v398
    %499 = vmatpush.msra.mxu0 %v394
    %500 = vmatmul.f32.gmra.mxu0 0.0
    %v501 = vpop.f32.mrf.mxu0
    %v502 = vadd.f32 0.0, %v501
    %503 = vdwg.mxu0
    %504 = vmatpush.msra.mxu0 %v455
    %505 = vmatpush.msra.mxu0 %v451
    %506 = vmatpush.msra.mxu0 %v447
    %507 = vmatpush.msra.mxu0 %v443
    %508 = vmatpush.msra.mxu0 %v439
    %509 = vmatpush.msra.mxu0 %v435
    %510 = vmatpush.msra.mxu0 %v431
    %511 = vmatpush.msra.mxu0 %v427
    %512 = vmatpush.msra.mxu0 %v423
    %513 = vmatpush.msra.mxu0 %v419
    %514 = vmatpush.msra.mxu0 %v415
    %515 = vmatpush.msra.mxu0 %v411
    %516 = vmatpush.msra.mxu0 %v407
    %517 = vmatpush.msra.mxu0 %v403
    %518 = vmatpush.msra.mxu0 %v399
    %519 = vmatpush.msra.mxu0 %v395
    %520 = vmatmul.f32.gmra.mxu0 0.0
    %v521 = vpop.f32.mrf.mxu0
    %v522 = vadd.f32 0.0, %v521
    %523 = vdwg.mxu0
    %524 = vmatpush.msra.mxu0 %v456
    %525 = vmatpush.msra.mxu0 %v452
    %526 = vmatpush.msra.mxu0 %v448
    %527 = vmatpush.msra.mxu0 %v444
    %528 = vmatpush.msra.mxu0 %v440
    %529 = vmatpush.msra.mxu0 %v436
    %530 = vmatpush.msra.mxu0 %v432
    %531 = vmatpush.msra.mxu0 %v428
    %532 = vmatpush.msra.mxu0 %v424
    %533 = vmatpush.msra.mxu0 %v420
    %534 = vmatpush.msra.mxu0 %v416
    %535 = vmatpush.msra.mxu0 %v412
    %536 = vmatpush.msra.mxu0 %v408
    %537 = vmatpush.msra.mxu0 %v404
    %538 = vmatpush.msra.mxu0 %v400
    %539 = vmatpush.msra.mxu0 %v396
    %540 = vmatmul.f32.gmra.mxu0 0.0
    %v541 = vpop.f32.mrf.mxu0
    %v542 = vadd.f32 0.0, %v541
    %543 = vdwg.mxu0
    %v544 = vadd.f32 %v460, %v482
    %v545 = vadd.f32 %v461, %v502
    %v546 = vadd.f32 %v462, %v522
    %v547 = vadd.f32 %v463, %v542
    %v548 = vxor.u32 %v544, 2147483648
    %v549 = vxor.u32 %v545, 2147483648
    %v550 = vxor.u32 %v546, 2147483648
    %v551 = vmul.f32 %v548, 1.442695
    %v552 = vpow.pop %v551
    %v553 = vmul.f32 %v549, 1.442695
    %v554 = vpow.pop %v553
    %v555 = vmul.f32 %v550, 1.442695
    %v556 = vpow.pop %v555
    %v557 = vadd.f32 %v552, 1.0
    %v558 = vadd.f32 %v554, 1.0
    %v559 = vadd.f32 %v556, 1.0
    %v560 = vrcp.pop %v557
    %v561 = vmul.f32 %v557, %v560
    %v562 = vsub.f32 1.0, %v561
    %v563 = vmul.f32 %v560, %v562
    %v564 = vadd.f32 %v560, %v563
    %vm565 = vweird.f32 %v557
    %vm566 = vweird.f32 %v560
    %vm567 = vmor %vm565, %vm566
    %v568 = vsel %vm567, %v560, %v564
    %v569 = vand.u32 2147483647, %v557
    %vm570 = vcmp.eq.f32.partialorder %v569, 8.507059e+37
    %v571 = vand.u32 %v557, 2147483648
    %v572 = vor.u32 1.1754944e-38, %v571
    %v573 = vsel %vm570, %v572, %v568
    %v574 = vmul.f32 1.0, %v573
    %v575 = vrcp.pop %v558
    %v576 = vmul.f32 %v558, %v575
    %v577 = vsub.f32 1.0, %v576
    %v578 = vmul.f32 %v575, %v577
    %v579 = vadd.f32 %v575, %v578
    %vm580 = vweird.f32 %v558
    %vm581 = vweird.f32 %v575
    %vm582 = vmor %vm580, %vm581
    %v583 = vsel %vm582, %v575, %v579
    %v584 = vand.u32 2147483647, %v558
    %vm585 = vcmp.eq.f32.partialorder %v584, 8.507059e+37
    %v586 = vand.u32 %v558, 2147483648
    %v587 = vor.u32 1.1754944e-38, %v586
    %v588 = vsel %vm585, %v587, %v583
    %v589 = vmul.f32 1.0, %v588
    %v590 = vrcp.pop %v559
    %v591 = vmul.f32 %v559, %v590
    %v592 = vsub.f32 1.0, %v591
    %v593 = vmul.f32 %v590, %v592
    %v594 = vadd.f32 %v590, %v593
    %vm595 = vweird.f32 %v559
    %vm596 = vweird.f32 %v590
    %vm597 = vmor %vm595, %vm596
    %v598 = vsel %vm597, %v590, %v594
    %v599 = vand.u32 2147483647, %v559
    %vm600 = vcmp.eq.f32.partialorder %v599, 8.507059e+37
    %v601 = vand.u32 %v559, 2147483648
    %v602 = vor.u32 1.1754944e-38, %v601
    %v603 = vsel %vm600, %v602, %v598
    %v604 = vmul.f32 1.0, %v603
    %v605 = vtanh.pop %v547
    %v606 = vmul.f32 %v589, 0.0
    %v607 = vmul.f32 %v574, %v605
    %v608 = vadd.f32 %v606, %v607
    %v609 = vtanh.pop %v608
    %v610 = vmul.f32 %v604, %v609
    %611 = vst [vmem:[#allocation3] sm:$0xff] %v610
    %s612 = smul.u32 1, 4
    %s613 = smul.addr %s612, 8
    %s614 = scalar_lea.vmem [#allocation2], %s613
    %v615 = vld [vmem:[%s614] sm:$0xff]
    %v616 = vld [vmem:[%s614 + $0x8] sm:$0xff]
    %v617 = vld [vmem:[%s614 + $0x10] sm:$0xff]
    %v618 = vld [vmem:[%s614 + $0x18] sm:$0xff]
    %619 = vmatpush.msra.mxu0 %v453
    %620 = vmatpush.msra.mxu0 %v449
    %621 = vmatpush.msra.mxu0 %v445
    %622 = vmatpush.msra.mxu0 %v441
    %623 = vmatpush.msra.mxu0 %v437
    %624 = vmatpush.msra.mxu0 %v433
    %625 = vmatpush.msra.mxu0 %v429
    %626 = vmatpush.msra.mxu0 %v425
    %627 = vmatpush.msra.mxu0 %v421
    %628 = vmatpush.msra.mxu0 %v417
    %629 = vmatpush.msra.mxu0 %v413
    %630 = vmatpush.msra.mxu0 %v409
    %631 = vmatpush.msra.mxu0 %v405
    %632 = vmatpush.msra.mxu0 %v401
    %633 = vmatpush.msra.mxu0 %v397
    %634 = vmatpush.msra.mxu0 %v393
    %635 = vmatmul.f32.gmra.mxu0 %v610
    %v636 = vpop.f32.mrf.mxu0
    %v637 = vadd.f32 0.0, %v636
    %638 = vdwg.mxu0
    %639 = vmatpush.msra.mxu0 %v454
    %640 = vmatpush.msra.mxu0 %v450
    %641 = vmatpush.msra.mxu0 %v446
    %642 = vmatpush.msra.mxu0 %v442
    %643 = vmatpush.msra.mxu0 %v438
    %644 = vmatpush.msra.mxu0 %v434
    %645 = vmatpush.msra.mxu0 %v430
    %646 = vmatpush.msra.mxu0 %v426
    %647 = vmatpush.msra.mxu0 %v422
    %648 = vmatpush.msra.mxu0 %v418
    %649 = vmatpush.msra.mxu0 %v414
    %650 = vmatpush.msra.mxu0 %v410
    %651 = vmatpush.msra.mxu0 %v406
    %652 = vmatpush.msra.mxu0 %v402
    %653 = vmatpush.msra.mxu0 %v398
    %654 = vmatpush.msra.mxu0 %v394
    %655 = vmatmul.f32.gmra.mxu0 %v610
    %v656 = vpop.f32.mrf.mxu0
    %v657 = vadd.f32 0.0, %v656
    %658 = vdwg.mxu0
    %659 = vmatpush.msra.mxu0 %v455
    %660 = vmatpush.msra.mxu0 %v451
    %661 = vmatpush.msra.mxu0 %v447
    %662 = vmatpush.msra.mxu0 %v443
    %663 = vmatpush.msra.mxu0 %v439
    %664 = vmatpush.msra.mxu0 %v435
    %665 = vmatpush.msra.mxu0 %v431
    %666 = vmatpush.msra.mxu0 %v427
    %667 = vmatpush.msra.mxu0 %v423
    %668 = vmatpush.msra.mxu0 %v419
    %669 = vmatpush.msra.mxu0 %v415
    %670 = vmatpush.msra.mxu0 %v411
    %671 = vmatpush.msra.mxu0 %v407
    %672 = vmatpush.msra.mxu0 %v403
    %673 = vmatpush.msra.mxu0 %v399
    %674 = vmatpush.msra.mxu0 %v395
    %675 = vmatmul.f32.gmra.mxu0 %v610
    %v676 = vpop.f32.mrf.mxu0
    %v677 = vadd.f32 0.0, %v676
    %678 = vdwg.mxu0
    %679 = vmatpush.msra.mxu0 %v456
    %680 = vmatpush.msra.mxu0 %v452
    %681 = vmatpush.msra.mxu0 %v448
    %682 = vmatpush.msra.mxu0 %v444
    %683 = vmatpush.msra.mxu0 %v440
    %684 = vmatpush.msra.mxu0 %v436
    %685 = vmatpush.msra.mxu0 %v432
    %686 = vmatpush.msra.mxu0 %v428
    %687 = vmatpush.msra.mxu0 %v424
    %688 = vmatpush.msra.mxu0 %v420
    %689 = vmatpush.msra.mxu0 %v416
    %690 = vmatpush.msra.mxu0 %v412
    %691 = vmatpush.msra.mxu0 %v408
    %692 = vmatpush.msra.mxu0 %v404
    %693 = vmatpush.msra.mxu0 %v400
    %694 = vmatpush.msra.mxu0 %v396
    %695 = vmatmul.f32.gmra.mxu0 %v610
    %v696 = vpop.f32.mrf.mxu0
    %v697 = vadd.f32 0.0, %v696
    %698 = vdwg.mxu0
    %v699 = vadd.f32 %v615, %v637
    %v700 = vadd.f32 %v616, %v657
    %v701 = vadd.f32 %v617, %v677
    %v702 = vadd.f32 %v618, %v697
    %v703 = vxor.u32 %v699, 2147483648
    %v704 = vxor.u32 %v700, 2147483648
    %v705 = vxor.u32 %v701, 2147483648
    %v706 = vmul.f32 %v703, 1.442695
    %v707 = vpow.pop %v706
    %v708 = vmul.f32 %v704, 1.442695
    %v709 = vpow.pop %v708
    %v710 = vmul.f32 %v705, 1.442695
    %v711 = vpow.pop %v710
    %v712 = vadd.f32 %v707, 1.0
    %v713 = vadd.f32 %v709, 1.0
    %v714 = vadd.f32 %v711, 1.0
    %v715 = vrcp.pop %v712
    %v716 = vmul.f32 %v712, %v715
    %v717 = vsub.f32 1.0, %v716
    %v718 = vmul.f32 %v715, %v717
    %v719 = vadd.f32 %v715, %v718
    %vm720 = vweird.f32 %v712
    %vm721 = vweird.f32 %v715
    %vm722 = vmor %vm720, %vm721
    %v723 = vsel %vm722, %v715, %v719
    %v724 = vand.u32 2147483647, %v712
    %vm725 = vcmp.eq.f32.partialorder %v724, 8.507059e+37
    %v726 = vand.u32 %v712, 2147483648
    %v727 = vor.u32 1.1754944e-38, %v726
    %v728 = vsel %vm725, %v727, %v723
    %v729 = vmul.f32 1.0, %v728
    %v730 = vrcp.pop %v713
    %v731 = vmul.f32 %v713, %v730
    %v732 = vsub.f32 1.0, %v731
    %v733 = vmul.f32 %v730, %v732
    %v734 = vadd.f32 %v730, %v733
    %vm735 = vweird.f32 %v713
    %vm736 = vweird.f32 %v730
    %vm737 = vmor %vm735, %vm736
    %v738 = vsel %vm737, %v730, %v734
    %v739 = vand.u32 2147483647, %v713
    %vm740 = vcmp.eq.f32.partialorder %v739, 8.507059e+37
    %v741 = vand.u32 %v713, 2147483648
    %v742 = vor.u32 1.1754944e-38, %v741
    %v743 = vsel %vm740, %v742, %v738
    %v744 = vmul.f32 1.0, %v743
    %v745 = vrcp.pop %v714
    %v746 = vmul.f32 %v714, %v745
    %v747 = vsub.f32 1.0, %v746
    %v748 = vmul.f32 %v745, %v747
    %v749 = vadd.f32 %v745, %v748
    %vm750 = vweird.f32 %v714
    %vm751 = vweird.f32 %v745
    %vm752 = vmor %vm750, %vm751
    %v753 = vsel %vm752, %v745, %v749
    %v754 = vand.u32 2147483647, %v714
    %vm755 = vcmp.eq.f32.partialorder %v754, 8.507059e+37
    %v756 = vand.u32 %v714, 2147483648
    %v757 = vor.u32 1.1754944e-38, %v756
    %v758 = vsel %vm755, %v757, %v753
    %v759 = vmul.f32 1.0, %v758
    %v760 = vtanh.pop %v702
    %v761 = vmul.f32 %v744, %v608
    %v762 = vmul.f32 %v729, %v760
    %v763 = vadd.f32 %v761, %v762
    %v764 = vtanh.pop %v763
    %v765 = vmul.f32 %v759, %v764
    %s766 = scalar_lea.vmem [#allocation3], 8
    %767 = vst [vmem:[%s766] sm:$0xff] %v765
    %s768 = smul.u32 2, 4
    %s769 = smul.addr %s768, 8
    %s770 = scalar_lea.vmem [#allocation2], %s769
    %v771 = vld [vmem:[%s770] sm:$0xff]
    %v772 = vld [vmem:[%s770 + $0x8] sm:$0xff]
    %v773 = vld [vmem:[%s770 + $0x10] sm:$0xff]
    %v774 = vld [vmem:[%s770 + $0x18] sm:$0xff]
    %775 = vmatpush.msra.mxu0 %v453
    %776 = vmatpush.msra.mxu0 %v449
    %777 = vmatpush.msra.mxu0 %v445
    %778 = vmatpush.msra.mxu0 %v441
    %779 = vmatpush.msra.mxu0 %v437
    %780 = vmatpush.msra.mxu0 %v433
    %781 = vmatpush.msra.mxu0 %v429
    %782 = vmatpush.msra.mxu0 %v425
    %783 = vmatpush.msra.mxu0 %v421
    %784 = vmatpush.msra.mxu0 %v417
    %785 = vmatpush.msra.mxu0 %v413
    %786 = vmatpush.msra.mxu0 %v409
    %787 = vmatpush.msra.mxu0 %v405
    %788 = vmatpush.msra.mxu0 %v401
    %789 = vmatpush.msra.mxu0 %v397
    %790 = vmatpush.msra.mxu0 %v393
    %791 = vmatmul.f32.gmra.mxu0 %v765
    %v792 = vpop.f32.mrf.mxu0
    %v793 = vadd.f32 0.0, %v792
    %794 = vdwg.mxu0
    %795 = vmatpush.msra.mxu0 %v454
    %796 = vmatpush.msra.mxu0 %v450
    %797 = vmatpush.msra.mxu0 %v446
    %798 = vmatpush.msra.mxu0 %v442
    %799 = vmatpush.msra.mxu0 %v438
    %800 = vmatpush.msra.mxu0 %v434
    %801 = vmatpush.msra.mxu0 %v430
    %802 = vmatpush.msra.mxu0 %v426
    %803 = vmatpush.msra.mxu0 %v422
    %804 = vmatpush.msra.mxu0 %v418
    %805 = vmatpush.msra.mxu0 %v414
    %806 = vmatpush.msra.mxu0 %v410
    %807 = vmatpush.msra.mxu0 %v406
    %808 = vmatpush.msra.mxu0 %v402
    %809 = vmatpush.msra.mxu0 %v398
    %810 = vmatpush.msra.mxu0 %v394
    %811 = vmatmul.f32.gmra.mxu0 %v765
    %v812 = vpop.f32.mrf.mxu0
    %v813 = vadd.f32 0.0, %v812
    %814 = vdwg.mxu0
    %815 = vmatpush.msra.mxu0 %v455
    %816 = vmatpush.msra.mxu0 %v451
    %817 = vmatpush.msra.mxu0 %v447
    %818 = vmatpush.msra.mxu0 %v443
    %819 = vmatpush.msra.mxu0 %v439
    %820 = vmatpush.msra.mxu0 %v435
    %821 = vmatpush.msra.mxu0 %v431
    %822 = vmatpush.msra.mxu0 %v427
    %823 = vmatpush.msra.mxu0 %v423
    %824 = vmatpush.msra.mxu0 %v419
    %825 = vmatpush.msra.mxu0 %v415
    %826 = vmatpush.msra.mxu0 %v411
    %827 = vmatpush.msra.mxu0 %v407
    %828 = vmatpush.msra.mxu0 %v403
    %829 = vmatpush.msra.mxu0 %v399
    %830 = vmatpush.msra.mxu0 %v395
    %831 = vmatmul.f32.gmra.mxu0 %v765
    %v832 = vpop.f32.mrf.mxu0
    %v833 = vadd.f32 0.0, %v832
    %834 = vdwg.mxu0
    %835 = vmatpush.msra.mxu0 %v456
    %836 = vmatpush.msra.mxu0 %v452
    %837 = vmatpush.msra.mxu0 %v448
    %838 = vmatpush.msra.mxu0 %v444
    %839 = vmatpush.msra.mxu0 %v440
    %840 = vmatpush.msra.mxu0 %v436
    %841 = vmatpush.msra.mxu0 %v432
    %842 = vmatpush.msra.mxu0 %v428
    %843 = vmatpush.msra.mxu0 %v424
    %844 = vmatpush.msra.mxu0 %v420
    %845 = vmatpush.msra.mxu0 %v416
    %846 = vmatpush.msra.mxu0 %v412
    %847 = vmatpush.msra.mxu0 %v408
    %848 = vmatpush.msra.mxu0 %v404
    %849 = vmatpush.msra.mxu0 %v400
    %850 = vmatpush.msra.mxu0 %v396
    %851 = vmatmul.f32.gmra.mxu0 %v765
    %v852 = vpop.f32.mrf.mxu0
    %v853 = vadd.f32 0.0, %v852
    %854 = vdwg.mxu0
    %v855 = vadd.f32 %v771, %v793
    %v856 = vadd.f32 %v772, %v813
    %v857 = vadd.f32 %v773, %v833
    %v858 = vadd.f32 %v774, %v853
    %v859 = vxor.u32 %v855, 2147483648
    %v860 = vxor.u32 %v856, 2147483648
    %v861 = vxor.u32 %v857, 2147483648
    %v862 = vmul.f32 %v859, 1.442695
    %v863 = vpow.pop %v862
    %v864 = vmul.f32 %v860, 1.442695
    %v865 = vpow.pop %v864
    %v866 = vmul.f32 %v861, 1.442695
    %v867 = vpow.pop %v866
    %v868 = vadd.f32 %v863, 1.0
    %v869 = vadd.f32 %v865, 1.0
    %v870 = vadd.f32 %v867, 1.0
    %v871 = vrcp.pop %v868
    %v872 = vmul.f32 %v868, %v871
    %v873 = vsub.f32 1.0, %v872
    %v874 = vmul.f32 %v871, %v873
    %v875 = vadd.f32 %v871, %v874
    %vm876 = vweird.f32 %v868
    %vm877 = vweird.f32 %v871
    %vm878 = vmor %vm876, %vm877
    %v879 = vsel %vm878, %v871, %v875
    %v880 = vand.u32 2147483647, %v868
    %vm881 = vcmp.eq.f32.partialorder %v880, 8.507059e+37
    %v882 = vand.u32 %v868, 2147483648
    %v883 = vor.u32 1.1754944e-38, %v882
    %v884 = vsel %vm881, %v883, %v879
    %v885 = vmul.f32 1.0, %v884
    %v886 = vrcp.pop %v869
    %v887 = vmul.f32 %v869, %v886
    %v888 = vsub.f32 1.0, %v887
    %v889 = vmul.f32 %v886, %v888
    %v890 = vadd.f32 %v886, %v889
    %vm891 = vweird.f32 %v869
    %vm892 = vweird.f32 %v886
    %vm893 = vmor %vm891, %vm892
    %v894 = vsel %vm893, %v886, %v890
    %v895 = vand.u32 2147483647, %v869
    %vm896 = vcmp.eq.f32.partialorder %v895, 8.507059e+37
    %v897 = vand.u32 %v869, 2147483648
    %v898 = vor.u32 1.1754944e-38, %v897
    %v899 = vsel %vm896, %v898, %v894
    %v900 = vmul.f32 1.0, %v899
    %v901 = vrcp.pop %v870
    %v902 = vmul.f32 %v870, %v901
    %v903 = vsub.f32 1.0, %v902
    %v904 = vmul.f32 %v901, %v903
    %v905 = vadd.f32 %v901, %v904
    %vm906 = vweird.f32 %v870
    %vm907 = vweird.f32 %v901
    %vm908 = vmor %vm906, %vm907
    %v909 = vsel %vm908, %v901, %v905
    %v910 = vand.u32 2147483647, %v870
    %vm911 = vcmp.eq.f32.partialorder %v910, 8.507059e+37
    %v912 = vand.u32 %v870, 2147483648
    %v913 = vor.u32 1.1754944e-38, %v912
    %v914 = vsel %vm911, %v913, %v909
    %v915 = vmul.f32 1.0, %v914
    %v916 = vtanh.pop %v858
    %v917 = vmul.f32 %v900, %v763
    %v918 = vmul.f32 %v885, %v916
    %v919 = vadd.f32 %v917, %v918
    %v920 = vtanh.pop %v919
    %v921 = vmul.f32 %v915, %v920
    %s922 = scalar_lea.vmem [#allocation3], 16
    %923 = vst [vmem:[%s922] sm:$0xff] %v921
    %s924 = smul.u32 3, 4
    %s925 = smul.addr %s924, 8
    %s926 = scalar_lea.vmem [#allocation2], %s925
    %v927 = vld [vmem:[%s926] sm:$0xff]
    %v928 = vld [vmem:[%s926 + $0x8] sm:$0xff]
    %v929 = vld [vmem:[%s926 + $0x10] sm:$0xff]
    %v930 = vld [vmem:[%s926 + $0x18] sm:$0xff]
    %931 = vmatpush.msra.mxu0 %v453
    %932 = vmatpush.msra.mxu0 %v449
    %933 = vmatpush.msra.mxu0 %v445
    %934 = vmatpush.msra.mxu0 %v441
    %935 = vmatpush.msra.mxu0 %v437
    %936 = vmatpush.msra.mxu0 %v433
    %937 = vmatpush.msra.mxu0 %v429
    %938 = vmatpush.msra.mxu0 %v425
    %939 = vmatpush.msra.mxu0 %v421
    %940 = vmatpush.msra.mxu0 %v417
    %941 = vmatpush.msra.mxu0 %v413
    %942 = vmatpush.msra.mxu0 %v409
    %943 = vmatpush.msra.mxu0 %v405
    %944 = vmatpush.msra.mxu0 %v401
    %945 = vmatpush.msra.mxu0 %v397
    %946 = vmatpush.msra.mxu0 %v393
    %947 = vmatmul.f32.gmra.mxu0 %v921
    %v948 = vpop.f32.mrf.mxu0
    %v949 = vadd.f32 0.0, %v948
    %950 = vdwg.mxu0
    %951 = vmatpush.msra.mxu0 %v454
    %952 = vmatpush.msra.mxu0 %v450
    %953 = vmatpush.msra.mxu0 %v446
    %954 = vmatpush.msra.mxu0 %v442
    %955 = vmatpush.msra.mxu0 %v438
    %956 = vmatpush.msra.mxu0 %v434
    %957 = vmatpush.msra.mxu0 %v430
    %958 = vmatpush.msra.mxu0 %v426
    %959 = vmatpush.msra.mxu0 %v422
    %960 = vmatpush.msra.mxu0 %v418
    %961 = vmatpush.msra.mxu0 %v414
    %962 = vmatpush.msra.mxu0 %v410
    %963 = vmatpush.msra.mxu0 %v406
    %964 = vmatpush.msra.mxu0 %v402
    %965 = vmatpush.msra.mxu0 %v398
    %966 = vmatpush.msra.mxu0 %v394
    %967 = vmatmul.f32.gmra.mxu0 %v921
    %v968 = vpop.f32.mrf.mxu0
    %v969 = vadd.f32 0.0, %v968
    %970 = vdwg.mxu0
    %971 = vmatpush.msra.mxu0 %v455
    %972 = vmatpush.msra.mxu0 %v451
    %973 = vmatpush.msra.mxu0 %v447
    %974 = vmatpush.msra.mxu0 %v443
    %975 = vmatpush.msra.mxu0 %v439
    %976 = vmatpush.msra.mxu0 %v435
    %977 = vmatpush.msra.mxu0 %v431
    %978 = vmatpush.msra.mxu0 %v427
    %979 = vmatpush.msra.mxu0 %v423
    %980 = vmatpush.msra.mxu0 %v419
    %981 = vmatpush.msra.mxu0 %v415
    %982 = vmatpush.msra.mxu0 %v411
    %983 = vmatpush.msra.mxu0 %v407
    %984 = vmatpush.msra.mxu0 %v403
    %985 = vmatpush.msra.mxu0 %v399
    %986 = vmatpush.msra.mxu0 %v395
    %987 = vmatmul.f32.gmra.mxu0 %v921
    %v988 = vpop.f32.mrf.mxu0
    %v989 = vadd.f32 0.0, %v988
    %990 = vdwg.mxu0
    %991 = vmatpush.msra.mxu0 %v456
    %992 = vmatpush.msra.mxu0 %v452
    %993 = vmatpush.msra.mxu0 %v448
    %994 = vmatpush.msra.mxu0 %v444
    %995 = vmatpush.msra.mxu0 %v440
    %996 = vmatpush.msra.mxu0 %v436
    %997 = vmatpush.msra.mxu0 %v432
    %998 = vmatpush.msra.mxu0 %v428
    %999 = vmatpush.msra.mxu0 %v424
    %1000 = vmatpush.msra.mxu0 %v420
    %1001 = vmatpush.msra.mxu0 %v416
    %1002 = vmatpush.msra.mxu0 %v412
    %1003 = vmatpush.msra.mxu0 %v408
    %1004 = vmatpush.msra.mxu0 %v404
    %1005 = vmatpush.msra.mxu0 %v400
    %1006 = vmatpush.msra.mxu0 %v396
    %1007 = vmatmul.f32.gmra.mxu0 %v921
    %v1008 = vpop.f32.mrf.mxu0
    %v1009 = vadd.f32 0.0, %v1008
    %1010 = vdwg.mxu0
    %v1011 = vadd.f32 %v927, %v949
    %v1012 = vadd.f32 %v928, %v969
    %v1013 = vadd.f32 %v929, %v989
    %v1014 = vadd.f32 %v930, %v1009
    %v1015 = vxor.u32 %v1011, 2147483648
    %v1016 = vxor.u32 %v1012, 2147483648
    %v1017 = vxor.u32 %v1013, 2147483648
    %v1018 = vmul.f32 %v1015, 1.442695
    %v1019 = vpow.pop %v1018
    %v1020 = vmul.f32 %v1016, 1.442695
    %v1021 = vpow.pop %v1020
    %v1022 = vmul.f32 %v1017, 1.442695
    %v1023 = vpow.pop %v1022
    %v1024 = vadd.f32 %v1019, 1.0
    %v1025 = vadd.f32 %v1021, 1.0
    %v1026 = vadd.f32 %v1023, 1.0
    %v1027 = vrcp.pop %v1024
    %v1028 = vmul.f32 %v1024, %v1027
    %v1029 = vsub.f32 1.0, %v1028
    %v1030 = vmul.f32 %v1027, %v1029
    %v1031 = vadd.f32 %v1027, %v1030
    %vm1032 = vweird.f32 %v1024
    %vm1033 = vweird.f32 %v1027
    %vm1034 = vmor %vm1032, %vm1033
    %v1035 = vsel %vm1034, %v1027, %v1031
    %v1036 = vand.u32 2147483647, %v1024
    %vm1037 = vcmp.eq.f32.partialorder %v1036, 8.507059e+37
    %v1038 = vand.u32 %v1024, 2147483648
    %v1039 = vor.u32 1.1754944e-38, %v1038
    %v1040 = vsel %vm1037, %v1039, %v1035
    %v1041 = vmul.f32 1.0, %v1040
    %v1042 = vrcp.pop %v1025
    %v1043 = vmul.f32 %v1025, %v1042
    %v1044 = vsub.f32 1.0, %v1043
    %v1045 = vmul.f32 %v1042, %v1044
    %v1046 = vadd.f32 %v1042, %v1045
    %vm1047 = vweird.f32 %v1025
    %vm1048 = vweird.f32 %v1042
    %vm1049 = vmor %vm1047, %vm1048
    %v1050 = vsel %vm1049, %v1042, %v1046
    %v1051 = vand.u32 2147483647, %v1025
    %vm1052 = vcmp.eq.f32.partialorder %v1051, 8.507059e+37
    %v1053 = vand.u32 %v1025, 2147483648
    %v1054 = vor.u32 1.1754944e-38, %v1053
    %v1055 = vsel %vm1052, %v1054, %v1050
    %v1056 = vmul.f32 1.0, %v1055
    %v1057 = vrcp.pop %v1026
    %v1058 = vmul.f32 %v1026, %v1057
    %v1059 = vsub.f32 1.0, %v1058
    %v1060 = vmul.f32 %v1057, %v1059
    %v1061 = vadd.f32 %v1057, %v1060
    %vm1062 = vweird.f32 %v1026
    %vm1063 = vweird.f32 %v1057
    %vm1064 = vmor %vm1062, %vm1063
    %v1065 = vsel %vm1064, %v1057, %v1061
    %v1066 = vand.u32 2147483647, %v1026
    %vm1067 = vcmp.eq.f32.partialorder %v1066, 8.507059e+37
    %v1068 = vand.u32 %v1026, 2147483648
    %v1069 = vor.u32 1.1754944e-38, %v1068
    %v1070 = vsel %vm1067, %v1069, %v1065
    %v1071 = vmul.f32 1.0, %v1070
    %v1072 = vtanh.pop %v1014
    %v1073 = vmul.f32 %v1056, %v919
    %v1074 = vmul.f32 %v1041, %v1072
    %v1075 = vadd.f32 %v1073, %v1074
    %v1076 = vtanh.pop %v1075
    %v1077 = vmul.f32 %v1071, %v1076
    %s1078 = scalar_lea.vmem [#allocation3], 24
    %1079 = vst [vmem:[%s1078] sm:$0xff] %v1077
    %s1080 = smul.u32 4, 4
    %s1081 = smul.addr %s1080, 8
    %s1082 = scalar_lea.vmem [#allocation2], %s1081
    %v1083 = vld [vmem:[%s1082] sm:$0xff]
    %v1084 = vld [vmem:[%s1082 + $0x8] sm:$0xff]
    %v1085 = vld [vmem:[%s1082 + $0x10] sm:$0xff]
    %v1086 = vld [vmem:[%s1082 + $0x18] sm:$0xff]
    %1087 = vmatpush.msra.mxu0 %v453
    %1088 = vmatpush.msra.mxu0 %v449
    %1089 = vmatpush.msra.mxu0 %v445
    %1090 = vmatpush.msra.mxu0 %v441
    %1091 = vmatpush.msra.mxu0 %v437
    %1092 = vmatpush.msra.mxu0 %v433
    %1093 = vmatpush.msra.mxu0 %v429
    %1094 = vmatpush.msra.mxu0 %v425
    %1095 = vmatpush.msra.mxu0 %v421
    %1096 = vmatpush.msra.mxu0 %v417
    %1097 = vmatpush.msra.mxu0 %v413
    %1098 = vmatpush.msra.mxu0 %v409
    %1099 = vmatpush.msra.mxu0 %v405
    %1100 = vmatpush.msra.mxu0 %v401
    %1101 = vmatpush.msra.mxu0 %v397
    %1102 = vmatpush.msra.mxu0 %v393
    %1103 = vmatmul.f32.gmra.mxu0 %v1077
    %v1104 = vpop.f32.mrf.mxu0
    %v1105 = vadd.f32 0.0, %v1104
    %1106 = vdwg.mxu0
    %1107 = vmatpush.msra.mxu0 %v454
    %1108 = vmatpush.msra.mxu0 %v450
    %1109 = vmatpush.msra.mxu0 %v446
    %1110 = vmatpush.msra.mxu0 %v442
    %1111 = vmatpush.msra.mxu0 %v438
    %1112 = vmatpush.msra.mxu0 %v434
    %1113 = vmatpush.msra.mxu0 %v430
    %1114 = vmatpush.msra.mxu0 %v426
    %1115 = vmatpush.msra.mxu0 %v422
    %1116 = vmatpush.msra.mxu0 %v418
    %1117 = vmatpush.msra.mxu0 %v414
    %1118 = vmatpush.msra.mxu0 %v410
    %1119 = vmatpush.msra.mxu0 %v406
    %1120 = vmatpush.msra.mxu0 %v402
    %1121 = vmatpush.msra.mxu0 %v398
    %1122 = vmatpush.msra.mxu0 %v394
    %1123 = vmatmul.f32.gmra.mxu0 %v1077
    %v1124 = vpop.f32.mrf.mxu0
    %v1125 = vadd.f32 0.0, %v1124
    %1126 = vdwg.mxu0
    %1127 = vmatpush.msra.mxu0 %v455
    %1128 = vmatpush.msra.mxu0 %v451
    %1129 = vmatpush.msra.mxu0 %v447
    %1130 = vmatpush.msra.mxu0 %v443
    %1131 = vmatpush.msra.mxu0 %v439
    %1132 = vmatpush.msra.mxu0 %v435
    %1133 = vmatpush.msra.mxu0 %v431
    %1134 = vmatpush.msra.mxu0 %v427
    %1135 = vmatpush.msra.mxu0 %v423
    %1136 = vmatpush.msra.mxu0 %v419
    %1137 = vmatpush.msra.mxu0 %v415
    %1138 = vmatpush.msra.mxu0 %v411
    %1139 = vmatpush.msra.mxu0 %v407
    %1140 = vmatpush.msra.mxu0 %v403
    %1141 = vmatpush.msra.mxu0 %v399
    %1142 = vmatpush.msra.mxu0 %v395
    %1143 = vmatmul.f32.gmra.mxu0 %v1077
    %v1144 = vpop.f32.mrf.mxu0
    %v1145 = vadd.f32 0.0, %v1144
    %1146 = vdwg.mxu0
    %1147 = vmatpush.msra.mxu0 %v456
    %1148 = vmatpush.msra.mxu0 %v452
    %1149 = vmatpush.msra.mxu0 %v448
    %1150 = vmatpush.msra.mxu0 %v444
    %1151 = vmatpush.msra.mxu0 %v440
    %1152 = vmatpush.msra.mxu0 %v436
    %1153 = vmatpush.msra.mxu0 %v432
    %1154 = vmatpush.msra.mxu0 %v428
    %1155 = vmatpush.msra.mxu0 %v424
    %1156 = vmatpush.msra.mxu0 %v420
    %1157 = vmatpush.msra.mxu0 %v416
    %1158 = vmatpush.msra.mxu0 %v412
    %1159 = vmatpush.msra.mxu0 %v408
    %1160 = vmatpush.msra.mxu0 %v404
    %1161 = vmatpush.msra.mxu0 %v400
    %1162 = vmatpush.msra.mxu0 %v396
    %1163 = vmatmul.f32.gmra.mxu0 %v1077
    %v1164 = vpop.f32.mrf.mxu0
    %v1165 = vadd.f32 0.0, %v1164
    %1166 = vdwg.mxu0
    %v1167 = vadd.f32 %v1083, %v1105
    %v1168 = vadd.f32 %v1084, %v1125
    %v1169 = vadd.f32 %v1085, %v1145
    %v1170 = vadd.f32 %v1086, %v1165
    %v1171 = vxor.u32 %v1167, 2147483648
    %v1172 = vxor.u32 %v1168, 2147483648
    %v1173 = vxor.u32 %v1169, 2147483648
    %v1174 = vmul.f32 %v1171, 1.442695
    %v1175 = vpow.pop %v1174
    %v1176 = vmul.f32 %v1172, 1.442695
    %v1177 = vpow.pop %v1176
    %v1178 = vmul.f32 %v1173, 1.442695
    %v1179 = vpow.pop %v1178
    %v1180 = vadd.f32 %v1175, 1.0
    %v1181 = vadd.f32 %v1177, 1.0
    %v1182 = vadd.f32 %v1179, 1.0
    %v1183 = vrcp.pop %v1180
    %v1184 = vmul.f32 %v1180, %v1183
    %v1185 = vsub.f32 1.0, %v1184
    %v1186 = vmul.f32 %v1183, %v1185
    %v1187 = vadd.f32 %v1183, %v1186
    %vm1188 = vweird.f32 %v1180
    %vm1189 = vweird.f32 %v1183
    %vm1190 = vmor %vm1188, %vm1189
    %v1191 = vsel %vm1190, %v1183, %v1187
    %v1192 = vand.u32 2147483647, %v1180
    %vm1193 = vcmp.eq.f32.partialorder %v1192, 8.507059e+37
    %v1194 = vand.u32 %v1180, 2147483648
    %v1195 = vor.u32 1.1754944e-38, %v1194
    %v1196 = vsel %vm1193, %v1195, %v1191
    %v1197 = vmul.f32 1.0, %v1196
    %v1198 = vrcp.pop %v1181
    %v1199 = vmul.f32 %v1181, %v1198
    %v1200 = vsub.f32 1.0, %v1199
    %v1201 = vmul.f32 %v1198, %v1200
    %v1202 = vadd.f32 %v1198, %v1201
    %vm1203 = vweird.f32 %v1181
    %vm1204 = vweird.f32 %v1198
    %vm1205 = vmor %vm1203, %vm1204
    %v1206 = vsel %vm1205, %v1198, %v1202
    %v1207 = vand.u32 2147483647, %v1181
    %vm1208 = vcmp.eq.f32.partialorder %v1207, 8.507059e+37
    %v1209 = vand.u32 %v1181, 2147483648
    %v1210 = vor.u32 1.1754944e-38, %v1209
    %v1211 = vsel %vm1208, %v1210, %v1206
    %v1212 = vmul.f32 1.0, %v1211
    %v1213 = vrcp.pop %v1182
    %v1214 = vmul.f32 %v1182, %v1213
    %v1215 = vsub.f32 1.0, %v1214
    %v1216 = vmul.f32 %v1213, %v1215
    %v1217 = vadd.f32 %v1213, %v1216
    %vm1218 = vweird.f32 %v1182
    %vm1219 = vweird.f32 %v1213
    %vm1220 = vmor %vm1218, %vm1219
    %v1221 = vsel %vm1220, %v1213, %v1217
    %v1222 = vand.u32 2147483647, %v1182
    %vm1223 = vcmp.eq.f32.partialorder %v1222, 8.507059e+37
    %v1224 = vand.u32 %v1182, 2147483648
    %v1225 = vor.u32 1.1754944e-38, %v1224
    %v1226 = vsel %vm1223, %v1225, %v1221
    %v1227 = vmul.f32 1.0, %v1226
    %v1228 = vtanh.pop %v1170
    %v1229 = vmul.f32 %v1212, %v1075
    %v1230 = vmul.f32 %v1197, %v1228
    %v1231 = vadd.f32 %v1229, %v1230
    %v1232 = vtanh.pop %v1231
    %v1233 = vmul.f32 %v1227, %v1232
    %s1234 = scalar_lea.vmem [#allocation3], 32
    %1235 = vst [vmem:[%s1234] sm:$0xff] %v1233
    %s1236 = smul.u32 5, 4
    %s1237 = smul.addr %s1236, 8
    %s1238 = scalar_lea.vmem [#allocation2], %s1237
    %v1239 = vld [vmem:[%s1238] sm:$0xff]
    %v1240 = vld [vmem:[%s1238 + $0x8] sm:$0xff]
    %v1241 = vld [vmem:[%s1238 + $0x10] sm:$0xff]
    %v1242 = vld [vmem:[%s1238 + $0x18] sm:$0xff]
    %1243 = vmatpush.msra.mxu0 %v453
    %1244 = vmatpush.msra.mxu0 %v449
    %1245 = vmatpush.msra.mxu0 %v445
    %1246 = vmatpush.msra.mxu0 %v441
    %1247 = vmatpush.msra.mxu0 %v437
    %1248 = vmatpush.msra.mxu0 %v433
    %1249 = vmatpush.msra.mxu0 %v429
    %1250 = vmatpush.msra.mxu0 %v425
    %1251 = vmatpush.msra.mxu0 %v421
    %1252 = vmatpush.msra.mxu0 %v417
    %1253 = vmatpush.msra.mxu0 %v413
    %1254 = vmatpush.msra.mxu0 %v409
    %1255 = vmatpush.msra.mxu0 %v405
    %1256 = vmatpush.msra.mxu0 %v401
    %1257 = vmatpush.msra.mxu0 %v397
    %1258 = vmatpush.msra.mxu0 %v393
    %1259 = vmatmul.f32.gmra.mxu0 %v1233
    %v1260 = vpop.f32.mrf.mxu0
    %v1261 = vadd.f32 0.0, %v1260
    %1262 = vdwg.mxu0
    %1263 = vmatpush.msra.mxu0 %v454
    %1264 = vmatpush.msra.mxu0 %v450
    %1265 = vmatpush.msra.mxu0 %v446
    %1266 = vmatpush.msra.mxu0 %v442
    %1267 = vmatpush.msra.mxu0 %v438
    %1268 = vmatpush.msra.mxu0 %v434
    %1269 = vmatpush.msra.mxu0 %v430
    %1270 = vmatpush.msra.mxu0 %v426
    %1271 = vmatpush.msra.mxu0 %v422
    %1272 = vmatpush.msra.mxu0 %v418
    %1273 = vmatpush.msra.mxu0 %v414
    %1274 = vmatpush.msra.mxu0 %v410
    %1275 = vmatpush.msra.mxu0 %v406
    %1276 = vmatpush.msra.mxu0 %v402
    %1277 = vmatpush.msra.mxu0 %v398
    %1278 = vmatpush.msra.mxu0 %v394
    %1279 = vmatmul.f32.gmra.mxu0 %v1233
    %v1280 = vpop.f32.mrf.mxu0
    %v1281 = vadd.f32 0.0, %v1280
    %1282 = vdwg.mxu0
    %1283 = vmatpush.msra.mxu0 %v455
    %1284 = vmatpush.msra.mxu0 %v451
    %1285 = vmatpush.msra.mxu0 %v447
    %1286 = vmatpush.msra.mxu0 %v443
    %1287 = vmatpush.msra.mxu0 %v439
    %1288 = vmatpush.msra.mxu0 %v435
    %1289 = vmatpush.msra.mxu0 %v431
    %1290 = vmatpush.msra.mxu0 %v427
    %1291 = vmatpush.msra.mxu0 %v423
    %1292 = vmatpush.msra.mxu0 %v419
    %1293 = vmatpush.msra.mxu0 %v415
    %1294 = vmatpush.msra.mxu0 %v411
    %1295 = vmatpush.msra.mxu0 %v407
    %1296 = vmatpush.msra.mxu0 %v403
    %1297 = vmatpush.msra.mxu0 %v399
    %1298 = vmatpush.msra.mxu0 %v395
    %1299 = vmatmul.f32.gmra.mxu0 %v1233
    %v1300 = vpop.f32.mrf.mxu0
    %v1301 = vadd.f32 0.0, %v1300
    %1302 = vdwg.mxu0
    %1303 = vmatpush.msra.mxu0 %v456
    %1304 = vmatpush.msra.mxu0 %v452
    %1305 = vmatpush.msra.mxu0 %v448
    %1306 = vmatpush.msra.mxu0 %v444
    %1307 = vmatpush.msra.mxu0 %v440
    %1308 = vmatpush.msra.mxu0 %v436
    %1309 = vmatpush.msra.mxu0 %v432
    %1310 = vmatpush.msra.mxu0 %v428
    %1311 = vmatpush.msra.mxu0 %v424
    %1312 = vmatpush.msra.mxu0 %v420
    %1313 = vmatpush.msra.mxu0 %v416
    %1314 = vmatpush.msra.mxu0 %v412
    %1315 = vmatpush.msra.mxu0 %v408
    %1316 = vmatpush.msra.mxu0 %v404
    %1317 = vmatpush.msra.mxu0 %v400
    %1318 = vmatpush.msra.mxu0 %v396
    %1319 = vmatmul.f32.gmra.mxu0 %v1233
    %v1320 = vpop.f32.mrf.mxu0
    %v1321 = vadd.f32 0.0, %v1320
    %1322 = vdwg.mxu0
    %v1323 = vadd.f32 %v1239, %v1261
    %v1324 = vadd.f32 %v1240, %v1281
    %v1325 = vadd.f32 %v1241, %v1301
    %v1326 = vadd.f32 %v1242, %v1321
    %v1327 = vxor.u32 %v1323, 2147483648
    %v1328 = vxor.u32 %v1324, 2147483648
    %v1329 = vxor.u32 %v1325, 2147483648
    %v1330 = vmul.f32 %v1327, 1.442695
    %v1331 = vpow.pop %v1330
    %v1332 = vmul.f32 %v1328, 1.442695
    %v1333 = vpow.pop %v1332
    %v1334 = vmul.f32 %v1329, 1.442695
    %v1335 = vpow.pop %v1334
    %v1336 = vadd.f32 %v1331, 1.0
    %v1337 = vadd.f32 %v1333, 1.0
    %v1338 = vadd.f32 %v1335, 1.0
    %v1339 = vrcp.pop %v1336
    %v1340 = vmul.f32 %v1336, %v1339
    %v1341 = vsub.f32 1.0, %v1340
    %v1342 = vmul.f32 %v1339, %v1341
    %v1343 = vadd.f32 %v1339, %v1342
    %vm1344 = vweird.f32 %v1336
    %vm1345 = vweird.f32 %v1339
    %vm1346 = vmor %vm1344, %vm1345
    %v1347 = vsel %vm1346, %v1339, %v1343
    %v1348 = vand.u32 2147483647, %v1336
    %vm1349 = vcmp.eq.f32.partialorder %v1348, 8.507059e+37
    %v1350 = vand.u32 %v1336, 2147483648
    %v1351 = vor.u32 1.1754944e-38, %v1350
    %v1352 = vsel %vm1349, %v1351, %v1347
    %v1353 = vmul.f32 1.0, %v1352
    %v1354 = vrcp.pop %v1337
    %v1355 = vmul.f32 %v1337, %v1354
    %v1356 = vsub.f32 1.0, %v1355
    %v1357 = vmul.f32 %v1354, %v1356
    %v1358 = vadd.f32 %v1354, %v1357
    %vm1359 = vweird.f32 %v1337
    %vm1360 = vweird.f32 %v1354
    %vm1361 = vmor %vm1359, %vm1360
    %v1362 = vsel %vm1361, %v1354, %v1358
    %v1363 = vand.u32 2147483647, %v1337
    %vm1364 = vcmp.eq.f32.partialorder %v1363, 8.507059e+37
    %v1365 = vand.u32 %v1337, 2147483648
    %v1366 = vor.u32 1.1754944e-38, %v1365
    %v1367 = vsel %vm1364, %v1366, %v1362
    %v1368 = vmul.f32 1.0, %v1367
    %v1369 = vrcp.pop %v1338
    %v1370 = vmul.f32 %v1338, %v1369
    %v1371 = vsub.f32 1.0, %v1370
    %v1372 = vmul.f32 %v1369, %v1371
    %v1373 = vadd.f32 %v1369, %v1372
    %vm1374 = vweird.f32 %v1338
    %vm1375 = vweird.f32 %v1369
    %vm1376 = vmor %vm1374, %vm1375
    %v1377 = vsel %vm1376, %v1369, %v1373
    %v1378 = vand.u32 2147483647, %v1338
    %vm1379 = vcmp.eq.f32.partialorder %v1378, 8.507059e+37
    %v1380 = vand.u32 %v1338, 2147483648
    %v1381 = vor.u32 1.1754944e-38, %v1380
    %v1382 = vsel %vm1379, %v1381, %v1377
    %v1383 = vmul.f32 1.0, %v1382
    %v1384 = vtanh.pop %v1326
    %v1385 = vmul.f32 %v1368, %v1231
    %v1386 = vmul.f32 %v1353, %v1384
    %v1387 = vadd.f32 %v1385, %v1386
    %v1388 = vtanh.pop %v1387
    %v1389 = vmul.f32 %v1383, %v1388
    %s1390 = scalar_lea.vmem [#allocation3], 40
    %1391 = vst [vmem:[%s1390] sm:$0xff] %v1389
    %s1392 = smul.u32 6, 4
    %s1393 = smul.addr %s1392, 8
    %s1394 = scalar_lea.vmem [#allocation2], %s1393
    %v1395 = vld [vmem:[%s1394] sm:$0xff]
    %v1396 = vld [vmem:[%s1394 + $0x8] sm:$0xff]
    %v1397 = vld [vmem:[%s1394 + $0x10] sm:$0xff]
    %v1398 = vld [vmem:[%s1394 + $0x18] sm:$0xff]
    %1399 = vmatpush.msra.mxu0 %v453
    %1400 = vmatpush.msra.mxu0 %v449
    %1401 = vmatpush.msra.mxu0 %v445
    %1402 = vmatpush.msra.mxu0 %v441
    %1403 = vmatpush.msra.mxu0 %v437
    %1404 = vmatpush.msra.mxu0 %v433
    %1405 = vmatpush.msra.mxu0 %v429
    %1406 = vmatpush.msra.mxu0 %v425
    %1407 = vmatpush.msra.mxu0 %v421
    %1408 = vmatpush.msra.mxu0 %v417
    %1409 = vmatpush.msra.mxu0 %v413
    %1410 = vmatpush.msra.mxu0 %v409
    %1411 = vmatpush.msra.mxu0 %v405
    %1412 = vmatpush.msra.mxu0 %v401
    %1413 = vmatpush.msra.mxu0 %v397
    %1414 = vmatpush.msra.mxu0 %v393
    %1415 = vmatmul.f32.gmra.mxu0 %v1389
    %v1416 = vpop.f32.mrf.mxu0
    %v1417 = vadd.f32 0.0, %v1416
    %1418 = vdwg.mxu0
    %1419 = vmatpush.msra.mxu0 %v454
    %1420 = vmatpush.msra.mxu0 %v450
    %1421 = vmatpush.msra.mxu0 %v446
    %1422 = vmatpush.msra.mxu0 %v442
    %1423 = vmatpush.msra.mxu0 %v438
    %1424 = vmatpush.msra.mxu0 %v434
    %1425 = vmatpush.msra.mxu0 %v430
    %1426 = vmatpush.msra.mxu0 %v426
    %1427 = vmatpush.msra.mxu0 %v422
    %1428 = vmatpush.msra.mxu0 %v418
    %1429 = vmatpush.msra.mxu0 %v414
    %1430 = vmatpush.msra.mxu0 %v410
    %1431 = vmatpush.msra.mxu0 %v406
    %1432 = vmatpush.msra.mxu0 %v402
    %1433 = vmatpush.msra.mxu0 %v398
    %1434 = vmatpush.msra.mxu0 %v394
    %1435 = vmatmul.f32.gmra.mxu0 %v1389
    %v1436 = vpop.f32.mrf.mxu0
    %v1437 = vadd.f32 0.0, %v1436
    %1438 = vdwg.mxu0
    %1439 = vmatpush.msra.mxu0 %v455
    %1440 = vmatpush.msra.mxu0 %v451
    %1441 = vmatpush.msra.mxu0 %v447
    %1442 = vmatpush.msra.mxu0 %v443
    %1443 = vmatpush.msra.mxu0 %v439
    %1444 = vmatpush.msra.mxu0 %v435
    %1445 = vmatpush.msra.mxu0 %v431
    %1446 = vmatpush.msra.mxu0 %v427
    %1447 = vmatpush.msra.mxu0 %v423
    %1448 = vmatpush.msra.mxu0 %v419
    %1449 = vmatpush.msra.mxu0 %v415
    %1450 = vmatpush.msra.mxu0 %v411
    %1451 = vmatpush.msra.mxu0 %v407
    %1452 = vmatpush.msra.mxu0 %v403
    %1453 = vmatpush.msra.mxu0 %v399
    %1454 = vmatpush.msra.mxu0 %v395
    %1455 = vmatmul.f32.gmra.mxu0 %v1389
    %v1456 = vpop.f32.mrf.mxu0
    %v1457 = vadd.f32 0.0, %v1456
    %1458 = vdwg.mxu0
    %1459 = vmatpush.msra.mxu0 %v456
    %1460 = vmatpush.msra.mxu0 %v452
    %1461 = vmatpush.msra.mxu0 %v448
    %1462 = vmatpush.msra.mxu0 %v444
    %1463 = vmatpush.msra.mxu0 %v440
    %1464 = vmatpush.msra.mxu0 %v436
    %1465 = vmatpush.msra.mxu0 %v432
    %1466 = vmatpush.msra.mxu0 %v428
    %1467 = vmatpush.msra.mxu0 %v424
    %1468 = vmatpush.msra.mxu0 %v420
    %1469 = vmatpush.msra.mxu0 %v416
    %1470 = vmatpush.msra.mxu0 %v412
    %1471 = vmatpush.msra.mxu0 %v408
    %1472 = vmatpush.msra.mxu0 %v404
    %1473 = vmatpush.msra.mxu0 %v400
    %1474 = vmatpush.msra.mxu0 %v396
    %1475 = vmatmul.f32.gmra.mxu0 %v1389
    %v1476 = vpop.f32.mrf.mxu0
    %v1477 = vadd.f32 0.0, %v1476
    %1478 = vdwg.mxu0
    %v1479 = vadd.f32 %v1395, %v1417
    %v1480 = vadd.f32 %v1396, %v1437
    %v1481 = vadd.f32 %v1397, %v1457
    %v1482 = vadd.f32 %v1398, %v1477
    %v1483 = vxor.u32 %v1479, 2147483648
    %v1484 = vxor.u32 %v1480, 2147483648
    %v1485 = vxor.u32 %v1481, 2147483648
    %v1486 = vmul.f32 %v1483, 1.442695
    %v1487 = vpow.pop %v1486
    %v1488 = vmul.f32 %v1484, 1.442695
    %v1489 = vpow.pop %v1488
    %v1490 = vmul.f32 %v1485, 1.442695
    %v1491 = vpow.pop %v1490
    %v1492 = vadd.f32 %v1487, 1.0
    %v1493 = vadd.f32 %v1489, 1.0
    %v1494 = vadd.f32 %v1491, 1.0
    %v1495 = vrcp.pop %v1492
    %v1496 = vmul.f32 %v1492, %v1495
    %v1497 = vsub.f32 1.0, %v1496
    %v1498 = vmul.f32 %v1495, %v1497
    %v1499 = vadd.f32 %v1495, %v1498
    %vm1500 = vweird.f32 %v1492
    %vm1501 = vweird.f32 %v1495
    %vm1502 = vmor %vm1500, %vm1501
    %v1503 = vsel %vm1502, %v1495, %v1499
    %v1504 = vand.u32 2147483647, %v1492
    %vm1505 = vcmp.eq.f32.partialorder %v1504, 8.507059e+37
    %v1506 = vand.u32 %v1492, 2147483648
    %v1507 = vor.u32 1.1754944e-38, %v1506
    %v1508 = vsel %vm1505, %v1507, %v1503
    %v1509 = vmul.f32 1.0, %v1508
    %v1510 = vrcp.pop %v1493
    %v1511 = vmul.f32 %v1493, %v1510
    %v1512 = vsub.f32 1.0, %v1511
    %v1513 = vmul.f32 %v1510, %v1512
    %v1514 = vadd.f32 %v1510, %v1513
    %vm1515 = vweird.f32 %v1493
    %vm1516 = vweird.f32 %v1510
    %vm1517 = vmor %vm1515, %vm1516
    %v1518 = vsel %vm1517, %v1510, %v1514
    %v1519 = vand.u32 2147483647, %v1493
    %vm1520 = vcmp.eq.f32.partialorder %v1519, 8.507059e+37
    %v1521 = vand.u32 %v1493, 2147483648
    %v1522 = vor.u32 1.1754944e-38, %v1521
    %v1523 = vsel %vm1520, %v1522, %v1518
    %v1524 = vmul.f32 1.0, %v1523
    %v1525 = vrcp.pop %v1494
    %v1526 = vmul.f32 %v1494, %v1525
    %v1527 = vsub.f32 1.0, %v1526
    %v1528 = vmul.f32 %v1525, %v1527
    %v1529 = vadd.f32 %v1525, %v1528
    %vm1530 = vweird.f32 %v1494
    %vm1531 = vweird.f32 %v1525
    %vm1532 = vmor %vm1530, %vm1531
    %v1533 = vsel %vm1532, %v1525, %v1529
    %v1534 = vand.u32 2147483647, %v1494
    %vm1535 = vcmp.eq.f32.partialorder %v1534, 8.507059e+37
    %v1536 = vand.u32 %v1494, 2147483648
    %v1537 = vor.u32 1.1754944e-38, %v1536
    %v1538 = vsel %vm1535, %v1537, %v1533
    %v1539 = vmul.f32 1.0, %v1538
    %v1540 = vtanh.pop %v1482
    %v1541 = vmul.f32 %v1524, %v1387
    %v1542 = vmul.f32 %v1509, %v1540
    %v1543 = vadd.f32 %v1541, %v1542
    %v1544 = vtanh.pop %v1543
    %v1545 = vmul.f32 %v1539, %v1544
    %s1546 = scalar_lea.vmem [#allocation3], 48
    %1547 = vst [vmem:[%s1546] sm:$0xff] %v1545
    %s1548 = smul.u32 7, 4
    %s1549 = smul.addr %s1548, 8
    %s1550 = scalar_lea.vmem [#allocation2], %s1549
    %v1551 = vld [vmem:[%s1550] sm:$0xff]
    %v1552 = vld [vmem:[%s1550 + $0x8] sm:$0xff]
    %v1553 = vld [vmem:[%s1550 + $0x10] sm:$0xff]
    %v1554 = vld [vmem:[%s1550 + $0x18] sm:$0xff]
    %1555 = vmatpush.msra.mxu0 %v453
    %1556 = vmatpush.msra.mxu0 %v449
    %1557 = vmatpush.msra.mxu0 %v445
    %1558 = vmatpush.msra.mxu0 %v441
    %1559 = vmatpush.msra.mxu0 %v437
    %1560 = vmatpush.msra.mxu0 %v433
    %1561 = vmatpush.msra.mxu0 %v429
    %1562 = vmatpush.msra.mxu0 %v425
    %1563 = vmatpush.msra.mxu0 %v421
    %1564 = vmatpush.msra.mxu0 %v417
    %1565 = vmatpush.msra.mxu0 %v413
    %1566 = vmatpush.msra.mxu0 %v409
    %1567 = vmatpush.msra.mxu0 %v405
    %1568 = vmatpush.msra.mxu0 %v401
    %1569 = vmatpush.msra.mxu0 %v397
    %1570 = vmatpush.msra.mxu0 %v393
    %1571 = vmatmul.f32.gmra.mxu0 %v1545
    %v1572 = vpop.f32.mrf.mxu0
    %v1573 = vadd.f32 0.0, %v1572
    %1574 = vdwg.mxu0
    %1575 = vmatpush.msra.mxu0 %v454
    %1576 = vmatpush.msra.mxu0 %v450
    %1577 = vmatpush.msra.mxu0 %v446
    %1578 = vmatpush.msra.mxu0 %v442
    %1579 = vmatpush.msra.mxu0 %v438
    %1580 = vmatpush.msra.mxu0 %v434
    %1581 = vmatpush.msra.mxu0 %v430
    %1582 = vmatpush.msra.mxu0 %v426
    %1583 = vmatpush.msra.mxu0 %v422
    %1584 = vmatpush.msra.mxu0 %v418
    %1585 = vmatpush.msra.mxu0 %v414
    %1586 = vmatpush.msra.mxu0 %v410
    %1587 = vmatpush.msra.mxu0 %v406
    %1588 = vmatpush.msra.mxu0 %v402
    %1589 = vmatpush.msra.mxu0 %v398
    %1590 = vmatpush.msra.mxu0 %v394
    %1591 = vmatmul.f32.gmra.mxu0 %v1545
    %v1592 = vpop.f32.mrf.mxu0
    %v1593 = vadd.f32 0.0, %v1592
    %1594 = vdwg.mxu0
    %1595 = vmatpush.msra.mxu0 %v455
    %1596 = vmatpush.msra.mxu0 %v451
    %1597 = vmatpush.msra.mxu0 %v447
    %1598 = vmatpush.msra.mxu0 %v443
    %1599 = vmatpush.msra.mxu0 %v439
    %1600 = vmatpush.msra.mxu0 %v435
    %1601 = vmatpush.msra.mxu0 %v431
    %1602 = vmatpush.msra.mxu0 %v427
    %1603 = vmatpush.msra.mxu0 %v423
    %1604 = vmatpush.msra.mxu0 %v419
    %1605 = vmatpush.msra.mxu0 %v415
    %1606 = vmatpush.msra.mxu0 %v411
    %1607 = vmatpush.msra.mxu0 %v407
    %1608 = vmatpush.msra.mxu0 %v403
    %1609 = vmatpush.msra.mxu0 %v399
    %1610 = vmatpush.msra.mxu0 %v395
    %1611 = vmatmul.f32.gmra.mxu0 %v1545
    %v1612 = vpop.f32.mrf.mxu0
    %v1613 = vadd.f32 0.0, %v1612
    %1614 = vdwg.mxu0
    %1615 = vmatpush.msra.mxu0 %v456
    %1616 = vmatpush.msra.mxu0 %v452
    %1617 = vmatpush.msra.mxu0 %v448
    %1618 = vmatpush.msra.mxu0 %v444
    %1619 = vmatpush.msra.mxu0 %v440
    %1620 = vmatpush.msra.mxu0 %v436
    %1621 = vmatpush.msra.mxu0 %v432
    %1622 = vmatpush.msra.mxu0 %v428
    %1623 = vmatpush.msra.mxu0 %v424
    %1624 = vmatpush.msra.mxu0 %v420
    %1625 = vmatpush.msra.mxu0 %v416
    %1626 = vmatpush.msra.mxu0 %v412
    %1627 = vmatpush.msra.mxu0 %v408
    %1628 = vmatpush.msra.mxu0 %v404
    %1629 = vmatpush.msra.mxu0 %v400
    %1630 = vmatpush.msra.mxu0 %v396
    %1631 = vmatmul.f32.gmra.mxu0 %v1545
    %v1632 = vpop.f32.mrf.mxu0
    %v1633 = vadd.f32 0.0, %v1632
    %1634 = vdwg.mxu0
    %v1635 = vadd.f32 %v1551, %v1573
    %v1636 = vadd.f32 %v1552, %v1593
    %v1637 = vadd.f32 %v1553, %v1613
    %v1638 = vadd.f32 %v1554, %v1633
    %v1639 = vxor.u32 %v1635, 2147483648
    %v1640 = vxor.u32 %v1636, 2147483648
    %v1641 = vxor.u32 %v1637, 2147483648
    %v1642 = vmul.f32 %v1639, 1.442695
    %v1643 = vpow.pop %v1642
    %v1644 = vmul.f32 %v1640, 1.442695
    %v1645 = vpow.pop %v1644
    %v1646 = vmul.f32 %v1641, 1.442695
    %v1647 = vpow.pop %v1646
    %v1648 = vadd.f32 %v1643, 1.0
    %v1649 = vadd.f32 %v1645, 1.0
    %v1650 = vadd.f32 %v1647, 1.0
    %v1651 = vrcp.pop %v1648
    %v1652 = vmul.f32 %v1648, %v1651
    %v1653 = vsub.f32 1.0, %v1652
    %v1654 = vmul.f32 %v1651, %v1653
    %v1655 = vadd.f32 %v1651, %v1654
    %vm1656 = vweird.f32 %v1648
    %vm1657 = vweird.f32 %v1651
    %vm1658 = vmor %vm1656, %vm1657
    %v1659 = vsel %vm1658, %v1651, %v1655
    %v1660 = vand.u32 2147483647, %v1648
    %vm1661 = vcmp.eq.f32.partialorder %v1660, 8.507059e+37
    %v1662 = vand.u32 %v1648, 2147483648
    %v1663 = vor.u32 1.1754944e-38, %v1662
    %v1664 = vsel %vm1661, %v1663, %v1659
    %v1665 = vmul.f32 1.0, %v1664
    %v1666 = vrcp.pop %v1649
    %v1667 = vmul.f32 %v1649, %v1666
    %v1668 = vsub.f32 1.0, %v1667
    %v1669 = vmul.f32 %v1666, %v1668
    %v1670 = vadd.f32 %v1666, %v1669
    %vm1671 = vweird.f32 %v1649
    %vm1672 = vweird.f32 %v1666
    %vm1673 = vmor %vm1671, %vm1672
    %v1674 = vsel %vm1673, %v1666, %v1670
    %v1675 = vand.u32 2147483647, %v1649
    %vm1676 = vcmp.eq.f32.partialorder %v1675, 8.507059e+37
    %v1677 = vand.u32 %v1649, 2147483648
    %v1678 = vor.u32 1.1754944e-38, %v1677
    %v1679 = vsel %vm1676, %v1678, %v1674
    %v1680 = vmul.f32 1.0, %v1679
    %v1681 = vrcp.pop %v1650
    %v1682 = vmul.f32 %v1650, %v1681
    %v1683 = vsub.f32 1.0, %v1682
    %v1684 = vmul.f32 %v1681, %v1683
    %v1685 = vadd.f32 %v1681, %v1684
    %vm1686 = vweird.f32 %v1650
    %vm1687 = vweird.f32 %v1681
    %vm1688 = vmor %vm1686, %vm1687
    %v1689 = vsel %vm1688, %v1681, %v1685
    %v1690 = vand.u32 2147483647, %v1650
    %vm1691 = vcmp.eq.f32.partialorder %v1690, 8.507059e+37
    %v1692 = vand.u32 %v1650, 2147483648
    %v1693 = vor.u32 1.1754944e-38, %v1692
    %v1694 = vsel %vm1691, %v1693, %v1689
    %v1695 = vmul.f32 1.0, %v1694
    %v1696 = vtanh.pop %v1638
    %v1697 = vmul.f32 %v1680, %v1543
    %v1698 = vmul.f32 %v1665, %v1696
    %v1699 = vadd.f32 %v1697, %v1698
    %v1700 = vtanh.pop %v1699
    %v1701 = vmul.f32 %v1695, %v1700
    %s1702 = scalar_lea.vmem [#allocation3], 56
    %1703 = vst [vmem:[%s1702] sm:$0xff] %v1701
    %v1704 = vld [vmem:[#allocation3] sm:$0xff]
    %v1705 = vld [vmem:[#allocation3 + $0x8] sm:$0xff]
    %v1706 = vld [vmem:[#allocation3 + $0x10] sm:$0xff]
    %v1707 = vld [vmem:[#allocation3 + $0x18] sm:$0xff]
    %v1708 = vld [vmem:[#allocation3 + $0x20] sm:$0xff]
    %v1709 = vld [vmem:[#allocation3 + $0x28] sm:$0xff]
    %v1710 = vld [vmem:[#allocation3 + $0x30] sm:$0xff]
    %v1711 = vld [vmem:[#allocation3 + $0x38] sm:$0xff]
    %v1712 = vld [vmem:[#allocation7] sm:$0xff]
    %v1713 = vld [vmem:[#allocation7 + $0x8] sm:$0xff]
    %v1714 = vld [vmem:[#allocation7 + $0x10] sm:$0xff]
    %v1715 = vld [vmem:[#allocation7 + $0x18] sm:$0xff]
    %v1716 = vld [vmem:[#allocation7 + $0x20] sm:$0xff]
    %v1717 = vld [vmem:[#allocation7 + $0x28] sm:$0xff]
    %v1718 = vld [vmem:[#allocation7 + $0x30] sm:$0xff]
    %v1719 = vld [vmem:[#allocation7 + $0x38] sm:$0xff]
    %v1720 = vld [vmem:[#allocation7 + $0x40] sm:$0xff]
    %v1721 = vld [vmem:[#allocation7 + $0x48] sm:$0xff]
    %v1722 = vld [vmem:[#allocation7 + $0x50] sm:$0xff]
    %v1723 = vld [vmem:[#allocation7 + $0x58] sm:$0xff]
    %v1724 = vld [vmem:[#allocation7 + $0x60] sm:$0xff]
    %v1725 = vld [vmem:[#allocation7 + $0x68] sm:$0xff]
    %v1726 = vld [vmem:[#allocation7 + $0x70] sm:$0xff]
    %v1727 = vld [vmem:[#allocation7 + $0x78] sm:$0xff]
    %v1728 = vld [vmem:[#allocation7 + $0x80] sm:$0xff]
    %v1729 = vld [vmem:[#allocation7 + $0x88] sm:$0xff]
    %v1730 = vld [vmem:[#allocation7 + $0x90] sm:$0xff]
    %v1731 = vld [vmem:[#allocation7 + $0x98] sm:$0xff]
    %v1732 = vld [vmem:[#allocation7 + $0xa0] sm:$0xff]
    %v1733 = vld [vmem:[#allocation7 + $0xa8] sm:$0xff]
    %v1734 = vld [vmem:[#allocation7 + $0xb0] sm:$0xff]
    %v1735 = vld [vmem:[#allocation7 + $0xb8] sm:$0xff]
    %v1736 = vld [vmem:[#allocation7 + $0xc0] sm:$0xff]
    %v1737 = vld [vmem:[#allocation7 + $0xc8] sm:$0xff]
    %v1738 = vld [vmem:[#allocation7 + $0xd0] sm:$0xff]
    %v1739 = vld [vmem:[#allocation7 + $0xd8] sm:$0xff]
    %v1740 = vld [vmem:[#allocation7 + $0xe0] sm:$0xff]
    %v1741 = vld [vmem:[#allocation7 + $0xe8] sm:$0xff]
    %v1742 = vld [vmem:[#allocation7 + $0xf0] sm:$0xff]
    %v1743 = vld [vmem:[#allocation7 + $0xf8] sm:$0xff]
    %v1744 = vld [vmem:[#allocation7 + $0x100] sm:$0xff]
    %v1745 = vld [vmem:[#allocation7 + $0x108] sm:$0xff]
    %v1746 = vld [vmem:[#allocation7 + $0x110] sm:$0xff]
    %v1747 = vld [vmem:[#allocation7 + $0x118] sm:$0xff]
    %v1748 = vld [vmem:[#allocation7 + $0x120] sm:$0xff]
    %v1749 = vld [vmem:[#allocation7 + $0x128] sm:$0xff]
    %v1750 = vld [vmem:[#allocation7 + $0x130] sm:$0xff]
    %v1751 = vld [vmem:[#allocation7 + $0x138] sm:$0xff]
    %v1752 = vld [vmem:[#allocation7 + $0x140] sm:$0xff]
    %v1753 = vld [vmem:[#allocation7 + $0x148] sm:$0xff]
    %v1754 = vld [vmem:[#allocation7 + $0x150] sm:$0xff]
    %v1755 = vld [vmem:[#allocation7 + $0x158] sm:$0xff]
    %v1756 = vld [vmem:[#allocation7 + $0x160] sm:$0xff]
    %v1757 = vld [vmem:[#allocation7 + $0x168] sm:$0xff]
    %v1758 = vld [vmem:[#allocation7 + $0x170] sm:$0xff]
    %v1759 = vld [vmem:[#allocation7 + $0x178] sm:$0xff]
    %v1760 = vld [vmem:[#allocation7 + $0x180] sm:$0xff]
    %v1761 = vld [vmem:[#allocation7 + $0x188] sm:$0xff]
    %v1762 = vld [vmem:[#allocation7 + $0x190] sm:$0xff]
    %v1763 = vld [vmem:[#allocation7 + $0x198] sm:$0xff]
    %v1764 = vld [vmem:[#allocation7 + $0x1a0] sm:$0xff]
    %v1765 = vld [vmem:[#allocation7 + $0x1a8] sm:$0xff]
    %v1766 = vld [vmem:[#allocation7 + $0x1b0] sm:$0xff]
    %v1767 = vld [vmem:[#allocation7 + $0x1b8] sm:$0xff]
    %v1768 = vld [vmem:[#allocation7 + $0x1c0] sm:$0xff]
    %v1769 = vld [vmem:[#allocation7 + $0x1c8] sm:$0xff]
    %v1770 = vld [vmem:[#allocation7 + $0x1d0] sm:$0xff]
    %v1771 = vld [vmem:[#allocation7 + $0x1d8] sm:$0xff]
    %v1772 = vld [vmem:[#allocation7 + $0x1e0] sm:$0xff]
    %v1773 = vld [vmem:[#allocation7 + $0x1e8] sm:$0xff]
    %v1774 = vld [vmem:[#allocation7 + $0x1f0] sm:$0xff]
    %v1775 = vld [vmem:[#allocation7 + $0x1f8] sm:$0xff]
    %s1776 = scalar_lea.vmem %s4, 4
    %v1777 = vld [vmem:[%s1776] sm:$0xf]
    %v1779 = vperm.slane %v1777, 0
    %v1780 = vperm.slane %v1777, 1
    %v1781 = vperm.slane %v1777, 2
    %v1782 = vperm.slane %v1777, 3
    %1787 = vmatpush.msra.mxu0 %v1772
    %1788 = vmatpush.msra.mxu0 %v1768
    %1789 = vmatpush.msra.mxu0 %v1764
    %1790 = vmatpush.msra.mxu0 %v1760
    %1791 = vmatpush.msra.mxu0 %v1756
    %1792 = vmatpush.msra.mxu0 %v1752
    %1793 = vmatpush.msra.mxu0 %v1748
    %1794 = vmatpush.msra.mxu0 %v1744
    %1795 = vmatpush.msra.mxu0 %v1740
    %1796 = vmatpush.msra.mxu0 %v1736
    %1797 = vmatpush.msra.mxu0 %v1732
    %1798 = vmatpush.msra.mxu0 %v1728
    %1799 = vmatpush.msra.mxu0 %v1724
    %1800 = vmatpush.msra.mxu0 %v1720
    %1801 = vmatpush.msra.mxu0 %v1716
    %1802 = vmatpush.msra.mxu0 %v1712
    %1803 = vmatmul.f32.gmra.mxu0 %v1704
    %v1804 = vpop.f32.mrf.mxu0
    %v1805 = vadd.f32 %v1779, %v1804
    %1806 = vmatmul.f32.gmra.mxu0 %v1705
    %v1807 = vpop.f32.mrf.mxu0
    %v1808 = vadd.f32 %v1779, %v1807
    %1809 = vmatmul.f32.gmra.mxu0 %v1706
    %v1810 = vpop.f32.mrf.mxu0
    %v1811 = vadd.f32 %v1779, %v1810
    %1812 = vmatmul.f32.gmra.mxu0 %v1707
    %v1813 = vpop.f32.mrf.mxu0
    %v1814 = vadd.f32 %v1779, %v1813
    %1815 = vmatmul.f32.gmra.mxu0 %v1708
    %v1816 = vpop.f32.mrf.mxu0
    %v1817 = vadd.f32 %v1779, %v1816
    %1818 = vmatmul.f32.gmra.mxu0 %v1709
    %v1819 = vpop.f32.mrf.mxu0
    %v1820 = vadd.f32 %v1779, %v1819
    %1821 = vmatmul.f32.gmra.mxu0 %v1710
    %v1822 = vpop.f32.mrf.mxu0
    %v1823 = vadd.f32 %v1779, %v1822
    %1824 = vmatmul.f32.gmra.mxu0 %v1711
    %v1825 = vpop.f32.mrf.mxu0
    %v1826 = vadd.f32 %v1779, %v1825
    %1827 = vdwg.mxu0
    %1828 = vmatpush.msra.mxu0 %v1773
    %1829 = vmatpush.msra.mxu0 %v1769
    %1830 = vmatpush.msra.mxu0 %v1765
    %1831 = vmatpush.msra.mxu0 %v1761
    %1832 = vmatpush.msra.mxu0 %v1757
    %1833 = vmatpush.msra.mxu0 %v1753
    %1834 = vmatpush.msra.mxu0 %v1749
    %1835 = vmatpush.msra.mxu0 %v1745
    %1836 = vmatpush.msra.mxu0 %v1741
    %1837 = vmatpush.msra.mxu0 %v1737
    %1838 = vmatpush.msra.mxu0 %v1733
    %1839 = vmatpush.msra.mxu0 %v1729
    %1840 = vmatpush.msra.mxu0 %v1725
    %1841 = vmatpush.msra.mxu0 %v1721
    %1842 = vmatpush.msra.mxu0 %v1717
    %1843 = vmatpush.msra.mxu0 %v1713
    %1844 = vmatmul.f32.gmra.mxu0 %v1704
    %v1845 = vpop.f32.mrf.mxu0
    %v1846 = vadd.f32 %v1780, %v1845
    %1847 = vmatmul.f32.gmra.mxu0 %v1705
    %v1848 = vpop.f32.mrf.mxu0
    %v1849 = vadd.f32 %v1780, %v1848
    %1850 = vmatmul.f32.gmra.mxu0 %v1706
    %v1851 = vpop.f32.mrf.mxu0
    %v1852 = vadd.f32 %v1780, %v1851
    %1853 = vmatmul.f32.gmra.mxu0 %v1707
    %v1854 = vpop.f32.mrf.mxu0
    %v1855 = vadd.f32 %v1780, %v1854
    %1856 = vmatmul.f32.gmra.mxu0 %v1708
    %v1857 = vpop.f32.mrf.mxu0
    %v1858 = vadd.f32 %v1780, %v1857
    %1859 = vmatmul.f32.gmra.mxu0 %v1709
    %v1860 = vpop.f32.mrf.mxu0
    %v1861 = vadd.f32 %v1780, %v1860
    %1862 = vmatmul.f32.gmra.mxu0 %v1710
    %v1863 = vpop.f32.mrf.mxu0
    %v1864 = vadd.f32 %v1780, %v1863
    %1865 = vmatmul.f32.gmra.mxu0 %v1711
    %v1866 = vpop.f32.mrf.mxu0
    %v1867 = vadd.f32 %v1780, %v1866
    %1868 = vdwg.mxu0
    %1869 = vmatpush.msra.mxu0 %v1774
    %1870 = vmatpush.msra.mxu0 %v1770
    %1871 = vmatpush.msra.mxu0 %v1766
    %1872 = vmatpush.msra.mxu0 %v1762
    %1873 = vmatpush.msra.mxu0 %v1758
    %1874 = vmatpush.msra.mxu0 %v1754
    %1875 = vmatpush.msra.mxu0 %v1750
    %1876 = vmatpush.msra.mxu0 %v1746
    %1877 = vmatpush.msra.mxu0 %v1742
    %1878 = vmatpush.msra.mxu0 %v1738
    %1879 = vmatpush.msra.mxu0 %v1734
    %1880 = vmatpush.msra.mxu0 %v1730
    %1881 = vmatpush.msra.mxu0 %v1726
    %1882 = vmatpush.msra.mxu0 %v1722
    %1883 = vmatpush.msra.mxu0 %v1718
    %1884 = vmatpush.msra.mxu0 %v1714
    %1885 = vmatmul.f32.gmra.mxu0 %v1704
    %v1886 = vpop.f32.mrf.mxu0
    %v1887 = vadd.f32 %v1781, %v1886
    %1888 = vmatmul.f32.gmra.mxu0 %v1705
    %v1889 = vpop.f32.mrf.mxu0
    %v1890 = vadd.f32 %v1781, %v1889
    %1891 = vmatmul.f32.gmra.mxu0 %v1706
    %v1892 = vpop.f32.mrf.mxu0
    %v1893 = vadd.f32 %v1781, %v1892
    %1894 = vmatmul.f32.gmra.mxu0 %v1707
    %v1895 = vpop.f32.mrf.mxu0
    %v1896 = vadd.f32 %v1781, %v1895
    %1897 = vmatmul.f32.gmra.mxu0 %v1708
    %v1898 = vpop.f32.mrf.mxu0
    %v1899 = vadd.f32 %v1781, %v1898
    %1900 = vmatmul.f32.gmra.mxu0 %v1709
    %v1901 = vpop.f32.mrf.mxu0
    %v1902 = vadd.f32 %v1781, %v1901
    %1903 = vmatmul.f32.gmra.mxu0 %v1710
    %v1904 = vpop.f32.mrf.mxu0
    %v1905 = vadd.f32 %v1781, %v1904
    %1906 = vmatmul.f32.gmra.mxu0 %v1711
    %v1907 = vpop.f32.mrf.mxu0
    %v1908 = vadd.f32 %v1781, %v1907
    %1909 = vdwg.mxu0
    %1910 = vmatpush.msra.mxu0 %v1775
    %1911 = vmatpush.msra.mxu0 %v1771
    %1912 = vmatpush.msra.mxu0 %v1767
    %1913 = vmatpush.msra.mxu0 %v1763
    %1914 = vmatpush.msra.mxu0 %v1759
    %1915 = vmatpush.msra.mxu0 %v1755
    %1916 = vmatpush.msra.mxu0 %v1751
    %1917 = vmatpush.msra.mxu0 %v1747
    %1918 = vmatpush.msra.mxu0 %v1743
    %1919 = vmatpush.msra.mxu0 %v1739
    %1920 = vmatpush.msra.mxu0 %v1735
    %1921 = vmatpush.msra.mxu0 %v1731
    %1922 = vmatpush.msra.mxu0 %v1727
    %1923 = vmatpush.msra.mxu0 %v1723
    %1924 = vmatpush.msra.mxu0 %v1719
    %1925 = vmatpush.msra.mxu0 %v1715
    %1926 = vmatmul.f32.gmra.mxu0 %v1704
    %v1927 = vpop.f32.mrf.mxu0
    %v1928 = vadd.f32 %v1782, %v1927
    %1929 = vmatmul.f32.gmra.mxu0 %v1705
    %v1930 = vpop.f32.mrf.mxu0
    %v1931 = vadd.f32 %v1782, %v1930
    %1932 = vmatmul.f32.gmra.mxu0 %v1706
    %v1933 = vpop.f32.mrf.mxu0
    %v1934 = vadd.f32 %v1782, %v1933
    %1935 = vmatmul.f32.gmra.mxu0 %v1707
    %v1936 = vpop.f32.mrf.mxu0
    %v1937 = vadd.f32 %v1782, %v1936
    %1938 = vmatmul.f32.gmra.mxu0 %v1708
    %v1939 = vpop.f32.mrf.mxu0
    %v1940 = vadd.f32 %v1782, %v1939
    %1941 = vmatmul.f32.gmra.mxu0 %v1709
    %v1942 = vpop.f32.mrf.mxu0
    %v1943 = vadd.f32 %v1782, %v1942
    %1944 = vmatmul.f32.gmra.mxu0 %v1710
    %v1945 = vpop.f32.mrf.mxu0
    %v1946 = vadd.f32 %v1782, %v1945
    %1947 = vmatmul.f32.gmra.mxu0 %v1711
    %v1948 = vpop.f32.mrf.mxu0
    %v1949 = vadd.f32 %v1782, %v1948
    %1950 = vdwg.mxu0
    %1951 = vst [vmem:[#allocation2] sm:$0xff] %v1805
    %1952 = vst [vmem:[#allocation2 + $0x8] sm:$0xff] %v1846
    %1953 = vst [vmem:[#allocation2 + $0x10] sm:$0xff] %v1887
    %1954 = vst [vmem:[#allocation2 + $0x18] sm:$0xff] %v1928
    %1955 = vst [vmem:[#allocation2 + $0x20] sm:$0xff] %v1808
    %1956 = vst [vmem:[#allocation2 + $0x28] sm:$0xff] %v1849
    %1957 = vst [vmem:[#allocation2 + $0x30] sm:$0xff] %v1890
    %1958 = vst [vmem:[#allocation2 + $0x38] sm:$0xff] %v1931
    %1959 = vst [vmem:[#allocation2 + $0x40] sm:$0xff] %v1811
    %1960 = vst [vmem:[#allocation2 + $0x48] sm:$0xff] %v1852
    %1961 = vst [vmem:[#allocation2 + $0x50] sm:$0xff] %v1893
    %1962 = vst [vmem:[#allocation2 + $0x58] sm:$0xff] %v1934
    %1963 = vst [vmem:[#allocation2 + $0x60] sm:$0xff] %v1814
    %1964 = vst [vmem:[#allocation2 + $0x68] sm:$0xff] %v1855
    %1965 = vst [vmem:[#allocation2 + $0x70] sm:$0xff] %v1896
    %1966 = vst [vmem:[#allocation2 + $0x78] sm:$0xff] %v1937
    %1967 = vst [vmem:[#allocation2 + $0x80] sm:$0xff] %v1817
    %1968 = vst [vmem:[#allocation2 + $0x88] sm:$0xff] %v1858
    %1969 = vst [vmem:[#allocation2 + $0x90] sm:$0xff] %v1899
    %1970 = vst [vmem:[#allocation2 + $0x98] sm:$0xff] %v1940
    %1971 = vst [vmem:[#allocation2 + $0xa0] sm:$0xff] %v1820
    %1972 = vst [vmem:[#allocation2 + $0xa8] sm:$0xff] %v1861
    %1973 = vst [vmem:[#allocation2 + $0xb0] sm:$0xff] %v1902
    %1974 = vst [vmem:[#allocation2 + $0xb8] sm:$0xff] %v1943
    %1975 = vst [vmem:[#allocation2 + $0xc0] sm:$0xff] %v1823
    %1976 = vst [vmem:[#allocation2 + $0xc8] sm:$0xff] %v1864
    %1977 = vst [vmem:[#allocation2 + $0xd0] sm:$0xff] %v1905
    %1978 = vst [vmem:[#allocation2 + $0xd8] sm:$0xff] %v1946
    %1979 = vst [vmem:[#allocation2 + $0xe0] sm:$0xff] %v1826
    %1980 = vst [vmem:[#allocation2 + $0xe8] sm:$0xff] %v1867
    %1981 = vst [vmem:[#allocation2 + $0xf0] sm:$0xff] %v1908
    %1982 = vst [vmem:[#allocation2 + $0xf8] sm:$0xff] %v1949
    %s1983 = scalar_lea.vmem [#allocation9], 512
    %v1984 = vld [vmem:[%s1983] sm:$0xff]
    %v1985 = vld [vmem:[%s1983 + $0x8] sm:$0xff]
    %v1986 = vld [vmem:[%s1983 + $0x10] sm:$0xff]
    %v1987 = vld [vmem:[%s1983 + $0x18] sm:$0xff]
    %v1988 = vld [vmem:[%s1983 + $0x20] sm:$0xff]
    %v1989 = vld [vmem:[%s1983 + $0x28] sm:$0xff]
    %v1990 = vld [vmem:[%s1983 + $0x30] sm:$0xff]
    %v1991 = vld [vmem:[%s1983 + $0x38] sm:$0xff]
    %v1992 = vld [vmem:[%s1983 + $0x40] sm:$0xff]
    %v1993 = vld [vmem:[%s1983 + $0x48] sm:$0xff]
    %v1994 = vld [vmem:[%s1983 + $0x50] sm:$0xff]
    %v1995 = vld [vmem:[%s1983 + $0x58] sm:$0xff]
    %v1996 = vld [vmem:[%s1983 + $0x60] sm:$0xff]
    %v1997 = vld [vmem:[%s1983 + $0x68] sm:$0xff]
    %v1998 = vld [vmem:[%s1983 + $0x70] sm:$0xff]
    %v1999 = vld [vmem:[%s1983 + $0x78] sm:$0xff]
    %v2000 = vld [vmem:[%s1983 + $0x80] sm:$0xff]
    %v2001 = vld [vmem:[%s1983 + $0x88] sm:$0xff]
    %v2002 = vld [vmem:[%s1983 + $0x90] sm:$0xff]
    %v2003 = vld [vmem:[%s1983 + $0x98] sm:$0xff]
    %v2004 = vld [vmem:[%s1983 + $0xa0] sm:$0xff]
    %v2005 = vld [vmem:[%s1983 + $0xa8] sm:$0xff]
    %v2006 = vld [vmem:[%s1983 + $0xb0] sm:$0xff]
    %v2007 = vld [vmem:[%s1983 + $0xb8] sm:$0xff]
    %v2008 = vld [vmem:[%s1983 + $0xc0] sm:$0xff]
    %v2009 = vld [vmem:[%s1983 + $0xc8] sm:$0xff]
    %v2010 = vld [vmem:[%s1983 + $0xd0] sm:$0xff]
    %v2011 = vld [vmem:[%s1983 + $0xd8] sm:$0xff]
    %v2012 = vld [vmem:[%s1983 + $0xe0] sm:$0xff]
    %v2013 = vld [vmem:[%s1983 + $0xe8] sm:$0xff]
    %v2014 = vld [vmem:[%s1983 + $0xf0] sm:$0xff]
    %v2015 = vld [vmem:[%s1983 + $0xf8] sm:$0xff]
    %v2016 = vld [vmem:[%s1983 + $0x100] sm:$0xff]
    %v2017 = vld [vmem:[%s1983 + $0x108] sm:$0xff]
    %v2018 = vld [vmem:[%s1983 + $0x110] sm:$0xff]
    %v2019 = vld [vmem:[%s1983 + $0x118] sm:$0xff]
    %v2020 = vld [vmem:[%s1983 + $0x120] sm:$0xff]
    %v2021 = vld [vmem:[%s1983 + $0x128] sm:$0xff]
    %v2022 = vld [vmem:[%s1983 + $0x130] sm:$0xff]
    %v2023 = vld [vmem:[%s1983 + $0x138] sm:$0xff]
    %v2024 = vld [vmem:[%s1983 + $0x140] sm:$0xff]
    %v2025 = vld [vmem:[%s1983 + $0x148] sm:$0xff]
    %v2026 = vld [vmem:[%s1983 + $0x150] sm:$0xff]
    %v2027 = vld [vmem:[%s1983 + $0x158] sm:$0xff]
    %v2028 = vld [vmem:[%s1983 + $0x160] sm:$0xff]
    %v2029 = vld [vmem:[%s1983 + $0x168] sm:$0xff]
    %v2030 = vld [vmem:[%s1983 + $0x170] sm:$0xff]
    %v2031 = vld [vmem:[%s1983 + $0x178] sm:$0xff]
    %v2032 = vld [vmem:[%s1983 + $0x180] sm:$0xff]
    %v2033 = vld [vmem:[%s1983 + $0x188] sm:$0xff]
    %v2034 = vld [vmem:[%s1983 + $0x190] sm:$0xff]
    %v2035 = vld [vmem:[%s1983 + $0x198] sm:$0xff]
    %v2036 = vld [vmem:[%s1983 + $0x1a0] sm:$0xff]
    %v2037 = vld [vmem:[%s1983 + $0x1a8] sm:$0xff]
    %v2038 = vld [vmem:[%s1983 + $0x1b0] sm:$0xff]
    %v2039 = vld [vmem:[%s1983 + $0x1b8] sm:$0xff]
    %v2040 = vld [vmem:[%s1983 + $0x1c0] sm:$0xff]
    %v2041 = vld [vmem:[%s1983 + $0x1c8] sm:$0xff]
    %v2042 = vld [vmem:[%s1983 + $0x1d0] sm:$0xff]
    %v2043 = vld [vmem:[%s1983 + $0x1d8] sm:$0xff]
    %v2044 = vld [vmem:[%s1983 + $0x1e0] sm:$0xff]
    %v2045 = vld [vmem:[%s1983 + $0x1e8] sm:$0xff]
    %v2046 = vld [vmem:[%s1983 + $0x1f0] sm:$0xff]
    %v2047 = vld [vmem:[%s1983 + $0x1f8] sm:$0xff]
    %v2048 = vld [vmem:[%s459] sm:$0xff]
    %v2049 = vld [vmem:[%s459 + $0x8] sm:$0xff]
    %v2050 = vld [vmem:[%s459 + $0x10] sm:$0xff]
    %v2051 = vld [vmem:[%s459 + $0x18] sm:$0xff]
    %2052 = vmatpush.msra.mxu0 %v2044
    %2053 = vmatpush.msra.mxu0 %v2040
    %2054 = vmatpush.msra.mxu0 %v2036
    %2055 = vmatpush.msra.mxu0 %v2032
    %2056 = vmatpush.msra.mxu0 %v2028
    %2057 = vmatpush.msra.mxu0 %v2024
    %2058 = vmatpush.msra.mxu0 %v2020
    %2059 = vmatpush.msra.mxu0 %v2016
    %2060 = vmatpush.msra.mxu0 %v2012
    %2061 = vmatpush.msra.mxu0 %v2008
    %2062 = vmatpush.msra.mxu0 %v2004
    %2063 = vmatpush.msra.mxu0 %v2000
    %2064 = vmatpush.msra.mxu0 %v1996
    %2065 = vmatpush.msra.mxu0 %v1992
    %2066 = vmatpush.msra.mxu0 %v1988
    %2067 = vmatpush.msra.mxu0 %v1984
    %2068 = vmatmul.f32.gmra.mxu0 0.0
    %v2069 = vpop.f32.mrf.mxu0
    %v2070 = vadd.f32 0.0, %v2069
    %2071 = vdwg.mxu0
    %2072 = vmatpush.msra.mxu0 %v2045
    %2073 = vmatpush.msra.mxu0 %v2041
    %2074 = vmatpush.msra.mxu0 %v2037
    %2075 = vmatpush.msra.mxu0 %v2033
    %2076 = vmatpush.msra.mxu0 %v2029
    %2077 = vmatpush.msra.mxu0 %v2025
    %2078 = vmatpush.msra.mxu0 %v2021
    %2079 = vmatpush.msra.mxu0 %v2017
    %2080 = vmatpush.msra.mxu0 %v2013
    %2081 = vmatpush.msra.mxu0 %v2009
    %2082 = vmatpush.msra.mxu0 %v2005
    %2083 = vmatpush.msra.mxu0 %v2001
    %2084 = vmatpush.msra.mxu0 %v1997
    %2085 = vmatpush.msra.mxu0 %v1993
    %2086 = vmatpush.msra.mxu0 %v1989
    %2087 = vmatpush.msra.mxu0 %v1985
    %2088 = vmatmul.f32.gmra.mxu0 0.0
    %v2089 = vpop.f32.mrf.mxu0
    %v2090 = vadd.f32 0.0, %v2089
    %2091 = vdwg.mxu0
    %2092 = vmatpush.msra.mxu0 %v2046
    %2093 = vmatpush.msra.mxu0 %v2042
    %2094 = vmatpush.msra.mxu0 %v2038
    %2095 = vmatpush.msra.mxu0 %v2034
    %2096 = vmatpush.msra.mxu0 %v2030
    %2097 = vmatpush.msra.mxu0 %v2026
    %2098 = vmatpush.msra.mxu0 %v2022
    %2099 = vmatpush.msra.mxu0 %v2018
    %2100 = vmatpush.msra.mxu0 %v2014
    %2101 = vmatpush.msra.mxu0 %v2010
    %2102 = vmatpush.msra.mxu0 %v2006
    %2103 = vmatpush.msra.mxu0 %v2002
    %2104 = vmatpush.msra.mxu0 %v1998
    %2105 = vmatpush.msra.mxu0 %v1994
    %2106 = vmatpush.msra.mxu0 %v1990
    %2107 = vmatpush.msra.mxu0 %v1986
    %2108 = vmatmul.f32.gmra.mxu0 0.0
    %v2109 = vpop.f32.mrf.mxu0
    %v2110 = vadd.f32 0.0, %v2109
    %2111 = vdwg.mxu0
    %2112 = vmatpush.msra.mxu0 %v2047
    %2113 = vmatpush.msra.mxu0 %v2043
    %2114 = vmatpush.msra.mxu0 %v2039
    %2115 = vmatpush.msra.mxu0 %v2035
    %2116 = vmatpush.msra.mxu0 %v2031
    %2117 = vmatpush.msra.mxu0 %v2027
    %2118 = vmatpush.msra.mxu0 %v2023
    %2119 = vmatpush.msra.mxu0 %v2019
    %2120 = vmatpush.msra.mxu0 %v2015
    %2121 = vmatpush.msra.mxu0 %v2011
    %2122 = vmatpush.msra.mxu0 %v2007
    %2123 = vmatpush.msra.mxu0 %v2003
    %2124 = vmatpush.msra.mxu0 %v1999
    %2125 = vmatpush.msra.mxu0 %v1995
    %2126 = vmatpush.msra.mxu0 %v1991
    %2127 = vmatpush.msra.mxu0 %v1987
    %2128 = vmatmul.f32.gmra.mxu0 0.0
    %v2129 = vpop.f32.mrf.mxu0
    %v2130 = vadd.f32 0.0, %v2129
    %2131 = vdwg.mxu0
    %v2132 = vadd.f32 %v2048, %v2070
    %v2133 = vadd.f32 %v2049, %v2090
    %v2134 = vadd.f32 %v2050, %v2110
    %v2135 = vadd.f32 %v2051, %v2130
    %v2136 = vxor.u32 %v2132, 2147483648
    %v2137 = vxor.u32 %v2133, 2147483648
    %v2138 = vxor.u32 %v2134, 2147483648
    %v2139 = vmul.f32 %v2136, 1.442695
    %v2140 = vpow.pop %v2139
    %v2141 = vmul.f32 %v2137, 1.442695
    %v2142 = vpow.pop %v2141
    %v2143 = vmul.f32 %v2138, 1.442695
    %v2144 = vpow.pop %v2143
    %v2145 = vadd.f32 %v2140, 1.0
    %v2146 = vadd.f32 %v2142, 1.0
    %v2147 = vadd.f32 %v2144, 1.0
    %v2148 = vrcp.pop %v2145
    %v2149 = vmul.f32 %v2145, %v2148
    %v2150 = vsub.f32 1.0, %v2149
    %v2151 = vmul.f32 %v2148, %v2150
    %v2152 = vadd.f32 %v2148, %v2151
    %vm2153 = vweird.f32 %v2145
    %vm2154 = vweird.f32 %v2148
    %vm2155 = vmor %vm2153, %vm2154
    %v2156 = vsel %vm2155, %v2148, %v2152
    %v2157 = vand.u32 2147483647, %v2145
    %vm2158 = vcmp.eq.f32.partialorder %v2157, 8.507059e+37
    %v2159 = vand.u32 %v2145, 2147483648
    %v2160 = vor.u32 1.1754944e-38, %v2159
    %v2161 = vsel %vm2158, %v2160, %v2156
    %v2162 = vmul.f32 1.0, %v2161
    %v2163 = vrcp.pop %v2146
    %v2164 = vmul.f32 %v2146, %v2163
    %v2165 = vsub.f32 1.0, %v2164
    %v2166 = vmul.f32 %v2163, %v2165
    %v2167 = vadd.f32 %v2163, %v2166
    %vm2168 = vweird.f32 %v2146
    %vm2169 = vweird.f32 %v2163
    %vm2170 = vmor %vm2168, %vm2169
    %v2171 = vsel %vm2170, %v2163, %v2167
    %v2172 = vand.u32 2147483647, %v2146
    %vm2173 = vcmp.eq.f32.partialorder %v2172, 8.507059e+37
    %v2174 = vand.u32 %v2146, 2147483648
    %v2175 = vor.u32 1.1754944e-38, %v2174
    %v2176 = vsel %vm2173, %v2175, %v2171
    %v2177 = vmul.f32 1.0, %v2176
    %v2178 = vrcp.pop %v2147
    %v2179 = vmul.f32 %v2147, %v2178
    %v2180 = vsub.f32 1.0, %v2179
    %v2181 = vmul.f32 %v2178, %v2180
    %v2182 = vadd.f32 %v2178, %v2181
    %vm2183 = vweird.f32 %v2147
    %vm2184 = vweird.f32 %v2178
    %vm2185 = vmor %vm2183, %vm2184
    %v2186 = vsel %vm2185, %v2178, %v2182
    %v2187 = vand.u32 2147483647, %v2147
    %vm2188 = vcmp.eq.f32.partialorder %v2187, 8.507059e+37
    %v2189 = vand.u32 %v2147, 2147483648
    %v2190 = vor.u32 1.1754944e-38, %v2189
    %v2191 = vsel %vm2188, %v2190, %v2186
    %v2192 = vmul.f32 1.0, %v2191
    %v2193 = vtanh.pop %v2135
    %v2194 = vmul.f32 %v2177, 0.0
    %v2195 = vmul.f32 %v2162, %v2193
    %v2196 = vadd.f32 %v2194, %v2195
    %v2197 = vtanh.pop %v2196
    %v2198 = vmul.f32 %v2192, %v2197
    %v2199 = vld [vmem:[%s614] sm:$0xff]
    %v2200 = vld [vmem:[%s614 + $0x8] sm:$0xff]
    %v2201 = vld [vmem:[%s614 + $0x10] sm:$0xff]
    %v2202 = vld [vmem:[%s614 + $0x18] sm:$0xff]
    %2203 = vmatpush.msra.mxu0 %v2044
    %2204 = vmatpush.msra.mxu0 %v2040
    %2205 = vmatpush.msra.mxu0 %v2036
    %2206 = vmatpush.msra.mxu0 %v2032
    %2207 = vmatpush.msra.mxu0 %v2028
    %2208 = vmatpush.msra.mxu0 %v2024
    %2209 = vmatpush.msra.mxu0 %v2020
    %2210 = vmatpush.msra.mxu0 %v2016
    %2211 = vmatpush.msra.mxu0 %v2012
    %2212 = vmatpush.msra.mxu0 %v2008
    %2213 = vmatpush.msra.mxu0 %v2004
    %2214 = vmatpush.msra.mxu0 %v2000
    %2215 = vmatpush.msra.mxu0 %v1996
    %2216 = vmatpush.msra.mxu0 %v1992
    %2217 = vmatpush.msra.mxu0 %v1988
    %2218 = vmatpush.msra.mxu0 %v1984
    %2219 = vmatmul.f32.gmra.mxu0 %v2198
    %v2220 = vpop.f32.mrf.mxu0
    %v2221 = vadd.f32 0.0, %v2220
    %2222 = vdwg.mxu0
    %2223 = vmatpush.msra.mxu0 %v2045
    %2224 = vmatpush.msra.mxu0 %v2041
    %2225 = vmatpush.msra.mxu0 %v2037
    %2226 = vmatpush.msra.mxu0 %v2033
    %2227 = vmatpush.msra.mxu0 %v2029
    %2228 = vmatpush.msra.mxu0 %v2025
    %2229 = vmatpush.msra.mxu0 %v2021
    %2230 = vmatpush.msra.mxu0 %v2017
    %2231 = vmatpush.msra.mxu0 %v2013
    %2232 = vmatpush.msra.mxu0 %v2009
    %2233 = vmatpush.msra.mxu0 %v2005
    %2234 = vmatpush.msra.mxu0 %v2001
    %2235 = vmatpush.msra.mxu0 %v1997
    %2236 = vmatpush.msra.mxu0 %v1993
    %2237 = vmatpush.msra.mxu0 %v1989
    %2238 = vmatpush.msra.mxu0 %v1985
    %2239 = vmatmul.f32.gmra.mxu0 %v2198
    %v2240 = vpop.f32.mrf.mxu0
    %v2241 = vadd.f32 0.0, %v2240
    %2242 = vdwg.mxu0
    %2243 = vmatpush.msra.mxu0 %v2046
    %2244 = vmatpush.msra.mxu0 %v2042
    %2245 = vmatpush.msra.mxu0 %v2038
    %2246 = vmatpush.msra.mxu0 %v2034
    %2247 = vmatpush.msra.mxu0 %v2030
    %2248 = vmatpush.msra.mxu0 %v2026
    %2249 = vmatpush.msra.mxu0 %v2022
    %2250 = vmatpush.msra.mxu0 %v2018
    %2251 = vmatpush.msra.mxu0 %v2014
    %2252 = vmatpush.msra.mxu0 %v2010
    %2253 = vmatpush.msra.mxu0 %v2006
    %2254 = vmatpush.msra.mxu0 %v2002
    %2255 = vmatpush.msra.mxu0 %v1998
    %2256 = vmatpush.msra.mxu0 %v1994
    %2257 = vmatpush.msra.mxu0 %v1990
    %2258 = vmatpush.msra.mxu0 %v1986
    %2259 = vmatmul.f32.gmra.mxu0 %v2198
    %v2260 = vpop.f32.mrf.mxu0
    %v2261 = vadd.f32 0.0, %v2260
    %2262 = vdwg.mxu0
    %2263 = vmatpush.msra.mxu0 %v2047
    %2264 = vmatpush.msra.mxu0 %v2043
    %2265 = vmatpush.msra.mxu0 %v2039
    %2266 = vmatpush.msra.mxu0 %v2035
    %2267 = vmatpush.msra.mxu0 %v2031
    %2268 = vmatpush.msra.mxu0 %v2027
    %2269 = vmatpush.msra.mxu0 %v2023
    %2270 = vmatpush.msra.mxu0 %v2019
    %2271 = vmatpush.msra.mxu0 %v2015
    %2272 = vmatpush.msra.mxu0 %v2011
    %2273 = vmatpush.msra.mxu0 %v2007
    %2274 = vmatpush.msra.mxu0 %v2003
    %2275 = vmatpush.msra.mxu0 %v1999
    %2276 = vmatpush.msra.mxu0 %v1995
    %2277 = vmatpush.msra.mxu0 %v1991
    %2278 = vmatpush.msra.mxu0 %v1987
    %2279 = vmatmul.f32.gmra.mxu0 %v2198
    %v2280 = vpop.f32.mrf.mxu0
    %v2281 = vadd.f32 0.0, %v2280
    %2282 = vdwg.mxu0
    %v2283 = vadd.f32 %v2199, %v2221
    %v2284 = vadd.f32 %v2200, %v2241
    %v2285 = vadd.f32 %v2201, %v2261
    %v2286 = vadd.f32 %v2202, %v2281
    %v2287 = vxor.u32 %v2283, 2147483648
    %v2288 = vxor.u32 %v2284, 2147483648
    %v2289 = vxor.u32 %v2285, 2147483648
    %v2290 = vmul.f32 %v2287, 1.442695
    %v2291 = vpow.pop %v2290
    %v2292 = vmul.f32 %v2288, 1.442695
    %v2293 = vpow.pop %v2292
    %v2294 = vmul.f32 %v2289, 1.442695
    %v2295 = vpow.pop %v2294
    %v2296 = vadd.f32 %v2291, 1.0
    %v2297 = vadd.f32 %v2293, 1.0
    %v2298 = vadd.f32 %v2295, 1.0
    %v2299 = vrcp.pop %v2296
    %v2300 = vmul.f32 %v2296, %v2299
    %v2301 = vsub.f32 1.0, %v2300
    %v2302 = vmul.f32 %v2299, %v2301
    %v2303 = vadd.f32 %v2299, %v2302
    %vm2304 = vweird.f32 %v2296
    %vm2305 = vweird.f32 %v2299
    %vm2306 = vmor %vm2304, %vm2305
    %v2307 = vsel %vm2306, %v2299, %v2303
    %v2308 = vand.u32 2147483647, %v2296
    %vm2309 = vcmp.eq.f32.partialorder %v2308, 8.507059e+37
    %v2310 = vand.u32 %v2296, 2147483648
    %v2311 = vor.u32 1.1754944e-38, %v2310
    %v2312 = vsel %vm2309, %v2311, %v2307
    %v2313 = vmul.f32 1.0, %v2312
    %v2314 = vrcp.pop %v2297
    %v2315 = vmul.f32 %v2297, %v2314
    %v2316 = vsub.f32 1.0, %v2315
    %v2317 = vmul.f32 %v2314, %v2316
    %v2318 = vadd.f32 %v2314, %v2317
    %vm2319 = vweird.f32 %v2297
    %vm2320 = vweird.f32 %v2314
    %vm2321 = vmor %vm2319, %vm2320
    %v2322 = vsel %vm2321, %v2314, %v2318
    %v2323 = vand.u32 2147483647, %v2297
    %vm2324 = vcmp.eq.f32.partialorder %v2323, 8.507059e+37
    %v2325 = vand.u32 %v2297, 2147483648
    %v2326 = vor.u32 1.1754944e-38, %v2325
    %v2327 = vsel %vm2324, %v2326, %v2322
    %v2328 = vmul.f32 1.0, %v2327
    %v2329 = vrcp.pop %v2298
    %v2330 = vmul.f32 %v2298, %v2329
    %v2331 = vsub.f32 1.0, %v2330
    %v2332 = vmul.f32 %v2329, %v2331
    %v2333 = vadd.f32 %v2329, %v2332
    %vm2334 = vweird.f32 %v2298
    %vm2335 = vweird.f32 %v2329
    %vm2336 = vmor %vm2334, %vm2335
    %v2337 = vsel %vm2336, %v2329, %v2333
    %v2338 = vand.u32 2147483647, %v2298
    %vm2339 = vcmp.eq.f32.partialorder %v2338, 8.507059e+37
    %v2340 = vand.u32 %v2298, 2147483648
    %v2341 = vor.u32 1.1754944e-38, %v2340
    %v2342 = vsel %vm2339, %v2341, %v2337
    %v2343 = vmul.f32 1.0, %v2342
    %v2344 = vtanh.pop %v2286
    %v2345 = vmul.f32 %v2328, %v2196
    %v2346 = vmul.f32 %v2313, %v2344
    %v2347 = vadd.f32 %v2345, %v2346
    %v2348 = vtanh.pop %v2347
    %v2349 = vmul.f32 %v2343, %v2348
    %v2350 = vld [vmem:[%s770] sm:$0xff]
    %v2351 = vld [vmem:[%s770 + $0x8] sm:$0xff]
    %v2352 = vld [vmem:[%s770 + $0x10] sm:$0xff]
    %v2353 = vld [vmem:[%s770 + $0x18] sm:$0xff]
    %2354 = vmatpush.msra.mxu0 %v2044
    %2355 = vmatpush.msra.mxu0 %v2040
    %2356 = vmatpush.msra.mxu0 %v2036
    %2357 = vmatpush.msra.mxu0 %v2032
    %2358 = vmatpush.msra.mxu0 %v2028
    %2359 = vmatpush.msra.mxu0 %v2024
    %2360 = vmatpush.msra.mxu0 %v2020
    %2361 = vmatpush.msra.mxu0 %v2016
    %2362 = vmatpush.msra.mxu0 %v2012
    %2363 = vmatpush.msra.mxu0 %v2008
    %2364 = vmatpush.msra.mxu0 %v2004
    %2365 = vmatpush.msra.mxu0 %v2000
    %2366 = vmatpush.msra.mxu0 %v1996
    %2367 = vmatpush.msra.mxu0 %v1992
    %2368 = vmatpush.msra.mxu0 %v1988
    %2369 = vmatpush.msra.mxu0 %v1984
    %2370 = vmatmul.f32.gmra.mxu0 %v2349
    %v2371 = vpop.f32.mrf.mxu0
    %v2372 = vadd.f32 0.0, %v2371
    %2373 = vdwg.mxu0
    %2374 = vmatpush.msra.mxu0 %v2045
    %2375 = vmatpush.msra.mxu0 %v2041
    %2376 = vmatpush.msra.mxu0 %v2037
    %2377 = vmatpush.msra.mxu0 %v2033
    %2378 = vmatpush.msra.mxu0 %v2029
    %2379 = vmatpush.msra.mxu0 %v2025
    %2380 = vmatpush.msra.mxu0 %v2021
    %2381 = vmatpush.msra.mxu0 %v2017
    %2382 = vmatpush.msra.mxu0 %v2013
    %2383 = vmatpush.msra.mxu0 %v2009
    %2384 = vmatpush.msra.mxu0 %v2005
    %2385 = vmatpush.msra.mxu0 %v2001
    %2386 = vmatpush.msra.mxu0 %v1997
    %2387 = vmatpush.msra.mxu0 %v1993
    %2388 = vmatpush.msra.mxu0 %v1989
    %2389 = vmatpush.msra.mxu0 %v1985
    %2390 = vmatmul.f32.gmra.mxu0 %v2349
    %v2391 = vpop.f32.mrf.mxu0
    %v2392 = vadd.f32 0.0, %v2391
    %2393 = vdwg.mxu0
    %2394 = vmatpush.msra.mxu0 %v2046
    %2395 = vmatpush.msra.mxu0 %v2042
    %2396 = vmatpush.msra.mxu0 %v2038
    %2397 = vmatpush.msra.mxu0 %v2034
    %2398 = vmatpush.msra.mxu0 %v2030
    %2399 = vmatpush.msra.mxu0 %v2026
    %2400 = vmatpush.msra.mxu0 %v2022
    %2401 = vmatpush.msra.mxu0 %v2018
    %2402 = vmatpush.msra.mxu0 %v2014
    %2403 = vmatpush.msra.mxu0 %v2010
    %2404 = vmatpush.msra.mxu0 %v2006
    %2405 = vmatpush.msra.mxu0 %v2002
    %2406 = vmatpush.msra.mxu0 %v1998
    %2407 = vmatpush.msra.mxu0 %v1994
    %2408 = vmatpush.msra.mxu0 %v1990
    %2409 = vmatpush.msra.mxu0 %v1986
    %2410 = vmatmul.f32.gmra.mxu0 %v2349
    %v2411 = vpop.f32.mrf.mxu0
    %v2412 = vadd.f32 0.0, %v2411
    %2413 = vdwg.mxu0
    %2414 = vmatpush.msra.mxu0 %v2047
    %2415 = vmatpush.msra.mxu0 %v2043
    %2416 = vmatpush.msra.mxu0 %v2039
    %2417 = vmatpush.msra.mxu0 %v2035
    %2418 = vmatpush.msra.mxu0 %v2031
    %2419 = vmatpush.msra.mxu0 %v2027
    %2420 = vmatpush.msra.mxu0 %v2023
    %2421 = vmatpush.msra.mxu0 %v2019
    %2422 = vmatpush.msra.mxu0 %v2015
    %2423 = vmatpush.msra.mxu0 %v2011
    %2424 = vmatpush.msra.mxu0 %v2007
    %2425 = vmatpush.msra.mxu0 %v2003
    %2426 = vmatpush.msra.mxu0 %v1999
    %2427 = vmatpush.msra.mxu0 %v1995
    %2428 = vmatpush.msra.mxu0 %v1991
    %2429 = vmatpush.msra.mxu0 %v1987
    %2430 = vmatmul.f32.gmra.mxu0 %v2349
    %v2431 = vpop.f32.mrf.mxu0
    %v2432 = vadd.f32 0.0, %v2431
    %2433 = vdwg.mxu0
    %v2434 = vadd.f32 %v2350, %v2372
    %v2435 = vadd.f32 %v2351, %v2392
    %v2436 = vadd.f32 %v2352, %v2412
    %v2437 = vadd.f32 %v2353, %v2432
    %v2438 = vxor.u32 %v2434, 2147483648
    %v2439 = vxor.u32 %v2435, 2147483648
    %v2440 = vxor.u32 %v2436, 2147483648
    %v2441 = vmul.f32 %v2438, 1.442695
    %v2442 = vpow.pop %v2441
    %v2443 = vmul.f32 %v2439, 1.442695
    %v2444 = vpow.pop %v2443
    %v2445 = vmul.f32 %v2440, 1.442695
    %v2446 = vpow.pop %v2445
    %v2447 = vadd.f32 %v2442, 1.0
    %v2448 = vadd.f32 %v2444, 1.0
    %v2449 = vadd.f32 %v2446, 1.0
    %v2450 = vrcp.pop %v2447
    %v2451 = vmul.f32 %v2447, %v2450
    %v2452 = vsub.f32 1.0, %v2451
    %v2453 = vmul.f32 %v2450, %v2452
    %v2454 = vadd.f32 %v2450, %v2453
    %vm2455 = vweird.f32 %v2447
    %vm2456 = vweird.f32 %v2450
    %vm2457 = vmor %vm2455, %vm2456
    %v2458 = vsel %vm2457, %v2450, %v2454
    %v2459 = vand.u32 2147483647, %v2447
    %vm2460 = vcmp.eq.f32.partialorder %v2459, 8.507059e+37
    %v2461 = vand.u32 %v2447, 2147483648
    %v2462 = vor.u32 1.1754944e-38, %v2461
    %v2463 = vsel %vm2460, %v2462, %v2458
    %v2464 = vmul.f32 1.0, %v2463
    %v2465 = vrcp.pop %v2448
    %v2466 = vmul.f32 %v2448, %v2465
    %v2467 = vsub.f32 1.0, %v2466
    %v2468 = vmul.f32 %v2465, %v2467
    %v2469 = vadd.f32 %v2465, %v2468
    %vm2470 = vweird.f32 %v2448
    %vm2471 = vweird.f32 %v2465
    %vm2472 = vmor %vm2470, %vm2471
    %v2473 = vsel %vm2472, %v2465, %v2469
    %v2474 = vand.u32 2147483647, %v2448
    %vm2475 = vcmp.eq.f32.partialorder %v2474, 8.507059e+37
    %v2476 = vand.u32 %v2448, 2147483648
    %v2477 = vor.u32 1.1754944e-38, %v2476
    %v2478 = vsel %vm2475, %v2477, %v2473
    %v2479 = vmul.f32 1.0, %v2478
    %v2480 = vrcp.pop %v2449
    %v2481 = vmul.f32 %v2449, %v2480
    %v2482 = vsub.f32 1.0, %v2481
    %v2483 = vmul.f32 %v2480, %v2482
    %v2484 = vadd.f32 %v2480, %v2483
    %vm2485 = vweird.f32 %v2449
    %vm2486 = vweird.f32 %v2480
    %vm2487 = vmor %vm2485, %vm2486
    %v2488 = vsel %vm2487, %v2480, %v2484
    %v2489 = vand.u32 2147483647, %v2449
    %vm2490 = vcmp.eq.f32.partialorder %v2489, 8.507059e+37
    %v2491 = vand.u32 %v2449, 2147483648
    %v2492 = vor.u32 1.1754944e-38, %v2491
    %v2493 = vsel %vm2490, %v2492, %v2488
    %v2494 = vmul.f32 1.0, %v2493
    %v2495 = vtanh.pop %v2437
    %v2496 = vmul.f32 %v2479, %v2347
    %v2497 = vmul.f32 %v2464, %v2495
    %v2498 = vadd.f32 %v2496, %v2497
    %v2499 = vtanh.pop %v2498
    %v2500 = vmul.f32 %v2494, %v2499
    %v2501 = vld [vmem:[%s926] sm:$0xff]
    %v2502 = vld [vmem:[%s926 + $0x8] sm:$0xff]
    %v2503 = vld [vmem:[%s926 + $0x10] sm:$0xff]
    %v2504 = vld [vmem:[%s926 + $0x18] sm:$0xff]
    %2505 = vmatpush.msra.mxu0 %v2044
    %2506 = vmatpush.msra.mxu0 %v2040
    %2507 = vmatpush.msra.mxu0 %v2036
    %2508 = vmatpush.msra.mxu0 %v2032
    %2509 = vmatpush.msra.mxu0 %v2028
    %2510 = vmatpush.msra.mxu0 %v2024
    %2511 = vmatpush.msra.mxu0 %v2020
    %2512 = vmatpush.msra.mxu0 %v2016
    %2513 = vmatpush.msra.mxu0 %v2012
    %2514 = vmatpush.msra.mxu0 %v2008
    %2515 = vmatpush.msra.mxu0 %v2004
    %2516 = vmatpush.msra.mxu0 %v2000
    %2517 = vmatpush.msra.mxu0 %v1996
    %2518 = vmatpush.msra.mxu0 %v1992
    %2519 = vmatpush.msra.mxu0 %v1988
    %2520 = vmatpush.msra.mxu0 %v1984
    %2521 = vmatmul.f32.gmra.mxu0 %v2500
    %v2522 = vpop.f32.mrf.mxu0
    %v2523 = vadd.f32 0.0, %v2522
    %2524 = vdwg.mxu0
    %2525 = vmatpush.msra.mxu0 %v2045
    %2526 = vmatpush.msra.mxu0 %v2041
    %2527 = vmatpush.msra.mxu0 %v2037
    %2528 = vmatpush.msra.mxu0 %v2033
    %2529 = vmatpush.msra.mxu0 %v2029
    %2530 = vmatpush.msra.mxu0 %v2025
    %2531 = vmatpush.msra.mxu0 %v2021
    %2532 = vmatpush.msra.mxu0 %v2017
    %2533 = vmatpush.msra.mxu0 %v2013
    %2534 = vmatpush.msra.mxu0 %v2009
    %2535 = vmatpush.msra.mxu0 %v2005
    %2536 = vmatpush.msra.mxu0 %v2001
    %2537 = vmatpush.msra.mxu0 %v1997
    %2538 = vmatpush.msra.mxu0 %v1993
    %2539 = vmatpush.msra.mxu0 %v1989
    %2540 = vmatpush.msra.mxu0 %v1985
    %2541 = vmatmul.f32.gmra.mxu0 %v2500
    %v2542 = vpop.f32.mrf.mxu0
    %v2543 = vadd.f32 0.0, %v2542
    %2544 = vdwg.mxu0
    %2545 = vmatpush.msra.mxu0 %v2046
    %2546 = vmatpush.msra.mxu0 %v2042
    %2547 = vmatpush.msra.mxu0 %v2038
    %2548 = vmatpush.msra.mxu0 %v2034
    %2549 = vmatpush.msra.mxu0 %v2030
    %2550 = vmatpush.msra.mxu0 %v2026
    %2551 = vmatpush.msra.mxu0 %v2022
    %2552 = vmatpush.msra.mxu0 %v2018
    %2553 = vmatpush.msra.mxu0 %v2014
    %2554 = vmatpush.msra.mxu0 %v2010
    %2555 = vmatpush.msra.mxu0 %v2006
    %2556 = vmatpush.msra.mxu0 %v2002
    %2557 = vmatpush.msra.mxu0 %v1998
    %2558 = vmatpush.msra.mxu0 %v1994
    %2559 = vmatpush.msra.mxu0 %v1990
    %2560 = vmatpush.msra.mxu0 %v1986
    %2561 = vmatmul.f32.gmra.mxu0 %v2500
    %v2562 = vpop.f32.mrf.mxu0
    %v2563 = vadd.f32 0.0, %v2562
    %2564 = vdwg.mxu0
    %2565 = vmatpush.msra.mxu0 %v2047
    %2566 = vmatpush.msra.mxu0 %v2043
    %2567 = vmatpush.msra.mxu0 %v2039
    %2568 = vmatpush.msra.mxu0 %v2035
    %2569 = vmatpush.msra.mxu0 %v2031
    %2570 = vmatpush.msra.mxu0 %v2027
    %2571 = vmatpush.msra.mxu0 %v2023
    %2572 = vmatpush.msra.mxu0 %v2019
    %2573 = vmatpush.msra.mxu0 %v2015
    %2574 = vmatpush.msra.mxu0 %v2011
    %2575 = vmatpush.msra.mxu0 %v2007
    %2576 = vmatpush.msra.mxu0 %v2003
    %2577 = vmatpush.msra.mxu0 %v1999
    %2578 = vmatpush.msra.mxu0 %v1995
    %2579 = vmatpush.msra.mxu0 %v1991
    %2580 = vmatpush.msra.mxu0 %v1987
    %2581 = vmatmul.f32.gmra.mxu0 %v2500
    %v2582 = vpop.f32.mrf.mxu0
    %v2583 = vadd.f32 0.0, %v2582
    %2584 = vdwg.mxu0
    %v2585 = vadd.f32 %v2501, %v2523
    %v2586 = vadd.f32 %v2502, %v2543
    %v2587 = vadd.f32 %v2503, %v2563
    %v2588 = vadd.f32 %v2504, %v2583
    %v2589 = vxor.u32 %v2585, 2147483648
    %v2590 = vxor.u32 %v2586, 2147483648
    %v2591 = vxor.u32 %v2587, 2147483648
    %v2592 = vmul.f32 %v2589, 1.442695
    %v2593 = vpow.pop %v2592
    %v2594 = vmul.f32 %v2590, 1.442695
    %v2595 = vpow.pop %v2594
    %v2596 = vmul.f32 %v2591, 1.442695
    %v2597 = vpow.pop %v2596
    %v2598 = vadd.f32 %v2593, 1.0
    %v2599 = vadd.f32 %v2595, 1.0
    %v2600 = vadd.f32 %v2597, 1.0
    %v2601 = vrcp.pop %v2598
    %v2602 = vmul.f32 %v2598, %v2601
    %v2603 = vsub.f32 1.0, %v2602
    %v2604 = vmul.f32 %v2601, %v2603
    %v2605 = vadd.f32 %v2601, %v2604
    %vm2606 = vweird.f32 %v2598
    %vm2607 = vweird.f32 %v2601
    %vm2608 = vmor %vm2606, %vm2607
    %v2609 = vsel %vm2608, %v2601, %v2605
    %v2610 = vand.u32 2147483647, %v2598
    %vm2611 = vcmp.eq.f32.partialorder %v2610, 8.507059e+37
    %v2612 = vand.u32 %v2598, 2147483648
    %v2613 = vor.u32 1.1754944e-38, %v2612
    %v2614 = vsel %vm2611, %v2613, %v2609
    %v2615 = vmul.f32 1.0, %v2614
    %v2616 = vrcp.pop %v2599
    %v2617 = vmul.f32 %v2599, %v2616
    %v2618 = vsub.f32 1.0, %v2617
    %v2619 = vmul.f32 %v2616, %v2618
    %v2620 = vadd.f32 %v2616, %v2619
    %vm2621 = vweird.f32 %v2599
    %vm2622 = vweird.f32 %v2616
    %vm2623 = vmor %vm2621, %vm2622
    %v2624 = vsel %vm2623, %v2616, %v2620
    %v2625 = vand.u32 2147483647, %v2599
    %vm2626 = vcmp.eq.f32.partialorder %v2625, 8.507059e+37
    %v2627 = vand.u32 %v2599, 2147483648
    %v2628 = vor.u32 1.1754944e-38, %v2627
    %v2629 = vsel %vm2626, %v2628, %v2624
    %v2630 = vmul.f32 1.0, %v2629
    %v2631 = vrcp.pop %v2600
    %v2632 = vmul.f32 %v2600, %v2631
    %v2633 = vsub.f32 1.0, %v2632
    %v2634 = vmul.f32 %v2631, %v2633
    %v2635 = vadd.f32 %v2631, %v2634
    %vm2636 = vweird.f32 %v2600
    %vm2637 = vweird.f32 %v2631
    %vm2638 = vmor %vm2636, %vm2637
    %v2639 = vsel %vm2638, %v2631, %v2635
    %v2640 = vand.u32 2147483647, %v2600
    %vm2641 = vcmp.eq.f32.partialorder %v2640, 8.507059e+37
    %v2642 = vand.u32 %v2600, 2147483648
    %v2643 = vor.u32 1.1754944e-38, %v2642
    %v2644 = vsel %vm2641, %v2643, %v2639
    %v2645 = vmul.f32 1.0, %v2644
    %v2646 = vtanh.pop %v2588
    %v2647 = vmul.f32 %v2630, %v2498
    %v2648 = vmul.f32 %v2615, %v2646
    %v2649 = vadd.f32 %v2647, %v2648
    %v2650 = vtanh.pop %v2649
    %v2651 = vmul.f32 %v2645, %v2650
    %v2652 = vld [vmem:[%s1082] sm:$0xff]
    %v2653 = vld [vmem:[%s1082 + $0x8] sm:$0xff]
    %v2654 = vld [vmem:[%s1082 + $0x10] sm:$0xff]
    %v2655 = vld [vmem:[%s1082 + $0x18] sm:$0xff]
    %2656 = vmatpush.msra.mxu0 %v2044
    %2657 = vmatpush.msra.mxu0 %v2040
    %2658 = vmatpush.msra.mxu0 %v2036
    %2659 = vmatpush.msra.mxu0 %v2032
    %2660 = vmatpush.msra.mxu0 %v2028
    %2661 = vmatpush.msra.mxu0 %v2024
    %2662 = vmatpush.msra.mxu0 %v2020
    %2663 = vmatpush.msra.mxu0 %v2016
    %2664 = vmatpush.msra.mxu0 %v2012
    %2665 = vmatpush.msra.mxu0 %v2008
    %2666 = vmatpush.msra.mxu0 %v2004
    %2667 = vmatpush.msra.mxu0 %v2000
    %2668 = vmatpush.msra.mxu0 %v1996
    %2669 = vmatpush.msra.mxu0 %v1992
    %2670 = vmatpush.msra.mxu0 %v1988
    %2671 = vmatpush.msra.mxu0 %v1984
    %2672 = vmatmul.f32.gmra.mxu0 %v2651
    %v2673 = vpop.f32.mrf.mxu0
    %v2674 = vadd.f32 0.0, %v2673
    %2675 = vdwg.mxu0
    %2676 = vmatpush.msra.mxu0 %v2045
    %2677 = vmatpush.msra.mxu0 %v2041
    %2678 = vmatpush.msra.mxu0 %v2037
    %2679 = vmatpush.msra.mxu0 %v2033
    %2680 = vmatpush.msra.mxu0 %v2029
    %2681 = vmatpush.msra.mxu0 %v2025
    %2682 = vmatpush.msra.mxu0 %v2021
    %2683 = vmatpush.msra.mxu0 %v2017
    %2684 = vmatpush.msra.mxu0 %v2013
    %2685 = vmatpush.msra.mxu0 %v2009
    %2686 = vmatpush.msra.mxu0 %v2005
    %2687 = vmatpush.msra.mxu0 %v2001
    %2688 = vmatpush.msra.mxu0 %v1997
    %2689 = vmatpush.msra.mxu0 %v1993
    %2690 = vmatpush.msra.mxu0 %v1989
    %2691 = vmatpush.msra.mxu0 %v1985
    %2692 = vmatmul.f32.gmra.mxu0 %v2651
    %v2693 = vpop.f32.mrf.mxu0
    %v2694 = vadd.f32 0.0, %v2693
    %2695 = vdwg.mxu0
    %2696 = vmatpush.msra.mxu0 %v2046
    %2697 = vmatpush.msra.mxu0 %v2042
    %2698 = vmatpush.msra.mxu0 %v2038
    %2699 = vmatpush.msra.mxu0 %v2034
    %2700 = vmatpush.msra.mxu0 %v2030
    %2701 = vmatpush.msra.mxu0 %v2026
    %2702 = vmatpush.msra.mxu0 %v2022
    %2703 = vmatpush.msra.mxu0 %v2018
    %2704 = vmatpush.msra.mxu0 %v2014
    %2705 = vmatpush.msra.mxu0 %v2010
    %2706 = vmatpush.msra.mxu0 %v2006
    %2707 = vmatpush.msra.mxu0 %v2002
    %2708 = vmatpush.msra.mxu0 %v1998
    %2709 = vmatpush.msra.mxu0 %v1994
    %2710 = vmatpush.msra.mxu0 %v1990
    %2711 = vmatpush.msra.mxu0 %v1986
    %2712 = vmatmul.f32.gmra.mxu0 %v2651
    %v2713 = vpop.f32.mrf.mxu0
    %v2714 = vadd.f32 0.0, %v2713
    %2715 = vdwg.mxu0
    %2716 = vmatpush.msra.mxu0 %v2047
    %2717 = vmatpush.msra.mxu0 %v2043
    %2718 = vmatpush.msra.mxu0 %v2039
    %2719 = vmatpush.msra.mxu0 %v2035
    %2720 = vmatpush.msra.mxu0 %v2031
    %2721 = vmatpush.msra.mxu0 %v2027
    %2722 = vmatpush.msra.mxu0 %v2023
    %2723 = vmatpush.msra.mxu0 %v2019
    %2724 = vmatpush.msra.mxu0 %v2015
    %2725 = vmatpush.msra.mxu0 %v2011
    %2726 = vmatpush.msra.mxu0 %v2007
    %2727 = vmatpush.msra.mxu0 %v2003
    %2728 = vmatpush.msra.mxu0 %v1999
    %2729 = vmatpush.msra.mxu0 %v1995
    %2730 = vmatpush.msra.mxu0 %v1991
    %2731 = vmatpush.msra.mxu0 %v1987
    %2732 = vmatmul.f32.gmra.mxu0 %v2651
    %v2733 = vpop.f32.mrf.mxu0
    %v2734 = vadd.f32 0.0, %v2733
    %2735 = vdwg.mxu0
    %v2736 = vadd.f32 %v2652, %v2674
    %v2737 = vadd.f32 %v2653, %v2694
    %v2738 = vadd.f32 %v2654, %v2714
    %v2739 = vadd.f32 %v2655, %v2734
    %v2740 = vxor.u32 %v2736, 2147483648
    %v2741 = vxor.u32 %v2737, 2147483648
    %v2742 = vxor.u32 %v2738, 2147483648
    %v2743 = vmul.f32 %v2740, 1.442695
    %v2744 = vpow.pop %v2743
    %v2745 = vmul.f32 %v2741, 1.442695
    %v2746 = vpow.pop %v2745
    %v2747 = vmul.f32 %v2742, 1.442695
    %v2748 = vpow.pop %v2747
    %v2749 = vadd.f32 %v2744, 1.0
    %v2750 = vadd.f32 %v2746, 1.0
    %v2751 = vadd.f32 %v2748, 1.0
    %v2752 = vrcp.pop %v2749
    %v2753 = vmul.f32 %v2749, %v2752
    %v2754 = vsub.f32 1.0, %v2753
    %v2755 = vmul.f32 %v2752, %v2754
    %v2756 = vadd.f32 %v2752, %v2755
    %vm2757 = vweird.f32 %v2749
    %vm2758 = vweird.f32 %v2752
    %vm2759 = vmor %vm2757, %vm2758
    %v2760 = vsel %vm2759, %v2752, %v2756
    %v2761 = vand.u32 2147483647, %v2749
    %vm2762 = vcmp.eq.f32.partialorder %v2761, 8.507059e+37
    %v2763 = vand.u32 %v2749, 2147483648
    %v2764 = vor.u32 1.1754944e-38, %v2763
    %v2765 = vsel %vm2762, %v2764, %v2760
    %v2766 = vmul.f32 1.0, %v2765
    %v2767 = vrcp.pop %v2750
    %v2768 = vmul.f32 %v2750, %v2767
    %v2769 = vsub.f32 1.0, %v2768
    %v2770 = vmul.f32 %v2767, %v2769
    %v2771 = vadd.f32 %v2767, %v2770
    %vm2772 = vweird.f32 %v2750
    %vm2773 = vweird.f32 %v2767
    %vm2774 = vmor %vm2772, %vm2773
    %v2775 = vsel %vm2774, %v2767, %v2771
    %v2776 = vand.u32 2147483647, %v2750
    %vm2777 = vcmp.eq.f32.partialorder %v2776, 8.507059e+37
    %v2778 = vand.u32 %v2750, 2147483648
    %v2779 = vor.u32 1.1754944e-38, %v2778
    %v2780 = vsel %vm2777, %v2779, %v2775
    %v2781 = vmul.f32 1.0, %v2780
    %v2782 = vrcp.pop %v2751
    %v2783 = vmul.f32 %v2751, %v2782
    %v2784 = vsub.f32 1.0, %v2783
    %v2785 = vmul.f32 %v2782, %v2784
    %v2786 = vadd.f32 %v2782, %v2785
    %vm2787 = vweird.f32 %v2751
    %vm2788 = vweird.f32 %v2782
    %vm2789 = vmor %vm2787, %vm2788
    %v2790 = vsel %vm2789, %v2782, %v2786
    %v2791 = vand.u32 2147483647, %v2751
    %vm2792 = vcmp.eq.f32.partialorder %v2791, 8.507059e+37
    %v2793 = vand.u32 %v2751, 2147483648
    %v2794 = vor.u32 1.1754944e-38, %v2793
    %v2795 = vsel %vm2792, %v2794, %v2790
    %v2796 = vmul.f32 1.0, %v2795
    %v2797 = vtanh.pop %v2739
    %v2798 = vmul.f32 %v2781, %v2649
    %v2799 = vmul.f32 %v2766, %v2797
    %v2800 = vadd.f32 %v2798, %v2799
    %v2801 = vtanh.pop %v2800
    %v2802 = vmul.f32 %v2796, %v2801
    %v2803 = vld [vmem:[%s1238] sm:$0xff]
    %v2804 = vld [vmem:[%s1238 + $0x8] sm:$0xff]
    %v2805 = vld [vmem:[%s1238 + $0x10] sm:$0xff]
    %v2806 = vld [vmem:[%s1238 + $0x18] sm:$0xff]
    %2807 = vmatpush.msra.mxu0 %v2044
    %2808 = vmatpush.msra.mxu0 %v2040
    %2809 = vmatpush.msra.mxu0 %v2036
    %2810 = vmatpush.msra.mxu0 %v2032
    %2811 = vmatpush.msra.mxu0 %v2028
    %2812 = vmatpush.msra.mxu0 %v2024
    %2813 = vmatpush.msra.mxu0 %v2020
    %2814 = vmatpush.msra.mxu0 %v2016
    %2815 = vmatpush.msra.mxu0 %v2012
    %2816 = vmatpush.msra.mxu0 %v2008
    %2817 = vmatpush.msra.mxu0 %v2004
    %2818 = vmatpush.msra.mxu0 %v2000
    %2819 = vmatpush.msra.mxu0 %v1996
    %2820 = vmatpush.msra.mxu0 %v1992
    %2821 = vmatpush.msra.mxu0 %v1988
    %2822 = vmatpush.msra.mxu0 %v1984
    %2823 = vmatmul.f32.gmra.mxu0 %v2802
    %v2824 = vpop.f32.mrf.mxu0
    %v2825 = vadd.f32 0.0, %v2824
    %2826 = vdwg.mxu0
    %2827 = vmatpush.msra.mxu0 %v2045
    %2828 = vmatpush.msra.mxu0 %v2041
    %2829 = vmatpush.msra.mxu0 %v2037
    %2830 = vmatpush.msra.mxu0 %v2033
    %2831 = vmatpush.msra.mxu0 %v2029
    %2832 = vmatpush.msra.mxu0 %v2025
    %2833 = vmatpush.msra.mxu0 %v2021
    %2834 = vmatpush.msra.mxu0 %v2017
    %2835 = vmatpush.msra.mxu0 %v2013
    %2836 = vmatpush.msra.mxu0 %v2009
    %2837 = vmatpush.msra.mxu0 %v2005
    %2838 = vmatpush.msra.mxu0 %v2001
    %2839 = vmatpush.msra.mxu0 %v1997
    %2840 = vmatpush.msra.mxu0 %v1993
    %2841 = vmatpush.msra.mxu0 %v1989
    %2842 = vmatpush.msra.mxu0 %v1985
    %2843 = vmatmul.f32.gmra.mxu0 %v2802
    %v2844 = vpop.f32.mrf.mxu0
    %v2845 = vadd.f32 0.0, %v2844
    %2846 = vdwg.mxu0
    %2847 = vmatpush.msra.mxu0 %v2046
    %2848 = vmatpush.msra.mxu0 %v2042
    %2849 = vmatpush.msra.mxu0 %v2038
    %2850 = vmatpush.msra.mxu0 %v2034
    %2851 = vmatpush.msra.mxu0 %v2030
    %2852 = vmatpush.msra.mxu0 %v2026
    %2853 = vmatpush.msra.mxu0 %v2022
    %2854 = vmatpush.msra.mxu0 %v2018
    %2855 = vmatpush.msra.mxu0 %v2014
    %2856 = vmatpush.msra.mxu0 %v2010
    %2857 = vmatpush.msra.mxu0 %v2006
    %2858 = vmatpush.msra.mxu0 %v2002
    %2859 = vmatpush.msra.mxu0 %v1998
    %2860 = vmatpush.msra.mxu0 %v1994
    %2861 = vmatpush.msra.mxu0 %v1990
    %2862 = vmatpush.msra.mxu0 %v1986
    %2863 = vmatmul.f32.gmra.mxu0 %v2802
    %v2864 = vpop.f32.mrf.mxu0
    %v2865 = vadd.f32 0.0, %v2864
    %2866 = vdwg.mxu0
    %2867 = vmatpush.msra.mxu0 %v2047
    %2868 = vmatpush.msra.mxu0 %v2043
    %2869 = vmatpush.msra.mxu0 %v2039
    %2870 = vmatpush.msra.mxu0 %v2035
    %2871 = vmatpush.msra.mxu0 %v2031
    %2872 = vmatpush.msra.mxu0 %v2027
    %2873 = vmatpush.msra.mxu0 %v2023
    %2874 = vmatpush.msra.mxu0 %v2019
    %2875 = vmatpush.msra.mxu0 %v2015
    %2876 = vmatpush.msra.mxu0 %v2011
    %2877 = vmatpush.msra.mxu0 %v2007
    %2878 = vmatpush.msra.mxu0 %v2003
    %2879 = vmatpush.msra.mxu0 %v1999
    %2880 = vmatpush.msra.mxu0 %v1995
    %2881 = vmatpush.msra.mxu0 %v1991
    %2882 = vmatpush.msra.mxu0 %v1987
    %2883 = vmatmul.f32.gmra.mxu0 %v2802
    %v2884 = vpop.f32.mrf.mxu0
    %v2885 = vadd.f32 0.0, %v2884
    %2886 = vdwg.mxu0
    %v2887 = vadd.f32 %v2803, %v2825
    %v2888 = vadd.f32 %v2804, %v2845
    %v2889 = vadd.f32 %v2805, %v2865
    %v2890 = vadd.f32 %v2806, %v2885
    %v2891 = vxor.u32 %v2887, 2147483648
    %v2892 = vxor.u32 %v2888, 2147483648
    %v2893 = vxor.u32 %v2889, 2147483648
    %v2894 = vmul.f32 %v2891, 1.442695
    %v2895 = vpow.pop %v2894
    %v2896 = vmul.f32 %v2892, 1.442695
    %v2897 = vpow.pop %v2896
    %v2898 = vmul.f32 %v2893, 1.442695
    %v2899 = vpow.pop %v2898
    %v2900 = vadd.f32 %v2895, 1.0
    %v2901 = vadd.f32 %v2897, 1.0
    %v2902 = vadd.f32 %v2899, 1.0
    %v2903 = vrcp.pop %v2900
    %v2904 = vmul.f32 %v2900, %v2903
    %v2905 = vsub.f32 1.0, %v2904
    %v2906 = vmul.f32 %v2903, %v2905
    %v2907 = vadd.f32 %v2903, %v2906
    %vm2908 = vweird.f32 %v2900
    %vm2909 = vweird.f32 %v2903
    %vm2910 = vmor %vm2908, %vm2909
    %v2911 = vsel %vm2910, %v2903, %v2907
    %v2912 = vand.u32 2147483647, %v2900
    %vm2913 = vcmp.eq.f32.partialorder %v2912, 8.507059e+37
    %v2914 = vand.u32 %v2900, 2147483648
    %v2915 = vor.u32 1.1754944e-38, %v2914
    %v2916 = vsel %vm2913, %v2915, %v2911
    %v2917 = vmul.f32 1.0, %v2916
    %v2918 = vrcp.pop %v2901
    %v2919 = vmul.f32 %v2901, %v2918
    %v2920 = vsub.f32 1.0, %v2919
    %v2921 = vmul.f32 %v2918, %v2920
    %v2922 = vadd.f32 %v2918, %v2921
    %vm2923 = vweird.f32 %v2901
    %vm2924 = vweird.f32 %v2918
    %vm2925 = vmor %vm2923, %vm2924
    %v2926 = vsel %vm2925, %v2918, %v2922
    %v2927 = vand.u32 2147483647, %v2901
    %vm2928 = vcmp.eq.f32.partialorder %v2927, 8.507059e+37
    %v2929 = vand.u32 %v2901, 2147483648
    %v2930 = vor.u32 1.1754944e-38, %v2929
    %v2931 = vsel %vm2928, %v2930, %v2926
    %v2932 = vmul.f32 1.0, %v2931
    %v2933 = vrcp.pop %v2902
    %v2934 = vmul.f32 %v2902, %v2933
    %v2935 = vsub.f32 1.0, %v2934
    %v2936 = vmul.f32 %v2933, %v2935
    %v2937 = vadd.f32 %v2933, %v2936
    %vm2938 = vweird.f32 %v2902
    %vm2939 = vweird.f32 %v2933
    %vm2940 = vmor %vm2938, %vm2939
    %v2941 = vsel %vm2940, %v2933, %v2937
    %v2942 = vand.u32 2147483647, %v2902
    %vm2943 = vcmp.eq.f32.partialorder %v2942, 8.507059e+37
    %v2944 = vand.u32 %v2902, 2147483648
    %v2945 = vor.u32 1.1754944e-38, %v2944
    %v2946 = vsel %vm2943, %v2945, %v2941
    %v2947 = vmul.f32 1.0, %v2946
    %v2948 = vtanh.pop %v2890
    %v2949 = vmul.f32 %v2932, %v2800
    %v2950 = vmul.f32 %v2917, %v2948
    %v2951 = vadd.f32 %v2949, %v2950
    %v2952 = vtanh.pop %v2951
    %v2953 = vmul.f32 %v2947, %v2952
    %v2954 = vld [vmem:[%s1394] sm:$0xff]
    %v2955 = vld [vmem:[%s1394 + $0x8] sm:$0xff]
    %v2956 = vld [vmem:[%s1394 + $0x10] sm:$0xff]
    %v2957 = vld [vmem:[%s1394 + $0x18] sm:$0xff]
    %2958 = vmatpush.msra.mxu0 %v2044
    %2959 = vmatpush.msra.mxu0 %v2040
    %2960 = vmatpush.msra.mxu0 %v2036
    %2961 = vmatpush.msra.mxu0 %v2032
    %2962 = vmatpush.msra.mxu0 %v2028
    %2963 = vmatpush.msra.mxu0 %v2024
    %2964 = vmatpush.msra.mxu0 %v2020
    %2965 = vmatpush.msra.mxu0 %v2016
    %2966 = vmatpush.msra.mxu0 %v2012
    %2967 = vmatpush.msra.mxu0 %v2008
    %2968 = vmatpush.msra.mxu0 %v2004
    %2969 = vmatpush.msra.mxu0 %v2000
    %2970 = vmatpush.msra.mxu0 %v1996
    %2971 = vmatpush.msra.mxu0 %v1992
    %2972 = vmatpush.msra.mxu0 %v1988
    %2973 = vmatpush.msra.mxu0 %v1984
    %2974 = vmatmul.f32.gmra.mxu0 %v2953
    %v2975 = vpop.f32.mrf.mxu0
    %v2976 = vadd.f32 0.0, %v2975
    %2977 = vdwg.mxu0
    %2978 = vmatpush.msra.mxu0 %v2045
    %2979 = vmatpush.msra.mxu0 %v2041
    %2980 = vmatpush.msra.mxu0 %v2037
    %2981 = vmatpush.msra.mxu0 %v2033
    %2982 = vmatpush.msra.mxu0 %v2029
    %2983 = vmatpush.msra.mxu0 %v2025
    %2984 = vmatpush.msra.mxu0 %v2021
    %2985 = vmatpush.msra.mxu0 %v2017
    %2986 = vmatpush.msra.mxu0 %v2013
    %2987 = vmatpush.msra.mxu0 %v2009
    %2988 = vmatpush.msra.mxu0 %v2005
    %2989 = vmatpush.msra.mxu0 %v2001
    %2990 = vmatpush.msra.mxu0 %v1997
    %2991 = vmatpush.msra.mxu0 %v1993
    %2992 = vmatpush.msra.mxu0 %v1989
    %2993 = vmatpush.msra.mxu0 %v1985
    %2994 = vmatmul.f32.gmra.mxu0 %v2953
    %v2995 = vpop.f32.mrf.mxu0
    %v2996 = vadd.f32 0.0, %v2995
    %2997 = vdwg.mxu0
    %2998 = vmatpush.msra.mxu0 %v2046
    %2999 = vmatpush.msra.mxu0 %v2042
    %3000 = vmatpush.msra.mxu0 %v2038
    %3001 = vmatpush.msra.mxu0 %v2034
    %3002 = vmatpush.msra.mxu0 %v2030
    %3003 = vmatpush.msra.mxu0 %v2026
    %3004 = vmatpush.msra.mxu0 %v2022
    %3005 = vmatpush.msra.mxu0 %v2018
    %3006 = vmatpush.msra.mxu0 %v2014
    %3007 = vmatpush.msra.mxu0 %v2010
    %3008 = vmatpush.msra.mxu0 %v2006
    %3009 = vmatpush.msra.mxu0 %v2002
    %3010 = vmatpush.msra.mxu0 %v1998
    %3011 = vmatpush.msra.mxu0 %v1994
    %3012 = vmatpush.msra.mxu0 %v1990
    %3013 = vmatpush.msra.mxu0 %v1986
    %3014 = vmatmul.f32.gmra.mxu0 %v2953
    %v3015 = vpop.f32.mrf.mxu0
    %v3016 = vadd.f32 0.0, %v3015
    %3017 = vdwg.mxu0
    %3018 = vmatpush.msra.mxu0 %v2047
    %3019 = vmatpush.msra.mxu0 %v2043
    %3020 = vmatpush.msra.mxu0 %v2039
    %3021 = vmatpush.msra.mxu0 %v2035
    %3022 = vmatpush.msra.mxu0 %v2031
    %3023 = vmatpush.msra.mxu0 %v2027
    %3024 = vmatpush.msra.mxu0 %v2023
    %3025 = vmatpush.msra.mxu0 %v2019
    %3026 = vmatpush.msra.mxu0 %v2015
    %3027 = vmatpush.msra.mxu0 %v2011
    %3028 = vmatpush.msra.mxu0 %v2007
    %3029 = vmatpush.msra.mxu0 %v2003
    %3030 = vmatpush.msra.mxu0 %v1999
    %3031 = vmatpush.msra.mxu0 %v1995
    %3032 = vmatpush.msra.mxu0 %v1991
    %3033 = vmatpush.msra.mxu0 %v1987
    %3034 = vmatmul.f32.gmra.mxu0 %v2953
    %v3035 = vpop.f32.mrf.mxu0
    %v3036 = vadd.f32 0.0, %v3035
    %3037 = vdwg.mxu0
    %v3038 = vadd.f32 %v2954, %v2976
    %v3039 = vadd.f32 %v2955, %v2996
    %v3040 = vadd.f32 %v2956, %v3016
    %v3041 = vadd.f32 %v2957, %v3036
    %v3042 = vxor.u32 %v3038, 2147483648
    %v3043 = vxor.u32 %v3039, 2147483648
    %v3044 = vxor.u32 %v3040, 2147483648
    %v3045 = vmul.f32 %v3042, 1.442695
    %v3046 = vpow.pop %v3045
    %v3047 = vmul.f32 %v3043, 1.442695
    %v3048 = vpow.pop %v3047
    %v3049 = vmul.f32 %v3044, 1.442695
    %v3050 = vpow.pop %v3049
    %v3051 = vadd.f32 %v3046, 1.0
    %v3052 = vadd.f32 %v3048, 1.0
    %v3053 = vadd.f32 %v3050, 1.0
    %v3054 = vrcp.pop %v3051
    %v3055 = vmul.f32 %v3051, %v3054
    %v3056 = vsub.f32 1.0, %v3055
    %v3057 = vmul.f32 %v3054, %v3056
    %v3058 = vadd.f32 %v3054, %v3057
    %vm3059 = vweird.f32 %v3051
    %vm3060 = vweird.f32 %v3054
    %vm3061 = vmor %vm3059, %vm3060
    %v3062 = vsel %vm3061, %v3054, %v3058
    %v3063 = vand.u32 2147483647, %v3051
    %vm3064 = vcmp.eq.f32.partialorder %v3063, 8.507059e+37
    %v3065 = vand.u32 %v3051, 2147483648
    %v3066 = vor.u32 1.1754944e-38, %v3065
    %v3067 = vsel %vm3064, %v3066, %v3062
    %v3068 = vmul.f32 1.0, %v3067
    %v3069 = vrcp.pop %v3052
    %v3070 = vmul.f32 %v3052, %v3069
    %v3071 = vsub.f32 1.0, %v3070
    %v3072 = vmul.f32 %v3069, %v3071
    %v3073 = vadd.f32 %v3069, %v3072
    %vm3074 = vweird.f32 %v3052
    %vm3075 = vweird.f32 %v3069
    %vm3076 = vmor %vm3074, %vm3075
    %v3077 = vsel %vm3076, %v3069, %v3073
    %v3078 = vand.u32 2147483647, %v3052
    %vm3079 = vcmp.eq.f32.partialorder %v3078, 8.507059e+37
    %v3080 = vand.u32 %v3052, 2147483648
    %v3081 = vor.u32 1.1754944e-38, %v3080
    %v3082 = vsel %vm3079, %v3081, %v3077
    %v3083 = vmul.f32 1.0, %v3082
    %v3084 = vrcp.pop %v3053
    %v3085 = vmul.f32 %v3053, %v3084
    %v3086 = vsub.f32 1.0, %v3085
    %v3087 = vmul.f32 %v3084, %v3086
    %v3088 = vadd.f32 %v3084, %v3087
    %vm3089 = vweird.f32 %v3053
    %vm3090 = vweird.f32 %v3084
    %vm3091 = vmor %vm3089, %vm3090
    %v3092 = vsel %vm3091, %v3084, %v3088
    %v3093 = vand.u32 2147483647, %v3053
    %vm3094 = vcmp.eq.f32.partialorder %v3093, 8.507059e+37
    %v3095 = vand.u32 %v3053, 2147483648
    %v3096 = vor.u32 1.1754944e-38, %v3095
    %v3097 = vsel %vm3094, %v3096, %v3092
    %v3098 = vmul.f32 1.0, %v3097
    %v3099 = vtanh.pop %v3041
    %v3100 = vmul.f32 %v3083, %v2951
    %v3101 = vmul.f32 %v3068, %v3099
    %v3102 = vadd.f32 %v3100, %v3101
    %v3103 = vtanh.pop %v3102
    %v3104 = vmul.f32 %v3098, %v3103
    %v3105 = vld [vmem:[%s1550] sm:$0xff]
    %v3106 = vld [vmem:[%s1550 + $0x8] sm:$0xff]
    %v3107 = vld [vmem:[%s1550 + $0x10] sm:$0xff]
    %v3108 = vld [vmem:[%s1550 + $0x18] sm:$0xff]
    %3109 = vmatpush.msra.mxu0 %v2044
    %3110 = vmatpush.msra.mxu0 %v2040
    %3111 = vmatpush.msra.mxu0 %v2036
    %3112 = vmatpush.msra.mxu0 %v2032
    %3113 = vmatpush.msra.mxu0 %v2028
    %3114 = vmatpush.msra.mxu0 %v2024
    %3115 = vmatpush.msra.mxu0 %v2020
    %3116 = vmatpush.msra.mxu0 %v2016
    %3117 = vmatpush.msra.mxu0 %v2012
    %3118 = vmatpush.msra.mxu0 %v2008
    %3119 = vmatpush.msra.mxu0 %v2004
    %3120 = vmatpush.msra.mxu0 %v2000
    %3121 = vmatpush.msra.mxu0 %v1996
    %3122 = vmatpush.msra.mxu0 %v1992
    %3123 = vmatpush.msra.mxu0 %v1988
    %3124 = vmatpush.msra.mxu0 %v1984
    %3125 = vmatmul.f32.gmra.mxu0 %v3104
    %v3126 = vpop.f32.mrf.mxu0
    %v3127 = vadd.f32 0.0, %v3126
    %3128 = vdwg.mxu0
    %3129 = vmatpush.msra.mxu0 %v2045
    %3130 = vmatpush.msra.mxu0 %v2041
    %3131 = vmatpush.msra.mxu0 %v2037
    %3132 = vmatpush.msra.mxu0 %v2033
    %3133 = vmatpush.msra.mxu0 %v2029
    %3134 = vmatpush.msra.mxu0 %v2025
    %3135 = vmatpush.msra.mxu0 %v2021
    %3136 = vmatpush.msra.mxu0 %v2017
    %3137 = vmatpush.msra.mxu0 %v2013
    %3138 = vmatpush.msra.mxu0 %v2009
    %3139 = vmatpush.msra.mxu0 %v2005
    %3140 = vmatpush.msra.mxu0 %v2001
    %3141 = vmatpush.msra.mxu0 %v1997
    %3142 = vmatpush.msra.mxu0 %v1993
    %3143 = vmatpush.msra.mxu0 %v1989
    %3144 = vmatpush.msra.mxu0 %v1985
    %3145 = vmatmul.f32.gmra.mxu0 %v3104
    %v3146 = vpop.f32.mrf.mxu0
    %v3147 = vadd.f32 0.0, %v3146
    %3148 = vdwg.mxu0
    %3149 = vmatpush.msra.mxu0 %v2046
    %3150 = vmatpush.msra.mxu0 %v2042
    %3151 = vmatpush.msra.mxu0 %v2038
    %3152 = vmatpush.msra.mxu0 %v2034
    %3153 = vmatpush.msra.mxu0 %v2030
    %3154 = vmatpush.msra.mxu0 %v2026
    %3155 = vmatpush.msra.mxu0 %v2022
    %3156 = vmatpush.msra.mxu0 %v2018
    %3157 = vmatpush.msra.mxu0 %v2014
    %3158 = vmatpush.msra.mxu0 %v2010
    %3159 = vmatpush.msra.mxu0 %v2006
    %3160 = vmatpush.msra.mxu0 %v2002
    %3161 = vmatpush.msra.mxu0 %v1998
    %3162 = vmatpush.msra.mxu0 %v1994
    %3163 = vmatpush.msra.mxu0 %v1990
    %3164 = vmatpush.msra.mxu0 %v1986
    %3165 = vmatmul.f32.gmra.mxu0 %v3104
    %v3166 = vpop.f32.mrf.mxu0
    %v3167 = vadd.f32 0.0, %v3166
    %3168 = vdwg.mxu0
    %3169 = vmatpush.msra.mxu0 %v2047
    %3170 = vmatpush.msra.mxu0 %v2043
    %3171 = vmatpush.msra.mxu0 %v2039
    %3172 = vmatpush.msra.mxu0 %v2035
    %3173 = vmatpush.msra.mxu0 %v2031
    %3174 = vmatpush.msra.mxu0 %v2027
    %3175 = vmatpush.msra.mxu0 %v2023
    %3176 = vmatpush.msra.mxu0 %v2019
    %3177 = vmatpush.msra.mxu0 %v2015
    %3178 = vmatpush.msra.mxu0 %v2011
    %3179 = vmatpush.msra.mxu0 %v2007
    %3180 = vmatpush.msra.mxu0 %v2003
    %3181 = vmatpush.msra.mxu0 %v1999
    %3182 = vmatpush.msra.mxu0 %v1995
    %3183 = vmatpush.msra.mxu0 %v1991
    %3184 = vmatpush.msra.mxu0 %v1987
    %3185 = vmatmul.f32.gmra.mxu0 %v3104
    %v3186 = vpop.f32.mrf.mxu0
    %v3187 = vadd.f32 0.0, %v3186
    %3188 = vdwg.mxu0
    %v3189 = vadd.f32 %v3105, %v3127
    %v3190 = vadd.f32 %v3106, %v3147
    %v3191 = vadd.f32 %v3107, %v3167
    %v3192 = vadd.f32 %v3108, %v3187
    %v3193 = vxor.u32 %v3189, 2147483648
    %v3194 = vxor.u32 %v3190, 2147483648
    %v3195 = vxor.u32 %v3191, 2147483648
    %v3196 = vmul.f32 %v3193, 1.442695
    %v3197 = vpow.pop %v3196
    %v3198 = vmul.f32 %v3194, 1.442695
    %v3199 = vpow.pop %v3198
    %v3200 = vmul.f32 %v3195, 1.442695
    %v3201 = vpow.pop %v3200
    %v3202 = vadd.f32 %v3197, 1.0
    %v3203 = vadd.f32 %v3199, 1.0
    %v3204 = vadd.f32 %v3201, 1.0
    %v3205 = vrcp.pop %v3202
    %v3206 = vmul.f32 %v3202, %v3205
    %v3207 = vsub.f32 1.0, %v3206
    %v3208 = vmul.f32 %v3205, %v3207
    %v3209 = vadd.f32 %v3205, %v3208
    %vm3210 = vweird.f32 %v3202
    %vm3211 = vweird.f32 %v3205
    %vm3212 = vmor %vm3210, %vm3211
    %v3213 = vsel %vm3212, %v3205, %v3209
    %v3214 = vand.u32 2147483647, %v3202
    %vm3215 = vcmp.eq.f32.partialorder %v3214, 8.507059e+37
    %v3216 = vand.u32 %v3202, 2147483648
    %v3217 = vor.u32 1.1754944e-38, %v3216
    %v3218 = vsel %vm3215, %v3217, %v3213
    %v3219 = vmul.f32 1.0, %v3218
    %v3220 = vrcp.pop %v3203
    %v3221 = vmul.f32 %v3203, %v3220
    %v3222 = vsub.f32 1.0, %v3221
    %v3223 = vmul.f32 %v3220, %v3222
    %v3224 = vadd.f32 %v3220, %v3223
    %vm3225 = vweird.f32 %v3203
    %vm3226 = vweird.f32 %v3220
    %vm3227 = vmor %vm3225, %vm3226
    %v3228 = vsel %vm3227, %v3220, %v3224
    %v3229 = vand.u32 2147483647, %v3203
    %vm3230 = vcmp.eq.f32.partialorder %v3229, 8.507059e+37
    %v3231 = vand.u32 %v3203, 2147483648
    %v3232 = vor.u32 1.1754944e-38, %v3231
    %v3233 = vsel %vm3230, %v3232, %v3228
    %v3234 = vmul.f32 1.0, %v3233
    %v3235 = vrcp.pop %v3204
    %v3236 = vmul.f32 %v3204, %v3235
    %v3237 = vsub.f32 1.0, %v3236
    %v3238 = vmul.f32 %v3235, %v3237
    %v3239 = vadd.f32 %v3235, %v3238
    %vm3240 = vweird.f32 %v3204
    %vm3241 = vweird.f32 %v3235
    %vm3242 = vmor %vm3240, %vm3241
    %v3243 = vsel %vm3242, %v3235, %v3239
    %v3244 = vand.u32 2147483647, %v3204
    %vm3245 = vcmp.eq.f32.partialorder %v3244, 8.507059e+37
    %v3246 = vand.u32 %v3204, 2147483648
    %v3247 = vor.u32 1.1754944e-38, %v3246
    %v3248 = vsel %vm3245, %v3247, %v3243
    %v3249 = vmul.f32 1.0, %v3248
    %v3250 = vtanh.pop %v3192
    %v3251 = vmul.f32 %v3234, %v3102
    %v3252 = vmul.f32 %v3219, %v3250
    %v3253 = vadd.f32 %v3251, %v3252
    %v3254 = vtanh.pop %v3253
    %v3255 = vmul.f32 %v3249, %v3254
    %v3256 = vld [vmem:[#allocation10] sm:$0xff]
    %v3257 = vld [vmem:[#allocation10 + $0x8] sm:$0xff]
    %v3258 = vld [vmem:[#allocation10 + $0x10] sm:$0xff]
    %v3259 = vld [vmem:[#allocation10 + $0x18] sm:$0xff]
    %v3260 = vld [vmem:[#allocation10 + $0x20] sm:$0xff]
    %v3261 = vld [vmem:[#allocation10 + $0x28] sm:$0xff]
    %v3262 = vld [vmem:[#allocation10 + $0x30] sm:$0xff]
    %v3263 = vld [vmem:[#allocation10 + $0x38] sm:$0xff]
    %v3264 = vld [vmem:[#allocation10 + $0x40] sm:$0xff]
    %v3265 = vld [vmem:[#allocation10 + $0x48] sm:$0xff]
    %v3266 = vld [vmem:[#allocation10 + $0x50] sm:$0xff]
    %v3267 = vld [vmem:[#allocation10 + $0x58] sm:$0xff]
    %v3268 = vld [vmem:[#allocation10 + $0x60] sm:$0xff]
    %v3269 = vld [vmem:[#allocation10 + $0x68] sm:$0xff]
    %v3270 = vld [vmem:[#allocation10 + $0x70] sm:$0xff]
    %v3271 = vld [vmem:[#allocation10 + $0x78] sm:$0xff]
    %v3272 = vld [vmem:[#allocation10 + $0x80] sm:$0xff]
    %v3273 = vld [vmem:[#allocation10 + $0x88] sm:$0xff]
    %v3274 = vld [vmem:[#allocation10 + $0x90] sm:$0xff]
    %v3275 = vld [vmem:[#allocation10 + $0x98] sm:$0xff]
    %v3276 = vld [vmem:[#allocation10 + $0xa0] sm:$0xff]
    %v3277 = vld [vmem:[#allocation10 + $0xa8] sm:$0xff]
    %v3278 = vld [vmem:[#allocation10 + $0xb0] sm:$0xff]
    %v3279 = vld [vmem:[#allocation10 + $0xb8] sm:$0xff]
    %v3280 = vld [vmem:[#allocation10 + $0xc0] sm:$0xff]
    %v3281 = vld [vmem:[#allocation10 + $0xc8] sm:$0xff]
    %v3282 = vld [vmem:[#allocation10 + $0xd0] sm:$0xff]
    %v3283 = vld [vmem:[#allocation10 + $0xd8] sm:$0xff]
    %v3284 = vld [vmem:[#allocation10 + $0xe0] sm:$0xff]
    %v3285 = vld [vmem:[#allocation10 + $0xe8] sm:$0xff]
    %v3286 = vld [vmem:[#allocation10 + $0xf0] sm:$0xff]
    %v3287 = vld [vmem:[#allocation10 + $0xf8] sm:$0xff]
    %v3288 = vld [vmem:[#allocation10 + $0x100] sm:$0xff]
    %v3289 = vld [vmem:[#allocation10 + $0x108] sm:$0xff]
    %v3290 = vld [vmem:[#allocation10 + $0x110] sm:$0xff]
    %v3291 = vld [vmem:[#allocation10 + $0x118] sm:$0xff]
    %v3292 = vld [vmem:[#allocation10 + $0x120] sm:$0xff]
    %v3293 = vld [vmem:[#allocation10 + $0x128] sm:$0xff]
    %v3294 = vld [vmem:[#allocation10 + $0x130] sm:$0xff]
    %v3295 = vld [vmem:[#allocation10 + $0x138] sm:$0xff]
    %v3296 = vld [vmem:[#allocation10 + $0x140] sm:$0xff]
    %v3297 = vld [vmem:[#allocation10 + $0x148] sm:$0xff]
    %v3298 = vld [vmem:[#allocation10 + $0x150] sm:$0xff]
    %v3299 = vld [vmem:[#allocation10 + $0x158] sm:$0xff]
    %v3300 = vld [vmem:[#allocation10 + $0x160] sm:$0xff]
    %v3301 = vld [vmem:[#allocation10 + $0x168] sm:$0xff]
    %v3302 = vld [vmem:[#allocation10 + $0x170] sm:$0xff]
    %v3303 = vld [vmem:[#allocation10 + $0x178] sm:$0xff]
    %v3304 = vld [vmem:[#allocation10 + $0x180] sm:$0xff]
    %v3305 = vld [vmem:[#allocation10 + $0x188] sm:$0xff]
    %v3306 = vld [vmem:[#allocation10 + $0x190] sm:$0xff]
    %v3307 = vld [vmem:[#allocation10 + $0x198] sm:$0xff]
    %v3308 = vld [vmem:[#allocation10 + $0x1a0] sm:$0xff]
    %v3309 = vld [vmem:[#allocation10 + $0x1a8] sm:$0xff]
    %v3310 = vld [vmem:[#allocation10 + $0x1b0] sm:$0xff]
    %v3311 = vld [vmem:[#allocation10 + $0x1b8] sm:$0xff]
    %v3312 = vld [vmem:[#allocation10 + $0x1c0] sm:$0xff]
    %v3313 = vld [vmem:[#allocation10 + $0x1c8] sm:$0xff]
    %v3314 = vld [vmem:[#allocation10 + $0x1d0] sm:$0xff]
    %v3315 = vld [vmem:[#allocation10 + $0x1d8] sm:$0xff]
    %v3316 = vld [vmem:[#allocation10 + $0x1e0] sm:$0xff]
    %v3317 = vld [vmem:[#allocation10 + $0x1e8] sm:$0xff]
    %v3318 = vld [vmem:[#allocation10 + $0x1f0] sm:$0xff]
    %v3319 = vld [vmem:[#allocation10 + $0x1f8] sm:$0xff]
    %v3320 = vld [vmem:[#allocation10 + $0x200] sm:$0xff]
    %v3321 = vld [vmem:[#allocation10 + $0x208] sm:$0xff]
    %v3322 = vld [vmem:[#allocation10 + $0x210] sm:$0xff]
    %v3323 = vld [vmem:[#allocation10 + $0x218] sm:$0xff]
    %v3324 = vld [vmem:[#allocation10 + $0x220] sm:$0xff]
    %v3325 = vld [vmem:[#allocation10 + $0x228] sm:$0xff]
    %v3326 = vld [vmem:[#allocation10 + $0x230] sm:$0xff]
    %v3327 = vld [vmem:[#allocation10 + $0x238] sm:$0xff]
    %v3328 = vld [vmem:[#allocation10 + $0x240] sm:$0xff]
    %v3329 = vld [vmem:[#allocation10 + $0x248] sm:$0xff]
    %v3330 = vld [vmem:[#allocation10 + $0x250] sm:$0xff]
    %v3331 = vld [vmem:[#allocation10 + $0x258] sm:$0xff]
    %v3332 = vld [vmem:[#allocation10 + $0x260] sm:$0xff]
    %v3333 = vld [vmem:[#allocation10 + $0x268] sm:$0xff]
    %v3334 = vld [vmem:[#allocation10 + $0x270] sm:$0xff]
    %v3335 = vld [vmem:[#allocation10 + $0x278] sm:$0xff]
    %v3336 = vld [vmem:[#allocation10 + $0x280] sm:$0xff]
    %v3337 = vld [vmem:[#allocation10 + $0x288] sm:$0xff]
    %v3338 = vld [vmem:[#allocation10 + $0x290] sm:$0xff]
    %v3339 = vld [vmem:[#allocation10 + $0x298] sm:$0xff]
    %v3340 = vld [vmem:[#allocation10 + $0x2a0] sm:$0xff]
    %v3341 = vld [vmem:[#allocation10 + $0x2a8] sm:$0xff]
    %v3342 = vld [vmem:[#allocation10 + $0x2b0] sm:$0xff]
    %v3343 = vld [vmem:[#allocation10 + $0x2b8] sm:$0xff]
    %v3344 = vld [vmem:[#allocation10 + $0x2c0] sm:$0xff]
    %v3345 = vld [vmem:[#allocation10 + $0x2c8] sm:$0xff]
    %v3346 = vld [vmem:[#allocation10 + $0x2d0] sm:$0xff]
    %v3347 = vld [vmem:[#allocation10 + $0x2d8] sm:$0xff]
    %v3348 = vld [vmem:[#allocation10 + $0x2e0] sm:$0xff]
    %v3349 = vld [vmem:[#allocation10 + $0x2e8] sm:$0xff]
    %v3350 = vld [vmem:[#allocation10 + $0x2f0] sm:$0xff]
    %v3351 = vld [vmem:[#allocation10 + $0x2f8] sm:$0xff]
    %v3352 = vld [vmem:[#allocation10 + $0x300] sm:$0xff]
    %v3353 = vld [vmem:[#allocation10 + $0x308] sm:$0xff]
    %v3354 = vld [vmem:[#allocation10 + $0x310] sm:$0xff]
    %v3355 = vld [vmem:[#allocation10 + $0x318] sm:$0xff]
    %v3356 = vld [vmem:[#allocation10 + $0x320] sm:$0xff]
    %v3357 = vld [vmem:[#allocation10 + $0x328] sm:$0xff]
    %v3358 = vld [vmem:[#allocation10 + $0x330] sm:$0xff]
    %v3359 = vld [vmem:[#allocation10 + $0x338] sm:$0xff]
    %v3360 = vld [vmem:[#allocation10 + $0x340] sm:$0xff]
    %v3361 = vld [vmem:[#allocation10 + $0x348] sm:$0xff]
    %v3362 = vld [vmem:[#allocation10 + $0x350] sm:$0xff]
    %v3363 = vld [vmem:[#allocation10 + $0x358] sm:$0xff]
    %v3364 = vld [vmem:[#allocation10 + $0x360] sm:$0xff]
    %v3365 = vld [vmem:[#allocation10 + $0x368] sm:$0xff]
    %v3366 = vld [vmem:[#allocation10 + $0x370] sm:$0xff]
    %v3367 = vld [vmem:[#allocation10 + $0x378] sm:$0xff]
    %v3368 = vld [vmem:[#allocation10 + $0x380] sm:$0xff]
    %v3369 = vld [vmem:[#allocation10 + $0x388] sm:$0xff]
    %v3370 = vld [vmem:[#allocation10 + $0x390] sm:$0xff]
    %v3371 = vld [vmem:[#allocation10 + $0x398] sm:$0xff]
    %v3372 = vld [vmem:[#allocation10 + $0x3a0] sm:$0xff]
    %v3373 = vld [vmem:[#allocation10 + $0x3a8] sm:$0xff]
    %v3374 = vld [vmem:[#allocation10 + $0x3b0] sm:$0xff]
    %v3375 = vld [vmem:[#allocation10 + $0x3b8] sm:$0xff]
    %v3376 = vld [vmem:[#allocation10 + $0x3c0] sm:$0xff]
    %v3377 = vld [vmem:[#allocation10 + $0x3c8] sm:$0xff]
    %v3378 = vld [vmem:[#allocation10 + $0x3d0] sm:$0xff]
    %v3379 = vld [vmem:[#allocation10 + $0x3d8] sm:$0xff]
    %v3380 = vld [vmem:[#allocation10 + $0x3e0] sm:$0xff]
    %v3381 = vld [vmem:[#allocation10 + $0x3e8] sm:$0xff]
    %v3382 = vld [vmem:[#allocation10 + $0x3f0] sm:$0xff]
    %v3383 = vld [vmem:[#allocation10 + $0x3f8] sm:$0xff]
    %v3384 = vld [vmem:[%s6] sm:$0xff]
    %v3386 = vperm.slane %v3384, 0
    %v3387 = vperm.slane %v3384, 1
    %v3388 = vperm.slane %v3384, 2
    %v3389 = vperm.slane %v3384, 3
    %v3390 = vperm.slane %v3384, 4
    %v3391 = vperm.slane %v3384, 5
    %v3392 = vperm.slane %v3384, 6
    %v3393 = vperm.slane %v3384, 7
    %3402 = vmatpush.msra.mxu0 %v3376
    %3403 = vmatpush.msra.mxu0 %v3368
    %3404 = vmatpush.msra.mxu0 %v3360
    %3405 = vmatpush.msra.mxu0 %v3352
    %3406 = vmatpush.msra.mxu0 %v3344
    %3407 = vmatpush.msra.mxu0 %v3336
    %3408 = vmatpush.msra.mxu0 %v3328
    %3409 = vmatpush.msra.mxu0 %v3320
    %3410 = vmatpush.msra.mxu0 %v3312
    %3411 = vmatpush.msra.mxu0 %v3304
    %3412 = vmatpush.msra.mxu0 %v3296
    %3413 = vmatpush.msra.mxu0 %v3288
    %3414 = vmatpush.msra.mxu0 %v3280
    %3415 = vmatpush.msra.mxu0 %v3272
    %3416 = vmatpush.msra.mxu0 %v3264
    %3417 = vmatpush.msra.mxu0 %v3256
    %3418 = vmatmul.f32.gmra.mxu0 %v3255
    %v3419 = vpop.f32.mrf.mxu0
    %v3420 = vadd.f32 %v3386, %v3419
    %3421 = vdwg.mxu0
    %3422 = vmatpush.msra.mxu0 %v3377
    %3423 = vmatpush.msra.mxu0 %v3369
    %3424 = vmatpush.msra.mxu0 %v3361
    %3425 = vmatpush.msra.mxu0 %v3353
    %3426 = vmatpush.msra.mxu0 %v3345
    %3427 = vmatpush.msra.mxu0 %v3337
    %3428 = vmatpush.msra.mxu0 %v3329
    %3429 = vmatpush.msra.mxu0 %v3321
    %3430 = vmatpush.msra.mxu0 %v3313
    %3431 = vmatpush.msra.mxu0 %v3305
    %3432 = vmatpush.msra.mxu0 %v3297
    %3433 = vmatpush.msra.mxu0 %v3289
    %3434 = vmatpush.msra.mxu0 %v3281
    %3435 = vmatpush.msra.mxu0 %v3273
    %3436 = vmatpush.msra.mxu0 %v3265
    %3437 = vmatpush.msra.mxu0 %v3257
    %3438 = vmatmul.f32.gmra.mxu0 %v3255
    %v3439 = vpop.f32.mrf.mxu0
    %v3440 = vadd.f32 %v3387, %v3439
    %3441 = vdwg.mxu0
    %3442 = vmatpush.msra.mxu0 %v3378
    %3443 = vmatpush.msra.mxu0 %v3370
    %3444 = vmatpush.msra.mxu0 %v3362
    %3445 = vmatpush.msra.mxu0 %v3354
    %3446 = vmatpush.msra.mxu0 %v3346
    %3447 = vmatpush.msra.mxu0 %v3338
    %3448 = vmatpush.msra.mxu0 %v3330
    %3449 = vmatpush.msra.mxu0 %v3322
    %3450 = vmatpush.msra.mxu0 %v3314
    %3451 = vmatpush.msra.mxu0 %v3306
    %3452 = vmatpush.msra.mxu0 %v3298
    %3453 = vmatpush.msra.mxu0 %v3290
    %3454 = vmatpush.msra.mxu0 %v3282
    %3455 = vmatpush.msra.mxu0 %v3274
    %3456 = vmatpush.msra.mxu0 %v3266
    %3457 = vmatpush.msra.mxu0 %v3258
    %3458 = vmatmul.f32.gmra.mxu0 %v3255
    %v3459 = vpop.f32.mrf.mxu0
    %v3460 = vadd.f32 %v3388, %v3459
    %3461 = vdwg.mxu0
    %3462 = vmatpush.msra.mxu0 %v3379
    %3463 = vmatpush.msra.mxu0 %v3371
    %3464 = vmatpush.msra.mxu0 %v3363
    %3465 = vmatpush.msra.mxu0 %v3355
    %3466 = vmatpush.msra.mxu0 %v3347
    %3467 = vmatpush.msra.mxu0 %v3339
    %3468 = vmatpush.msra.mxu0 %v3331
    %3469 = vmatpush.msra.mxu0 %v3323
    %3470 = vmatpush.msra.mxu0 %v3315
    %3471 = vmatpush.msra.mxu0 %v3307
    %3472 = vmatpush.msra.mxu0 %v3299
    %3473 = vmatpush.msra.mxu0 %v3291
    %3474 = vmatpush.msra.mxu0 %v3283
    %3475 = vmatpush.msra.mxu0 %v3275
    %3476 = vmatpush.msra.mxu0 %v3267
    %3477 = vmatpush.msra.mxu0 %v3259
    %3478 = vmatmul.f32.gmra.mxu0 %v3255
    %v3479 = vpop.f32.mrf.mxu0
    %v3480 = vadd.f32 %v3389, %v3479
    %3481 = vdwg.mxu0
    %3482 = vmatpush.msra.mxu0 %v3380
    %3483 = vmatpush.msra.mxu0 %v3372
    %3484 = vmatpush.msra.mxu0 %v3364
    %3485 = vmatpush.msra.mxu0 %v3356
    %3486 = vmatpush.msra.mxu0 %v3348
    %3487 = vmatpush.msra.mxu0 %v3340
    %3488 = vmatpush.msra.mxu0 %v3332
    %3489 = vmatpush.msra.mxu0 %v3324
    %3490 = vmatpush.msra.mxu0 %v3316
    %3491 = vmatpush.msra.mxu0 %v3308
    %3492 = vmatpush.msra.mxu0 %v3300
    %3493 = vmatpush.msra.mxu0 %v3292
    %3494 = vmatpush.msra.mxu0 %v3284
    %3495 = vmatpush.msra.mxu0 %v3276
    %3496 = vmatpush.msra.mxu0 %v3268
    %3497 = vmatpush.msra.mxu0 %v3260
    %3498 = vmatmul.f32.gmra.mxu0 %v3255
    %v3499 = vpop.f32.mrf.mxu0
    %v3500 = vadd.f32 %v3390, %v3499
    %3501 = vdwg.mxu0
    %3502 = vmatpush.msra.mxu0 %v3381
    %3503 = vmatpush.msra.mxu0 %v3373
    %3504 = vmatpush.msra.mxu0 %v3365
    %3505 = vmatpush.msra.mxu0 %v3357
    %3506 = vmatpush.msra.mxu0 %v3349
    %3507 = vmatpush.msra.mxu0 %v3341
    %3508 = vmatpush.msra.mxu0 %v3333
    %3509 = vmatpush.msra.mxu0 %v3325
    %3510 = vmatpush.msra.mxu0 %v3317
    %3511 = vmatpush.msra.mxu0 %v3309
    %3512 = vmatpush.msra.mxu0 %v3301
    %3513 = vmatpush.msra.mxu0 %v3293
    %3514 = vmatpush.msra.mxu0 %v3285
    %3515 = vmatpush.msra.mxu0 %v3277
    %3516 = vmatpush.msra.mxu0 %v3269
    %3517 = vmatpush.msra.mxu0 %v3261
    %3518 = vmatmul.f32.gmra.mxu0 %v3255
    %v3519 = vpop.f32.mrf.mxu0
    %v3520 = vadd.f32 %v3391, %v3519
    %3521 = vdwg.mxu0
    %3522 = vmatpush.msra.mxu0 %v3382
    %3523 = vmatpush.msra.mxu0 %v3374
    %3524 = vmatpush.msra.mxu0 %v3366
    %3525 = vmatpush.msra.mxu0 %v3358
    %3526 = vmatpush.msra.mxu0 %v3350
    %3527 = vmatpush.msra.mxu0 %v3342
    %3528 = vmatpush.msra.mxu0 %v3334
    %3529 = vmatpush.msra.mxu0 %v3326
    %3530 = vmatpush.msra.mxu0 %v3318
    %3531 = vmatpush.msra.mxu0 %v3310
    %3532 = vmatpush.msra.mxu0 %v3302
    %3533 = vmatpush.msra.mxu0 %v3294
    %3534 = vmatpush.msra.mxu0 %v3286
    %3535 = vmatpush.msra.mxu0 %v3278
    %3536 = vmatpush.msra.mxu0 %v3270
    %3537 = vmatpush.msra.mxu0 %v3262
    %3538 = vmatmul.f32.gmra.mxu0 %v3255
    %v3539 = vpop.f32.mrf.mxu0
    %v3540 = vadd.f32 %v3392, %v3539
    %3541 = vdwg.mxu0
    %3542 = vmatpush.msra.mxu0 %v3383
    %3543 = vmatpush.msra.mxu0 %v3375
    %3544 = vmatpush.msra.mxu0 %v3367
    %3545 = vmatpush.msra.mxu0 %v3359
    %3546 = vmatpush.msra.mxu0 %v3351
    %3547 = vmatpush.msra.mxu0 %v3343
    %3548 = vmatpush.msra.mxu0 %v3335
    %3549 = vmatpush.msra.mxu0 %v3327
    %3550 = vmatpush.msra.mxu0 %v3319
    %3551 = vmatpush.msra.mxu0 %v3311
    %3552 = vmatpush.msra.mxu0 %v3303
    %3553 = vmatpush.msra.mxu0 %v3295
    %3554 = vmatpush.msra.mxu0 %v3287
    %3555 = vmatpush.msra.mxu0 %v3279
    %3556 = vmatpush.msra.mxu0 %v3271
    %3557 = vmatpush.msra.mxu0 %v3263
    %3558 = vmatmul.f32.gmra.mxu0 %v3255
    %v3559 = vpop.f32.mrf.mxu0
    %v3560 = vadd.f32 %v3393, %v3559
    %3561 = vdwg.mxu0
    %vm3562 = vcmp.gt.f32.partialorder %v3420, 0.0
    %vm3563 = vcmp.gt.f32.partialorder %v3440, 0.0
    %vm3564 = vcmp.gt.f32.partialorder %v3460, 0.0
    %vm3565 = vcmp.gt.f32.partialorder %v3480, 0.0
    %vm3566 = vcmp.gt.f32.partialorder %v3500, 0.0
    %vm3567 = vcmp.gt.f32.partialorder %v3520, 0.0
    %vm3568 = vcmp.gt.f32.partialorder %v3540, 0.0
    %vm3569 = vcmp.gt.f32.partialorder %v3560, 0.0
    %v3570 = vstv %s114
    %v3571 = vmul.f32 %v3570, %v3420
    %v3572 = vmul.f32 %v3570, %v3440
    %v3573 = vmul.f32 %v3570, %v3460
    %v3574 = vmul.f32 %v3570, %v3480
    %v3575 = vmul.f32 %v3570, %v3500
    %v3576 = vmul.f32 %v3570, %v3520
    %v3577 = vmul.f32 %v3570, %v3540
    %v3578 = vmul.f32 %v3570, %v3560
    %v3579 = vsel %vm3562, %v3420, %v3571
    %v3580 = vsel %vm3563, %v3440, %v3572
    %v3581 = vsel %vm3564, %v3460, %v3573
    %v3582 = vsel %vm3565, %v3480, %v3574
    %v3583 = vsel %vm3566, %v3500, %v3575
    %v3584 = vsel %vm3567, %v3520, %v3576
    %v3585 = vsel %vm3568, %v3540, %v3577
    %v3586 = vsel %vm3569, %v3560, %v3578
    %v3587 = vld [vmem:[#allocation12] sm:$0xff]
    %v3588 = vld [vmem:[#allocation12 + $0x8] sm:$0xff]
    %v3589 = vld [vmem:[#allocation12 + $0x10] sm:$0xff]
    %v3590 = vld [vmem:[#allocation12 + $0x18] sm:$0xff]
    %v3591 = vld [vmem:[#allocation12 + $0x20] sm:$0xff]
    %v3592 = vld [vmem:[#allocation12 + $0x28] sm:$0xff]
    %v3593 = vld [vmem:[#allocation12 + $0x30] sm:$0xff]
    %v3594 = vld [vmem:[#allocation12 + $0x38] sm:$0xff]
    %v3595 = vld [vmem:[#allocation12 + $0x40] sm:$0xff]
    %v3596 = vld [vmem:[#allocation12 + $0x48] sm:$0xff]
    %v3597 = vld [vmem:[#allocation12 + $0x50] sm:$0xff]
    %v3598 = vld [vmem:[#allocation12 + $0x58] sm:$0xff]
    %v3599 = vld [vmem:[#allocation12 + $0x60] sm:$0xff]
    %v3600 = vld [vmem:[#allocation12 + $0x68] sm:$0xff]
    %v3601 = vld [vmem:[#allocation12 + $0x70] sm:$0xff]
    %v3602 = vld [vmem:[#allocation12 + $0x78] sm:$0xff]
    %v3603 = vld [vmem:[#allocation12 + $0x80] sm:$0xff]
    %v3604 = vld [vmem:[#allocation12 + $0x88] sm:$0xff]
    %v3605 = vld [vmem:[#allocation12 + $0x90] sm:$0xff]
    %v3606 = vld [vmem:[#allocation12 + $0x98] sm:$0xff]
    %v3607 = vld [vmem:[#allocation12 + $0xa0] sm:$0xff]
    %v3608 = vld [vmem:[#allocation12 + $0xa8] sm:$0xff]
    %v3609 = vld [vmem:[#allocation12 + $0xb0] sm:$0xff]
    %v3610 = vld [vmem:[#allocation12 + $0xb8] sm:$0xff]
    %v3611 = vld [vmem:[#allocation12 + $0xc0] sm:$0xff]
    %v3612 = vld [vmem:[#allocation12 + $0xc8] sm:$0xff]
    %v3613 = vld [vmem:[#allocation12 + $0xd0] sm:$0xff]
    %v3614 = vld [vmem:[#allocation12 + $0xd8] sm:$0xff]
    %v3615 = vld [vmem:[#allocation12 + $0xe0] sm:$0xff]
    %v3616 = vld [vmem:[#allocation12 + $0xe8] sm:$0xff]
    %v3617 = vld [vmem:[#allocation12 + $0xf0] sm:$0xff]
    %v3618 = vld [vmem:[#allocation12 + $0xf8] sm:$0xff]
    %v3619 = vld [vmem:[#allocation12 + $0x100] sm:$0xff]
    %v3620 = vld [vmem:[#allocation12 + $0x108] sm:$0xff]
    %v3621 = vld [vmem:[#allocation12 + $0x110] sm:$0xff]
    %v3622 = vld [vmem:[#allocation12 + $0x118] sm:$0xff]
    %v3623 = vld [vmem:[#allocation12 + $0x120] sm:$0xff]
    %v3624 = vld [vmem:[#allocation12 + $0x128] sm:$0xff]
    %v3625 = vld [vmem:[#allocation12 + $0x130] sm:$0xff]
    %v3626 = vld [vmem:[#allocation12 + $0x138] sm:$0xff]
    %v3627 = vld [vmem:[#allocation12 + $0x140] sm:$0xff]
    %v3628 = vld [vmem:[#allocation12 + $0x148] sm:$0xff]
    %v3629 = vld [vmem:[#allocation12 + $0x150] sm:$0xff]
    %v3630 = vld [vmem:[#allocation12 + $0x158] sm:$0xff]
    %v3631 = vld [vmem:[#allocation12 + $0x160] sm:$0xff]
    %v3632 = vld [vmem:[#allocation12 + $0x168] sm:$0xff]
    %v3633 = vld [vmem:[#allocation12 + $0x170] sm:$0xff]
    %v3634 = vld [vmem:[#allocation12 + $0x178] sm:$0xff]
    %v3635 = vld [vmem:[#allocation12 + $0x180] sm:$0xff]
    %v3636 = vld [vmem:[#allocation12 + $0x188] sm:$0xff]
    %v3637 = vld [vmem:[#allocation12 + $0x190] sm:$0xff]
    %v3638 = vld [vmem:[#allocation12 + $0x198] sm:$0xff]
    %v3639 = vld [vmem:[#allocation12 + $0x1a0] sm:$0xff]
    %v3640 = vld [vmem:[#allocation12 + $0x1a8] sm:$0xff]
    %v3641 = vld [vmem:[#allocation12 + $0x1b0] sm:$0xff]
    %v3642 = vld [vmem:[#allocation12 + $0x1b8] sm:$0xff]
    %v3643 = vld [vmem:[#allocation12 + $0x1c0] sm:$0xff]
    %v3644 = vld [vmem:[#allocation12 + $0x1c8] sm:$0xff]
    %v3645 = vld [vmem:[#allocation12 + $0x1d0] sm:$0xff]
    %v3646 = vld [vmem:[#allocation12 + $0x1d8] sm:$0xff]
    %v3647 = vld [vmem:[#allocation12 + $0x1e0] sm:$0xff]
    %v3648 = vld [vmem:[#allocation12 + $0x1e8] sm:$0xff]
    %v3649 = vld [vmem:[#allocation12 + $0x1f0] sm:$0xff]
    %v3650 = vld [vmem:[#allocation12 + $0x1f8] sm:$0xff]
    %v3651 = vld [vmem:[#allocation12 + $0x200] sm:$0xff]
    %v3652 = vld [vmem:[#allocation12 + $0x208] sm:$0xff]
    %v3653 = vld [vmem:[#allocation12 + $0x210] sm:$0xff]
    %v3654 = vld [vmem:[#allocation12 + $0x218] sm:$0xff]
    %v3655 = vld [vmem:[#allocation12 + $0x220] sm:$0xff]
    %v3656 = vld [vmem:[#allocation12 + $0x228] sm:$0xff]
    %v3657 = vld [vmem:[#allocation12 + $0x230] sm:$0xff]
    %v3658 = vld [vmem:[#allocation12 + $0x238] sm:$0xff]
    %v3659 = vld [vmem:[#allocation12 + $0x240] sm:$0xff]
    %v3660 = vld [vmem:[#allocation12 + $0x248] sm:$0xff]
    %v3661 = vld [vmem:[#allocation12 + $0x250] sm:$0xff]
    %v3662 = vld [vmem:[#allocation12 + $0x258] sm:$0xff]
    %v3663 = vld [vmem:[#allocation12 + $0x260] sm:$0xff]
    %v3664 = vld [vmem:[#allocation12 + $0x268] sm:$0xff]
    %v3665 = vld [vmem:[#allocation12 + $0x270] sm:$0xff]
    %v3666 = vld [vmem:[#allocation12 + $0x278] sm:$0xff]
    %v3667 = vld [vmem:[#allocation12 + $0x280] sm:$0xff]
    %v3668 = vld [vmem:[#allocation12 + $0x288] sm:$0xff]
    %v3669 = vld [vmem:[#allocation12 + $0x290] sm:$0xff]
    %v3670 = vld [vmem:[#allocation12 + $0x298] sm:$0xff]
    %v3671 = vld [vmem:[#allocation12 + $0x2a0] sm:$0xff]
    %v3672 = vld [vmem:[#allocation12 + $0x2a8] sm:$0xff]
    %v3673 = vld [vmem:[#allocation12 + $0x2b0] sm:$0xff]
    %v3674 = vld [vmem:[#allocation12 + $0x2b8] sm:$0xff]
    %v3675 = vld [vmem:[#allocation12 + $0x2c0] sm:$0xff]
    %v3676 = vld [vmem:[#allocation12 + $0x2c8] sm:$0xff]
    %v3677 = vld [vmem:[#allocation12 + $0x2d0] sm:$0xff]
    %v3678 = vld [vmem:[#allocation12 + $0x2d8] sm:$0xff]
    %v3679 = vld [vmem:[#allocation12 + $0x2e0] sm:$0xff]
    %v3680 = vld [vmem:[#allocation12 + $0x2e8] sm:$0xff]
    %v3681 = vld [vmem:[#allocation12 + $0x2f0] sm:$0xff]
    %v3682 = vld [vmem:[#allocation12 + $0x2f8] sm:$0xff]
    %v3683 = vld [vmem:[#allocation12 + $0x300] sm:$0xff]
    %v3684 = vld [vmem:[#allocation12 + $0x308] sm:$0xff]
    %v3685 = vld [vmem:[#allocation12 + $0x310] sm:$0xff]
    %v3686 = vld [vmem:[#allocation12 + $0x318] sm:$0xff]
    %v3687 = vld [vmem:[#allocation12 + $0x320] sm:$0xff]
    %v3688 = vld [vmem:[#allocation12 + $0x328] sm:$0xff]
    %v3689 = vld [vmem:[#allocation12 + $0x330] sm:$0xff]
    %v3690 = vld [vmem:[#allocation12 + $0x338] sm:$0xff]
    %v3691 = vld [vmem:[#allocation12 + $0x340] sm:$0xff]
    %v3692 = vld [vmem:[#allocation12 + $0x348] sm:$0xff]
    %v3693 = vld [vmem:[#allocation12 + $0x350] sm:$0xff]
    %v3694 = vld [vmem:[#allocation12 + $0x358] sm:$0xff]
    %v3695 = vld [vmem:[#allocation12 + $0x360] sm:$0xff]
    %v3696 = vld [vmem:[#allocation12 + $0x368] sm:$0xff]
    %v3697 = vld [vmem:[#allocation12 + $0x370] sm:$0xff]
    %v3698 = vld [vmem:[#allocation12 + $0x378] sm:$0xff]
    %v3699 = vld [vmem:[#allocation12 + $0x380] sm:$0xff]
    %v3700 = vld [vmem:[#allocation12 + $0x388] sm:$0xff]
    %v3701 = vld [vmem:[#allocation12 + $0x390] sm:$0xff]
    %v3702 = vld [vmem:[#allocation12 + $0x398] sm:$0xff]
    %v3703 = vld [vmem:[#allocation12 + $0x3a0] sm:$0xff]
    %v3704 = vld [vmem:[#allocation12 + $0x3a8] sm:$0xff]
    %v3705 = vld [vmem:[#allocation12 + $0x3b0] sm:$0xff]
    %v3706 = vld [vmem:[#allocation12 + $0x3b8] sm:$0xff]
    %v3707 = vld [vmem:[#allocation12 + $0x3c0] sm:$0xff]
    %v3708 = vld [vmem:[#allocation12 + $0x3c8] sm:$0xff]
    %v3709 = vld [vmem:[#allocation12 + $0x3d0] sm:$0xff]
    %v3710 = vld [vmem:[#allocation12 + $0x3d8] sm:$0xff]
    %v3711 = vld [vmem:[#allocation12 + $0x3e0] sm:$0xff]
    %v3712 = vld [vmem:[#allocation12 + $0x3e8] sm:$0xff]
    %v3713 = vld [vmem:[#allocation12 + $0x3f0] sm:$0xff]
    %v3714 = vld [vmem:[#allocation12 + $0x3f8] sm:$0xff]
    %v3715 = vld [vmem:[%s8] sm:$0x1]
    %v3717 = vperm.slane %v3715, 0
    %3719 = vmatpush.msra.mxu0 %v3602
    %3720 = vmatpush.msra.mxu0 %v3601
    %3721 = vmatpush.msra.mxu0 %v3600
    %3722 = vmatpush.msra.mxu0 %v3599
    %3723 = vmatpush.msra.mxu0 %v3598
    %3724 = vmatpush.msra.mxu0 %v3597
    %3725 = vmatpush.msra.mxu0 %v3596
    %3726 = vmatpush.msra.mxu0 %v3595
    %3727 = vmatpush.msra.mxu0 %v3594
    %3728 = vmatpush.msra.mxu0 %v3593
    %3729 = vmatpush.msra.mxu0 %v3592
    %3730 = vmatpush.msra.mxu0 %v3591
    %3731 = vmatpush.msra.mxu0 %v3590
    %3732 = vmatpush.msra.mxu0 %v3589
    %3733 = vmatpush.msra.mxu0 %v3588
    %3734 = vmatpush.msra.mxu0 %v3587
    %3735 = vmatmul.f32.gmra.mxu0 %v3579
    %v3736 = vpop.f32.mrf.mxu0
    %v3737 = vadd.f32 %v3717, %v3736
    %3738 = vdwg.mxu0
    %3739 = vmatpush.msra.mxu0 %v3618
    %3740 = vmatpush.msra.mxu0 %v3617
    %3741 = vmatpush.msra.mxu0 %v3616
    %3742 = vmatpush.msra.mxu0 %v3615
    %3743 = vmatpush.msra.mxu0 %v3614
    %3744 = vmatpush.msra.mxu0 %v3613
    %3745 = vmatpush.msra.mxu0 %v3612
    %3746 = vmatpush.msra.mxu0 %v3611
    %3747 = vmatpush.msra.mxu0 %v3610
    %3748 = vmatpush.msra.mxu0 %v3609
    %3749 = vmatpush.msra.mxu0 %v3608
    %3750 = vmatpush.msra.mxu0 %v3607
    %3751 = vmatpush.msra.mxu0 %v3606
    %3752 = vmatpush.msra.mxu0 %v3605
    %3753 = vmatpush.msra.mxu0 %v3604
    %3754 = vmatpush.msra.mxu0 %v3603
    %3755 = vmatmul.f32.gmra.mxu0 %v3580
    %v3756 = vpop.f32.mrf.mxu0
    %v3757 = vadd.f32 %v3737, %v3756
    %3758 = vdwg.mxu0
    %3759 = vmatpush.msra.mxu0 %v3634
    %3760 = vmatpush.msra.mxu0 %v3633
    %3761 = vmatpush.msra.mxu0 %v3632
    %3762 = vmatpush.msra.mxu0 %v3631
    %3763 = vmatpush.msra.mxu0 %v3630
    %3764 = vmatpush.msra.mxu0 %v3629
    %3765 = vmatpush.msra.mxu0 %v3628
    %3766 = vmatpush.msra.mxu0 %v3627
    %3767 = vmatpush.msra.mxu0 %v3626
    %3768 = vmatpush.msra.mxu0 %v3625
    %3769 = vmatpush.msra.mxu0 %v3624
    %3770 = vmatpush.msra.mxu0 %v3623
    %3771 = vmatpush.msra.mxu0 %v3622
    %3772 = vmatpush.msra.mxu0 %v3621
    %3773 = vmatpush.msra.mxu0 %v3620
    %3774 = vmatpush.msra.mxu0 %v3619
    %3775 = vmatmul.f32.gmra.mxu0 %v3581
    %v3776 = vpop.f32.mrf.mxu0
    %v3777 = vadd.f32 %v3757, %v3776
    %3778 = vdwg.mxu0
    %3779 = vmatpush.msra.mxu0 %v3650
    %3780 = vmatpush.msra.mxu0 %v3649
    %3781 = vmatpush.msra.mxu0 %v3648
    %3782 = vmatpush.msra.mxu0 %v3647
    %3783 = vmatpush.msra.mxu0 %v3646
    %3784 = vmatpush.msra.mxu0 %v3645
    %3785 = vmatpush.msra.mxu0 %v3644
    %3786 = vmatpush.msra.mxu0 %v3643
    %3787 = vmatpush.msra.mxu0 %v3642
    %3788 = vmatpush.msra.mxu0 %v3641
    %3789 = vmatpush.msra.mxu0 %v3640
    %3790 = vmatpush.msra.mxu0 %v3639
    %3791 = vmatpush.msra.mxu0 %v3638
    %3792 = vmatpush.msra.mxu0 %v3637
    %3793 = vmatpush.msra.mxu0 %v3636
    %3794 = vmatpush.msra.mxu0 %v3635
    %3795 = vmatmul.f32.gmra.mxu0 %v3582
    %v3796 = vpop.f32.mrf.mxu0
    %v3797 = vadd.f32 %v3777, %v3796
    %3798 = vdwg.mxu0
    %3799 = vmatpush.msra.mxu0 %v3666
    %3800 = vmatpush.msra.mxu0 %v3665
    %3801 = vmatpush.msra.mxu0 %v3664
    %3802 = vmatpush.msra.mxu0 %v3663
    %3803 = vmatpush.msra.mxu0 %v3662
    %3804 = vmatpush.msra.mxu0 %v3661
    %3805 = vmatpush.msra.mxu0 %v3660
    %3806 = vmatpush.msra.mxu0 %v3659
    %3807 = vmatpush.msra.mxu0 %v3658
    %3808 = vmatpush.msra.mxu0 %v3657
    %3809 = vmatpush.msra.mxu0 %v3656
    %3810 = vmatpush.msra.mxu0 %v3655
    %3811 = vmatpush.msra.mxu0 %v3654
    %3812 = vmatpush.msra.mxu0 %v3653
    %3813 = vmatpush.msra.mxu0 %v3652
    %3814 = vmatpush.msra.mxu0 %v3651
    %3815 = vmatmul.f32.gmra.mxu0 %v3583
    %v3816 = vpop.f32.mrf.mxu0
    %v3817 = vadd.f32 %v3797, %v3816
    %3818 = vdwg.mxu0
    %3819 = vmatpush.msra.mxu0 %v3682
    %3820 = vmatpush.msra.mxu0 %v3681
    %3821 = vmatpush.msra.mxu0 %v3680
    %3822 = vmatpush.msra.mxu0 %v3679
    %3823 = vmatpush.msra.mxu0 %v3678
    %3824 = vmatpush.msra.mxu0 %v3677
    %3825 = vmatpush.msra.mxu0 %v3676
    %3826 = vmatpush.msra.mxu0 %v3675
    %3827 = vmatpush.msra.mxu0 %v3674
    %3828 = vmatpush.msra.mxu0 %v3673
    %3829 = vmatpush.msra.mxu0 %v3672
    %3830 = vmatpush.msra.mxu0 %v3671
    %3831 = vmatpush.msra.mxu0 %v3670
    %3832 = vmatpush.msra.mxu0 %v3669
    %3833 = vmatpush.msra.mxu0 %v3668
    %3834 = vmatpush.msra.mxu0 %v3667
    %3835 = vmatmul.f32.gmra.mxu0 %v3584
    %v3836 = vpop.f32.mrf.mxu0
    %v3837 = vadd.f32 %v3817, %v3836
    %3838 = vdwg.mxu0
    %3839 = vmatpush.msra.mxu0 %v3698
    %3840 = vmatpush.msra.mxu0 %v3697
    %3841 = vmatpush.msra.mxu0 %v3696
    %3842 = vmatpush.msra.mxu0 %v3695
    %3843 = vmatpush.msra.mxu0 %v3694
    %3844 = vmatpush.msra.mxu0 %v3693
    %3845 = vmatpush.msra.mxu0 %v3692
    %3846 = vmatpush.msra.mxu0 %v3691
    %3847 = vmatpush.msra.mxu0 %v3690
    %3848 = vmatpush.msra.mxu0 %v3689
    %3849 = vmatpush.msra.mxu0 %v3688
    %3850 = vmatpush.msra.mxu0 %v3687
    %3851 = vmatpush.msra.mxu0 %v3686
    %3852 = vmatpush.msra.mxu0 %v3685
    %3853 = vmatpush.msra.mxu0 %v3684
    %3854 = vmatpush.msra.mxu0 %v3683
    %3855 = vmatmul.f32.gmra.mxu0 %v3585
    %v3856 = vpop.f32.mrf.mxu0
    %v3857 = vadd.f32 %v3837, %v3856
    %3858 = vdwg.mxu0
    %3859 = vmatpush.msra.mxu0 %v3714
    %3860 = vmatpush.msra.mxu0 %v3713
    %3861 = vmatpush.msra.mxu0 %v3712
    %3862 = vmatpush.msra.mxu0 %v3711
    %3863 = vmatpush.msra.mxu0 %v3710
    %3864 = vmatpush.msra.mxu0 %v3709
    %3865 = vmatpush.msra.mxu0 %v3708
    %3866 = vmatpush.msra.mxu0 %v3707
    %3867 = vmatpush.msra.mxu0 %v3706
    %3868 = vmatpush.msra.mxu0 %v3705
    %3869 = vmatpush.msra.mxu0 %v3704
    %3870 = vmatpush.msra.mxu0 %v3703
    %3871 = vmatpush.msra.mxu0 %v3702
    %3872 = vmatpush.msra.mxu0 %v3701
    %3873 = vmatpush.msra.mxu0 %v3700
    %3874 = vmatpush.msra.mxu0 %v3699
    %3875 = vmatmul.f32.gmra.mxu0 %v3586
    %v3876 = vpop.f32.mrf.mxu0
    %v3877 = vadd.f32 %v3857, %v3876
    %3878 = vdwg.mxu0
    %vm3879 = vcmp.gt.f32.partialorder %v3877, 0.0
    %v3880 = vmul.f32 %v3570, %v3877
    %v3881 = vsel %vm3879, %v3877, %v3880
    %3882 = vst [vmem:[%s10] sm:$0xff] %v3881
    // Predicated region
    $region62: #{lstm_model_forward.1} parent=1 // pred_check
      _
    $region63: #{lstm_model_forward.1} parent=1 // pred_check_branch
      %3884 = sbr.rel (0) target = $region65
    $region64: #{lstm_model_forward.1} parent=1 // pred_region
      _
    $region65: #{lstm_model_forward.1} parent=1 // pred_fallthru
      _
    // Predicated region
    $region66: #{lstm_model_forward.1} parent=1 // pred_check
      _
    $region67: #{lstm_model_forward.1} parent=1 // pred_check_branch
      %3886 = sbr.rel (0) target = $region69
    $region68: #{lstm_model_forward.1} parent=1 // pred_region
      _
    $region69: #{lstm_model_forward.1} parent=1 // pred_fallthru
      _
    %3887 = vsyncpa [#allocation6], 1
    %3888 = vsyncpa [#allocation8], 1
    %3889 = vsyncpa [#allocation11], 1

</llo_original>
